<compile_context>
chip_gen: v7x
topology: tpu7x:2x2x1
jax: 0.10.0
libtpu: 0.0.40
codegen_flags: <defaults>
</compile_context>

<pallas_src>
import jax
import jax.numpy as jnp
from jax.experimental import pallas as pl
from jax.experimental.pallas import tpu as pltpu

# ----------------------------- configuration ------------------------------
B = 2                 # graphs per side (batch of graph pairs)
N_PER = 16            # nodes per graph (padded/fixed)
NS = B * N_PER        # nodes per side                        (32)
NT = 2 * NS           # nodes, both sides sublane-stacked     (64)
D = 32                # in_dim == out_dim of GatedGraphConv
E = 3                 # number of edge types
KB = E + 1            # message blocks: E edge types + hidden/self block
NSTEPS = 4            # GGNN propagation steps
CLASS_NUM = 2
VOCAB = 50
FF = 2 * D            # initial_representation=True -> concat([h, embed_h]) (64)
HC = 2 * D            # block-diagonal side-batched feature width           (64)
GATE_W = 4 * D        # fused gate lanes: [rz | gi_n | gh_n]                (128)
ADJ_W = KB * NT       # packed adjacency lanes                              (256)
H0_OFF = ADJ_W + GATE_W
GDYN_W = H0_OFF + D   # (416)
HEAD_ROWS = 8
WPACK_ROWS = KB * HC + HEAD_ROWS   # (264)
BN_EPS = 1e-5
LEAKY_SLOPE = 0.01
NUM_EDGES_PER_GRAPH = 40

# packing-layout sanity checks
assert NS % 8 == 0 and D % 8 == 0 and GATE_W == 128
assert NT + FF <= GATE_W
assert 4 * B <= HEAD_ROWS and 2 * B + CLASS_NUM + 1 <= HEAD_ROWS
assert WPACK_ROWS % 8 == 0


# ------------------------------ Pallas kernel ------------------------------
def pairwise_ggnn_kernel(gdyn_ref, wpack_ref, out_ref, hcat_ref, pstack_ref):
    """Both GGNN sides (side-batched) + BN(eval) + mean readout + head, fused."""
    f32 = jnp.float32

    h0 = gdyn_ref[:, H0_OFF:H0_OFF + D]              # (NT, D) embeddings, both sides
    h = h0
    hcat_ref[...] = jnp.zeros_like(hcat_ref)         # off-diagonal blocks stay zero

    for _ in range(NSTEPS):                          # short, statically unrolled
        # block-diagonal side-batched features [h1 | 0 ; 0 | h2]
        hcat_ref[0:NS, 0:D] = h[0:NS, :]
        hcat_ref[NS:NT, D:HC] = h[NS:NT, :]
        hcat = hcat_ref[...]

        # per-block projections straight into the sublane-stacked scratch
        # (no lane-slice / restack):  pstack[k*NT + s*NS + v, :] = h_s[v] @ M_{s,k}
        #   k < E : M_{s,k}  = Wmsg_{s,k} @ [Wih_rz | Wih_n | 0]
        #   k == E: M_{s,E}  = [Whh_rz | 0 | Whh_n]
        for k in range(KB):
            pstack_ref[k * NT:(k + 1) * NT, :] = jnp.dot(
                hcat, wpack_ref[k * HC:(k + 1) * HC, :],
                preferred_element_type=f32)

        # single aggregation matmul -> all GRU gate pre-activations, both sides:
        #   gates = [gi_rz + gh_rz | gi_n | gh_n]   (all biases folded into gbias)
        gates = (jnp.dot(gdyn_ref[:, 0:ADJ_W], pstack_ref[...],
                         preferred_element_type=f32)
                 + gdyn_ref[:, ADJ_W:ADJ_W + GATE_W])

        # fused torch.nn.GRUCell(a, h)
        rz = jax.nn.sigmoid(gates[:, :2 * D])
        r = rz[:, :D]
        z = rz[:, D:2 * D]
        n = jnp.tanh(gates[:, 2 * D:3 * D] + r * gates[:, 3 * D:4 * D])
        h = (1.0 - z) * n + z * h

    # ------------- readout + BatchNorm(eval) + euclidean head -------------
    head = wpack_ref[KB * HC:KB * HC + HEAD_ROWS, :]          # (8, 128)
    segblk = head[0:2 * B, 0:NT]                              # block-diag mean readout
    bnscale = head[0:2 * B, NT:NT + FF]
    bnshift = head[2 * B:4 * B, NT:NT + FF]
    wff_t = head[2 * B:2 * B + CLASS_NUM, 0:FF]
    bff = head[2 * B + CLASS_NUM:2 * B + CLASS_NUM + 1, 0:CLASS_NUM]

    # seg @ (concat([h, h0]) * scale + shift) == concat([seg@h, seg@h0])*scale + shift
    # (valid because every seg row sums to exactly 1: fixed-size graphs, no padding)
    rd_h = jnp.dot(segblk, h, preferred_element_type=f32)     # (2B, D)
    rd_h0 = jnp.dot(segblk, h0, preferred_element_type=f32)   # (2B, D)
    feats = jnp.concatenate([rd_h, rd_h0], axis=-1) * bnscale + bnshift
    # dropout: eval mode -> identity

    diff = feats[0:B, :] - feats[B:2 * B, :]
    euc = diff * diff
    logits = jnp.einsum('bd,cd->bc', euc, wff_t,
                        preferred_element_type=f32) + bff
    logits = jnp.where(logits >= 0.0, logits, LEAKY_SLOPE * logits)
    m = jnp.max(logits, axis=-1, keepdims=True)
    ex = jnp.exp(logits - m)
    out_ref[...] = ex / jnp.sum(ex, axis=-1, keepdims=True)


# ------------------------------ wrapper ------------------------------------
def _pairwise_call(gdyn, wpack):
    return pl.pallas_call(
        pairwise_ggnn_kernel,
        out_shape=jax.ShapeDtypeStruct((B, CLASS_NUM), jnp.float32),
        grid=(1,),
        in_specs=[pl.BlockSpec((NT, GDYN_W), lambda i: (0, 0)),
                  pl.BlockSpec((WPACK_ROWS, GATE_W), lambda i: (0, 0))],
        out_specs=pl.BlockSpec((B, CLASS_NUM), lambda i: (0, 0)),
        scratch_shapes=[pltpu.VMEM((NT, HC), jnp.float32),
                        pltpu.VMEM((KB * NT, GATE_W), jnp.float32)],
        compiler_params=pltpu.CompilerParams(
            dimension_semantics=("arbitrary",)),
    )(gdyn, wpack)


# --------------------------- parameter / input setup ------------------------
def make_gconv_params(key):
    ks = jax.random.split(key, 10)
    # per-edge-type message linears (stored so they apply as h @ W)
    wmsg = jax.random.normal(ks[0], (E, D, D), jnp.float32) * 0.1
    bmsg = jax.random.normal(ks[1], (E, 1, D), jnp.float32) * 0.1
    # GRUCell weights split into (r, z, n) gates, applied as x @ W
    wih = jax.random.normal(ks[2], (3, D, D), jnp.float32) * 0.1
    bih = jax.random.normal(ks[3], (3, 1, D), jnp.float32) * 0.1
    whh = jax.random.normal(ks[4], (3, D, D), jnp.float32) * 0.1
    bhh = jax.random.normal(ks[5], (3, 1, D), jnp.float32) * 0.1
    # BatchNorm1d (eval mode) with non-trivial running statistics
    gamma = 1.0 + 0.1 * jax.random.normal(ks[6], (1, FF), jnp.float32)
    beta = 0.1 * jax.random.normal(ks[7], (1, FF), jnp.float32)
    rmean = 0.05 * jax.random.normal(ks[8], (1, FF), jnp.float32)
    rvar = 1.0 + 0.2 * jax.random.uniform(ks[9], (1, FF), jnp.float32)
    return wmsg, bmsg, wih, bih, whh, bhh, gamma, beta, rmean, rvar


def _pack_side(raw):
    """Fold the GRU input projection into the message weights (host side)."""
    wmsg, bmsg, wih, bih, whh, bhh, gamma, beta, rmean, rvar = raw
    wih_rz = jnp.concatenate([wih[0], wih[1]], axis=1)          # (D, 2D)
    wih_n = wih[2]                                               # (D, D)
    whh_rz = jnp.concatenate([whh[0], whh[1]], axis=1)           # (D, 2D)
    whh_n = whh[2]
    zdd = jnp.zeros((D, D), jnp.float32)
    m_blocks = [jnp.concatenate([wmsg[e] @ wih_rz, wmsg[e] @ wih_n, zdd], axis=1)
                for e in range(E)]                               # each (D, 4D)
    m_blocks.append(jnp.concatenate([whh_rz, zdd, whh_n], axis=1))
    bn_scale = gamma * jax.lax.rsqrt(rvar + BN_EPS)              # (1, FF)
    bn_shift = beta - rmean * bn_scale
    brz = jnp.concatenate([bih[0] + bhh[0], bih[1] + bhh[1]], axis=1)   # (1, 2D)
    gb_helper = (wih_rz, wih_n, brz, bih[2], bhh[2], bmsg[:, 0, :])
    return m_blocks, bn_scale, bn_shift, gb_helper


def pack_params(raw_one, raw_two, seg, wff, bff):
    """Build the single consolidated weight/constant array wpack (264, 128)."""
    m1, sc1, sh1, gb1 = _pack_side(raw_one)
    m2, sc2, sh2, gb2 = _pack_side(raw_two)
    # per-block weights, both sides stacked on the contraction axis
    wstack = jnp.concatenate(
        [jnp.concatenate([m1[k], m2[k]], axis=0) for k in range(KB)], axis=0)

    # head constants block (8, 128)
    zbn = jnp.zeros((B, NS), jnp.float32)
    segblk = jnp.concatenate(
        [jnp.concatenate([seg, zbn], axis=1),
         jnp.concatenate([zbn, seg], axis=1)], axis=0)           # (2B, NT)
    bnscale = jnp.concatenate([jnp.tile(sc1, (B, 1)), jnp.tile(sc2, (B, 1))], axis=0)
    bnshift = jnp.concatenate([jnp.tile(sh1, (B, 1)), jnp.tile(sh2, (B, 1))], axis=0)
    head = jnp.zeros((HEAD_ROWS, GATE_W), jnp.float32)
    head = head.at[0:2 * B, 0:NT].set(segblk)
    head = head.at[0:2 * B, NT:NT + FF].set(bnscale)
    head = head.at[2 * B:4 * B, NT:NT + FF].set(bnshift)
    head = head.at[2 * B:2 * B + CLASS_NUM, 0:FF].set(wff.T)
    head = head.at[2 * B + CLASS_NUM, 0:CLASS_NUM].set(bff[0])

    wpack = jnp.concatenate([wstack, head], axis=0)              # (264, 128)
    return wpack, gb1, gb2


def make_graph(key):
    """Random batched graph: node token ids + dense per-edge-type adjacency."""
    k_tok, k_src, k_dst, k_typ = jax.random.split(key, 4)
    node_ids = jax.random.randint(k_tok, (NS,), 0, VOCAB)
    src = jax.random.randint(k_src, (B, NUM_EDGES_PER_GRAPH), 0, N_PER)
    dst = jax.random.randint(k_dst, (B, NUM_EDGES_PER_GRAPH), 0, N_PER)
    typ = jax.random.randint(k_typ, (B, NUM_EDGES_PER_GRAPH), 0, E)
    offset = (jnp.arange(B) * N_PER)[:, None]
    src_g = (src + offset).reshape(-1)
    dst_g = (dst + offset).reshape(-1)
    typ_g = typ.reshape(-1)
    adj = jnp.zeros((E, NS, NS), jnp.float32).at[typ_g, dst_g, src_g].add(1.0)
    return node_ids, adj


def make_readout_matrix():
    # mean readout: seg[g, n] = 1/N_PER if node n belongs to graph g (rows sum to 1)
    graph_of_node = jnp.repeat(jnp.arange(B), N_PER)
    seg = (graph_of_node[None, :] == jnp.arange(B)[:, None]).astype(jnp.float32)
    return seg / float(N_PER)


def _adjw_ext(adj_one, adj_two):
    """Packed adjacency (NT, KB*NT): E block-diag edge-type blocks + identity block."""
    zs = jnp.zeros((NS, NS), jnp.float32)
    blocks = []
    for e in range(E):
        top = jnp.concatenate([adj_one[e], zs], axis=1)
        bot = jnp.concatenate([zs, adj_two[e]], axis=1)
        blocks.append(jnp.concatenate([top, bot], axis=0))
    blocks.append(jnp.eye(NT, dtype=jnp.float32))
    return jnp.concatenate(blocks, axis=1)


def _side_gbias(adj, gb_helper):
    """Per-node gate-bias constant: degree-weighted msg bias folded through Wih + biases."""
    wih_rz, wih_n, brz, b_in, b_hn, bmsg_flat = gb_helper
    deg = jnp.sum(adj, axis=-1)                                  # (E, NS)
    abias = jnp.einsum('en,ed->nd', deg, bmsg_flat)              # (NS, D)
    return jnp.concatenate([abias @ wih_rz + brz,
                            abias @ wih_n + b_in,
                            jnp.tile(b_hn, (NS, 1))], axis=1)    # (NS, GATE_W)


@jax.jit
def pairwise_ggnn_forward(node_ids_one, adj_one, node_ids_two, adj_two,
                          emb_table, wpack, gb_one, gb_two):
    embed_one = jnp.take(emb_table, node_ids_one, axis=0)
    embed_two = jnp.take(emb_table, node_ids_two, axis=0)
    h0 = jnp.concatenate([embed_one, embed_two], axis=0)         # (NT, D)
    adjw = _adjw_ext(adj_one, adj_two)                           # (NT, ADJ_W)
    gbias = jnp.concatenate([_side_gbias(adj_one, gb_one),
                             _side_gbias(adj_two, gb_two)], axis=0)
    gdyn = jnp.concatenate([adjw, gbias, h0], axis=1)            # (NT, GDYN_W)
    return _pairwise_call(gdyn, wpack)


# ----------------------- pure-JAX reference (unfused) -----------------------
def reference_forward(node_ids_one, adj_one, node_ids_two, adj_two,
                      emb_table, raw_one, raw_two, seg, wff, bff):
    def side(node_ids, adj, raw):
        wmsg, bmsg, wih, bih, whh, bhh, gamma, beta, rmean, rvar = raw
        h0 = emb_table[node_ids]
        h = h0
        for _ in range(NSTEPS):
            a = jnp.zeros_like(h)
            for e in range(E):
                msg = h @ wmsg[e] + bmsg[e]
                a = a + adj[e] @ msg
            r = jax.nn.sigmoid(a @ wih[0] + bih[0] + h @ whh[0] + bhh[0])
            z = jax.nn.sigmoid(a @ wih[1] + bih[1] + h @ whh[1] + bhh[1])
            n = jnp.tanh(a @ wih[2] + bih[2] + r * (h @ whh[2] + bhh[2]))
            h = (1.0 - z) * n + z * h
        hcat = jnp.concatenate([h, h0], axis=-1)
        hbn = (hcat - rmean) * (gamma * jax.lax.rsqrt(rvar + BN_EPS)) + beta
        return seg @ hbn

    f1 = side(node_ids_one, adj_one, raw_one)
    f2 = side(node_ids_two, adj_two, raw_two)
    euc = (f1 - f2) ** 2
    logits = euc @ wff + bff
    logits = jnp.where(logits >= 0.0, logits, LEAKY_SLOPE * logits)
    return jax.nn.softmax(logits, axis=-1)


if __name__ == "__main__":
    root = jax.random.PRNGKey(0)
    k_g1, k_g2, k_emb, k_p1, k_p2, k_ff = jax.random.split(root, 6)

    node_ids_one, adj_one = make_graph(k_g1)
    node_ids_two, adj_two = make_graph(k_g2)

    emb_table = jax.random.normal(k_emb, (VOCAB, D), jnp.float32) * 0.1
    raw_one = make_gconv_params(k_p1)
    raw_two = make_gconv_params(k_p2)
    seg = make_readout_matrix()
    wff = jax.random.normal(k_ff, (FF, CLASS_NUM), jnp.float32) * 0.1
    bff = jnp.zeros((1, CLASS_NUM), jnp.float32)

    wpack, gb_one, gb_two = pack_params(raw_one, raw_two, seg, wff, bff)

    sm_out = pairwise_ggnn_forward(node_ids_one, adj_one, node_ids_two, adj_two,
                                   emb_table, wpack, gb_one, gb_two)
    sm_out = jax.block_until_ready(sm_out)

    assert sm_out.shape == (B, CLASS_NUM)
    assert bool(jnp.all(jnp.isfinite(sm_out)))
    # softmax rows must sum to 1
    assert bool(jnp.all(jnp.abs(jnp.sum(sm_out, axis=-1) - 1.0) < 1e-5))
    # fused kernel must match the unfused reference semantics
    ref_out = reference_forward(node_ids_one, adj_one, node_ids_two, adj_two,
                                emb_table, raw_one, raw_two, seg, wff, bff)
    assert bool(jnp.allclose(sm_out, ref_out, atol=1e-4, rtol=1e-4))
    print("KERNEL_OK")
</pallas_src>

<mosaic_0001>
module attributes {stable_mosaic.version = 11 : i64} {
  func.func @pairwise_ggnn_kernel(%arg0: i32, %arg1: memref<64x416xf32, #tpu.memory_space<vmem>>, %arg2: memref<264x128xf32, #tpu.memory_space<vmem>>, %arg3: memref<2x2xf32, #tpu.memory_space<vmem>>, %arg4: memref<64x64xf32, #tpu.memory_space<vmem>>, %arg5: memref<256x128xf32, #tpu.memory_space<vmem>>) attributes {dimension_semantics = [#tpu.dimension_semantics<arbitrary>], iteration_bounds = array<i64: 1>, scalar_prefetch = 0 : i64, scratch_operands = 2 : i64, tpu.core_type = #tpu.core_type<tc>, window_params = [{pipeline_mode = #tpu.pipeline_mode<synchronous>, transform_indices = @transform_0, window_bounds = array<i64: 64, 416>}, {pipeline_mode = #tpu.pipeline_mode<synchronous>, transform_indices = @transform_1, window_bounds = array<i64: 264, 128>}, {pipeline_mode = #tpu.pipeline_mode<synchronous>, transform_indices = @transform_2, window_bounds = array<i64: 2, 2>}]} {
    %c0 = arith.constant 0 : index
    %c384 = arith.constant 384 : index
    %0 = vector.load %arg1[%c0, %c384] : memref<64x416xf32, #tpu.memory_space<vmem>>, vector<64x32xf32>
    %cst = arith.constant 0.000000e+00 : f32
    %1 = vector.broadcast %cst : f32 to vector<64x64xf32>
    %c0_0 = arith.constant 0 : index
    %c0_1 = arith.constant 0 : index
    %2 = vector.load %arg4[%c0_0, %c0_1] : memref<64x64xf32, #tpu.memory_space<vmem>>, vector<64x64xf32>
    tpu.vector_store %arg4[%c0_0, %c0_1], %1 {strides = array<i32>} : memref<64x64xf32, #tpu.memory_space<vmem>>, vector<64x64xf32>,
    %3 = vector.extract_strided_slice %0 {offsets = [0, 0], sizes = [32, 32], strides = [1, 1]} : vector<64x32xf32> to vector<32x32xf32>
    %c0_2 = arith.constant 0 : index
    %c0_3 = arith.constant 0 : index
    %4 = vector.load %arg4[%c0_2, %c0_3] : memref<64x64xf32, #tpu.memory_space<vmem>>, vector<32x32xf32>
    tpu.vector_store %arg4[%c0_2, %c0_3], %3 {strides = array<i32>} : memref<64x64xf32, #tpu.memory_space<vmem>>, vector<32x32xf32>,
    %5 = vector.extract_strided_slice %0 {offsets = [32, 0], sizes = [32, 32], strides = [1, 1]} : vector<64x32xf32> to vector<32x32xf32>
    %c32 = arith.constant 32 : index
    %c32_4 = arith.constant 32 : index
    %6 = vector.load %arg4[%c32, %c32_4] : memref<64x64xf32, #tpu.memory_space<vmem>>, vector<32x32xf32>
    tpu.vector_store %arg4[%c32, %c32_4], %5 {strides = array<i32>} : memref<64x64xf32, #tpu.memory_space<vmem>>, vector<32x32xf32>,
    %c0_5 = arith.constant 0 : index
    %c0_6 = arith.constant 0 : index
    %7 = vector.load %arg4[%c0_5, %c0_6] : memref<64x64xf32, #tpu.memory_space<vmem>>, vector<64x64xf32>
    %c0_7 = arith.constant 0 : index
    %c0_8 = arith.constant 0 : index
    %8 = vector.load %arg2[%c0_7, %c0_8] : memref<264x128xf32, #tpu.memory_space<vmem>>, vector<64x128xf32>
    %cst_9 = arith.constant dense<0.000000e+00> : vector<64x128xf32>
    %9 = tpu.matmul %7, %8, %cst_9 {dimension_numbers = #tpu.dot_dimension_numbers<[1], [0], [0], [1], [0, 0, 1, 1], [], []>} : vector<64x64xf32>, vector<64x128xf32>, vector<64x128xf32> -> vector<64x128xf32>
    %c0_10 = arith.constant 0 : index
    %c0_11 = arith.constant 0 : index
    %10 = vector.load %arg5[%c0_10, %c0_11] : memref<256x128xf32, #tpu.memory_space<vmem>>, vector<64x128xf32>
    tpu.vector_store %arg5[%c0_10, %c0_11], %9 {strides = array<i32>} : memref<256x128xf32, #tpu.memory_space<vmem>>, vector<64x128xf32>,
    %c64 = arith.constant 64 : index
    %c0_12 = arith.constant 0 : index
    %11 = vector.load %arg2[%c64, %c0_12] : memref<264x128xf32, #tpu.memory_space<vmem>>, vector<64x128xf32>
    %cst_13 = arith.constant dense<0.000000e+00> : vector<64x128xf32>
    %12 = tpu.matmul %7, %11, %cst_13 {dimension_numbers = #tpu.dot_dimension_numbers<[1], [0], [0], [1], [0, 0, 1, 1], [], []>} : vector<64x64xf32>, vector<64x128xf32>, vector<64x128xf32> -> vector<64x128xf32>
    %c64_14 = arith.constant 64 : index
    %c0_15 = arith.constant 0 : index
    %13 = vector.load %arg5[%c64_14, %c0_15] : memref<256x128xf32, #tpu.memory_space<vmem>>, vector<64x128xf32>
    tpu.vector_store %arg5[%c64_14, %c0_15], %12 {strides = array<i32>} : memref<256x128xf32, #tpu.memory_space<vmem>>, vector<64x128xf32>,
    %c128 = arith.constant 128 : index
    %c0_16 = arith.constant 0 : index
    %14 = vector.load %arg2[%c128, %c0_16] : memref<264x128xf32, #tpu.memory_space<vmem>>, vector<64x128xf32>
    %cst_17 = arith.constant dense<0.000000e+00> : vector<64x128xf32>
    %15 = tpu.matmul %7, %14, %cst_17 {dimension_numbers = #tpu.dot_dimension_numbers<[1], [0], [0], [1], [0, 0, 1, 1], [], []>} : vector<64x64xf32>, vector<64x128xf32>, vector<64x128xf32> -> vector<64x128xf32>
    %c128_18 = arith.constant 128 : index
    %c0_19 = arith.constant 0 : index
    %16 = vector.load %arg5[%c128_18, %c0_19] : memref<256x128xf32, #tpu.memory_space<vmem>>, vector<64x128xf32>
    tpu.vector_store %arg5[%c128_18, %c0_19], %15 {strides = array<i32>} : memref<256x128xf32, #tpu.memory_space<vmem>>, vector<64x128xf32>,
    %c192 = arith.constant 192 : index
    %c0_20 = arith.constant 0 : index
    %17 = vector.load %arg2[%c192, %c0_20] : memref<264x128xf32, #tpu.memory_space<vmem>>, vector<64x128xf32>
    %cst_21 = arith.constant dense<0.000000e+00> : vector<64x128xf32>
    %18 = tpu.matmul %7, %17, %cst_21 {dimension_numbers = #tpu.dot_dimension_numbers<[1], [0], [0], [1], [0, 0, 1, 1], [], []>} : vector<64x64xf32>, vector<64x128xf32>, vector<64x128xf32> -> vector<64x128xf32>
    %c192_22 = arith.constant 192 : index
    %c0_23 = arith.constant 0 : index
    %19 = vector.load %arg5[%c192_22, %c0_23] : memref<256x128xf32, #tpu.memory_space<vmem>>, vector<64x128xf32>
    tpu.vector_store %arg5[%c192_22, %c0_23], %18 {strides = array<i32>} : memref<256x128xf32, #tpu.memory_space<vmem>>, vector<64x128xf32>,
    %c0_24 = arith.constant 0 : index
    %c0_25 = arith.constant 0 : index
    %20 = vector.load %arg1[%c0_24, %c0_25] : memref<64x416xf32, #tpu.memory_space<vmem>>, vector<64x256xf32>
    %c0_26 = arith.constant 0 : index
    %c0_27 = arith.constant 0 : index
    %21 = vector.load %arg5[%c0_26, %c0_27] : memref<256x128xf32, #tpu.memory_space<vmem>>, vector<256x128xf32>
    %cst_28 = arith.constant dense<0.000000e+00> : vector<64x128xf32>
    %22 = tpu.matmul %20, %21, %cst_28 {dimension_numbers = #tpu.dot_dimension_numbers<[1], [0], [0], [1], [0, 0, 1, 1], [], []>} : vector<64x256xf32>, vector<256x128xf32>, vector<64x128xf32> -> vector<64x128xf32>
    %c0_29 = arith.constant 0 : index
    %c256 = arith.constant 256 : index
    %23 = vector.load %arg1[%c0_29, %c256] : memref<64x416xf32, #tpu.memory_space<vmem>>, vector<64x128xf32>
    %24 = arith.addf %22, %23 : vector<64x128xf32>
    %25 = vector.extract_strided_slice %24 {offsets = [0, 0], sizes = [64, 64], strides = [1, 1]} : vector<64x128xf32> to vector<64x64xf32>
    %26 = arith.negf %25 : vector<64x64xf32>
    %27 = math.exp %26 : vector<64x64xf32>
    %cst_30 = arith.constant 1.000000e+00 : f32
    %28 = vector.broadcast %cst_30 : f32 to vector<64x64xf32>
    %29 = arith.addf %28, %27 : vector<64x64xf32>
    %30 = arith.divf %28, %29 : vector<64x64xf32>
    %31 = vector.extract_strided_slice %30 {offsets = [0, 0], sizes = [64, 32], strides = [1, 1]} : vector<64x64xf32> to vector<64x32xf32>
    %32 = vector.extract_strided_slice %30 {offsets = [0, 32], sizes = [64, 32], strides = [1, 1]} : vector<64x64xf32> to vector<64x32xf32>
    %33 = vector.extract_strided_slice %24 {offsets = [0, 64], sizes = [64, 32], strides = [1, 1]} : vector<64x128xf32> to vector<64x32xf32>
    %34 = vector.extract_strided_slice %24 {offsets = [0, 96], sizes = [64, 32], strides = [1, 1]} : vector<64x128xf32> to vector<64x32xf32>
    %35 = arith.mulf %31, %34 : vector<64x32xf32>
    %36 = arith.addf %33, %35 : vector<64x32xf32>
    %37 = math.tanh %36 : vector<64x32xf32>
    %cst_31 = arith.constant 1.000000e+00 : f32
    %38 = vector.broadcast %cst_31 : f32 to vector<64x32xf32>
    %39 = arith.subf %38, %32 : vector<64x32xf32>
    %40 = arith.mulf %39, %37 : vector<64x32xf32>
    %41 = arith.mulf %32, %0 : vector<64x32xf32>
    %42 = arith.addf %40, %41 : vector<64x32xf32>
    %43 = vector.extract_strided_slice %42 {offsets = [0, 0], sizes = [32, 32], strides = [1, 1]} : vector<64x32xf32> to vector<32x32xf32>
    %c0_32 = arith.constant 0 : index
    %c0_33 = arith.constant 0 : index
    %44 = vector.load %arg4[%c0_32, %c0_33] : memref<64x64xf32, #tpu.memory_space<vmem>>, vector<32x32xf32>
    tpu.vector_store %arg4[%c0_32, %c0_33], %43 {strides = array<i32>} : memref<64x64xf32, #tpu.memory_space<vmem>>, vector<32x32xf32>,
    %45 = vector.extract_strided_slice %42 {offsets = [32, 0], sizes = [32, 32], strides = [1, 1]} : vector<64x32xf32> to vector<32x32xf32>
    %c32_34 = arith.constant 32 : index
    %c32_35 = arith.constant 32 : index
    %46 = vector.load %arg4[%c32_34, %c32_35] : memref<64x64xf32, #tpu.memory_space<vmem>>, vector<32x32xf32>
    tpu.vector_store %arg4[%c32_34, %c32_35], %45 {strides = array<i32>} : memref<64x64xf32, #tpu.memory_space<vmem>>, vector<32x32xf32>,
    %c0_36 = arith.constant 0 : index
    %c0_37 = arith.constant 0 : index
    %47 = vector.load %arg4[%c0_36, %c0_37] : memref<64x64xf32, #tpu.memory_space<vmem>>, vector<64x64xf32>
    %c0_38 = arith.constant 0 : index
    %c0_39 = arith.constant 0 : index
    %48 = vector.load %arg2[%c0_38, %c0_39] : memref<264x128xf32, #tpu.memory_space<vmem>>, vector<64x128xf32>
    %cst_40 = arith.constant dense<0.000000e+00> : vector<64x128xf32>
    %49 = tpu.matmul %47, %48, %cst_40 {dimension_numbers = #tpu.dot_dimension_numbers<[1], [0], [0], [1], [0, 0, 1, 1], [], []>} : vector<64x64xf32>, vector<64x128xf32>, vector<64x128xf32> -> vector<64x128xf32>
    %c0_41 = arith.constant 0 : index
    %c0_42 = arith.constant 0 : index
    %50 = vector.load %arg5[%c0_41, %c0_42] : memref<256x128xf32, #tpu.memory_space<vmem>>, vector<64x128xf32>
    tpu.vector_store %arg5[%c0_41, %c0_42], %49 {strides = array<i32>} : memref<256x128xf32, #tpu.memory_space<vmem>>, vector<64x128xf32>,
    %c64_43 = arith.constant 64 : index
    %c0_44 = arith.constant 0 : index
    %51 = vector.load %arg2[%c64_43, %c0_44] : memref<264x128xf32, #tpu.memory_space<vmem>>, vector<64x128xf32>
    %cst_45 = arith.constant dense<0.000000e+00> : vector<64x128xf32>
    %52 = tpu.matmul %47, %51, %cst_45 {dimension_numbers = #tpu.dot_dimension_numbers<[1], [0], [0], [1], [0, 0, 1, 1], [], []>} : vector<64x64xf32>, vector<64x128xf32>, vector<64x128xf32> -> vector<64x128xf32>
    %c64_46 = arith.constant 64 : index
    %c0_47 = arith.constant 0 : index
    %53 = vector.load %arg5[%c64_46, %c0_47] : memref<256x128xf32, #tpu.memory_space<vmem>>, vector<64x128xf32>
    tpu.vector_store %arg5[%c64_46, %c0_47], %52 {strides = array<i32>} : memref<256x128xf32, #tpu.memory_space<vmem>>, vector<64x128xf32>,
    %c128_48 = arith.constant 128 : index
    %c0_49 = arith.constant 0 : index
    %54 = vector.load %arg2[%c128_48, %c0_49] : memref<264x128xf32, #tpu.memory_space<vmem>>, vector<64x128xf32>
    %cst_50 = arith.constant dense<0.000000e+00> : vector<64x128xf32>
    %55 = tpu.matmul %47, %54, %cst_50 {dimension_numbers = #tpu.dot_dimension_numbers<[1], [0], [0], [1], [0, 0, 1, 1], [], []>} : vector<64x64xf32>, vector<64x128xf32>, vector<64x128xf32> -> vector<64x128xf32>
    %c128_51 = arith.constant 128 : index
    %c0_52 = arith.constant 0 : index
    %56 = vector.load %arg5[%c128_51, %c0_52] : memref<256x128xf32, #tpu.memory_space<vmem>>, vector<64x128xf32>
    tpu.vector_store %arg5[%c128_51, %c0_52], %55 {strides = array<i32>} : memref<256x128xf32, #tpu.memory_space<vmem>>, vector<64x128xf32>,
    %c192_53 = arith.constant 192 : index
    %c0_54 = arith.constant 0 : index
    %57 = vector.load %arg2[%c192_53, %c0_54] : memref<264x128xf32, #tpu.memory_space<vmem>>, vector<64x128xf32>
    %cst_55 = arith.constant dense<0.000000e+00> : vector<64x128xf32>
    %58 = tpu.matmul %47, %57, %cst_55 {dimension_numbers = #tpu.dot_dimension_numbers<[1], [0], [0], [1], [0, 0, 1, 1], [], []>} : vector<64x64xf32>, vector<64x128xf32>, vector<64x128xf32> -> vector<64x128xf32>
    %c192_56 = arith.constant 192 : index
    %c0_57 = arith.constant 0 : index
    %59 = vector.load %arg5[%c192_56, %c0_57] : memref<256x128xf32, #tpu.memory_space<vmem>>, vector<64x128xf32>
    tpu.vector_store %arg5[%c192_56, %c0_57], %58 {strides = array<i32>} : memref<256x128xf32, #tpu.memory_space<vmem>>, vector<64x128xf32>,
    %c0_58 = arith.constant 0 : index
    %c0_59 = arith.constant 0 : index
    %60 = vector.load %arg1[%c0_58, %c0_59] : memref<64x416xf32, #tpu.memory_space<vmem>>, vector<64x256xf32>
    %c0_60 = arith.constant 0 : index
    %c0_61 = arith.constant 0 : index
    %61 = vector.load %arg5[%c0_60, %c0_61] : memref<256x128xf32, #tpu.memory_space<vmem>>, vector<256x128xf32>
    %cst_62 = arith.constant dense<0.000000e+00> : vector<64x128xf32>
    %62 = tpu.matmul %60, %61, %cst_62 {dimension_numbers = #tpu.dot_dimension_numbers<[1], [0], [0], [1], [0, 0, 1, 1], [], []>} : vector<64x256xf32>, vector<256x128xf32>, vector<64x128xf32> -> vector<64x128xf32>
    %c0_63 = arith.constant 0 : index
    %c256_64 = arith.constant 256 : index
    %63 = vector.load %arg1[%c0_63, %c256_64] : memref<64x416xf32, #tpu.memory_space<vmem>>, vector<64x128xf32>
    %64 = arith.addf %62, %63 : vector<64x128xf32>
    %65 = vector.extract_strided_slice %64 {offsets = [0, 0], sizes = [64, 64], strides = [1, 1]} : vector<64x128xf32> to vector<64x64xf32>
    %66 = arith.negf %65 : vector<64x64xf32>
    %67 = math.exp %66 : vector<64x64xf32>
    %cst_65 = arith.constant 1.000000e+00 : f32
    %68 = vector.broadcast %cst_65 : f32 to vector<64x64xf32>
    %69 = arith.addf %68, %67 : vector<64x64xf32>
    %70 = arith.divf %68, %69 : vector<64x64xf32>
    %71 = vector.extract_strided_slice %70 {offsets = [0, 0], sizes = [64, 32], strides = [1, 1]} : vector<64x64xf32> to vector<64x32xf32>
    %72 = vector.extract_strided_slice %70 {offsets = [0, 32], sizes = [64, 32], strides = [1, 1]} : vector<64x64xf32> to vector<64x32xf32>
    %73 = vector.extract_strided_slice %64 {offsets = [0, 64], sizes = [64, 32], strides = [1, 1]} : vector<64x128xf32> to vector<64x32xf32>
    %74 = vector.extract_strided_slice %64 {offsets = [0, 96], sizes = [64, 32], strides = [1, 1]} : vector<64x128xf32> to vector<64x32xf32>
    %75 = arith.mulf %71, %74 : vector<64x32xf32>
    %76 = arith.addf %73, %75 : vector<64x32xf32>
    %77 = math.tanh %76 : vector<64x32xf32>
    %cst_66 = arith.constant 1.000000e+00 : f32
    %78 = vector.broadcast %cst_66 : f32 to vector<64x32xf32>
    %79 = arith.subf %78, %72 : vector<64x32xf32>
    %80 = arith.mulf %79, %77 : vector<64x32xf32>
    %81 = arith.mulf %72, %42 : vector<64x32xf32>
    %82 = arith.addf %80, %81 : vector<64x32xf32>
    %83 = vector.extract_strided_slice %82 {offsets = [0, 0], sizes = [32, 32], strides = [1, 1]} : vector<64x32xf32> to vector<32x32xf32>
    %c0_67 = arith.constant 0 : index
    %c0_68 = arith.constant 0 : index
    %84 = vector.load %arg4[%c0_67, %c0_68] : memref<64x64xf32, #tpu.memory_space<vmem>>, vector<32x32xf32>
    tpu.vector_store %arg4[%c0_67, %c0_68], %83 {strides = array<i32>} : memref<64x64xf32, #tpu.memory_space<vmem>>, vector<32x32xf32>,
    %85 = vector.extract_strided_slice %82 {offsets = [32, 0], sizes = [32, 32], strides = [1, 1]} : vector<64x32xf32> to vector<32x32xf32>
    %c32_69 = arith.constant 32 : index
    %c32_70 = arith.constant 32 : index
    %86 = vector.load %arg4[%c32_69, %c32_70] : memref<64x64xf32, #tpu.memory_space<vmem>>, vector<32x32xf32>
    tpu.vector_store %arg4[%c32_69, %c32_70], %85 {strides = array<i32>} : memref<64x64xf32, #tpu.memory_space<vmem>>, vector<32x32xf32>,
    %c0_71 = arith.constant 0 : index
    %c0_72 = arith.constant 0 : index
    %87 = vector.load %arg4[%c0_71, %c0_72] : memref<64x64xf32, #tpu.memory_space<vmem>>, vector<64x64xf32>
    %c0_73 = arith.constant 0 : index
    %c0_74 = arith.constant 0 : index
    %88 = vector.load %arg2[%c0_73, %c0_74] : memref<264x128xf32, #tpu.memory_space<vmem>>, vector<64x128xf32>
    %cst_75 = arith.constant dense<0.000000e+00> : vector<64x128xf32>
    %89 = tpu.matmul %87, %88, %cst_75 {dimension_numbers = #tpu.dot_dimension_numbers<[1], [0], [0], [1], [0, 0, 1, 1], [], []>} : vector<64x64xf32>, vector<64x128xf32>, vector<64x128xf32> -> vector<64x128xf32>
    %c0_76 = arith.constant 0 : index
    %c0_77 = arith.constant 0 : index
    %90 = vector.load %arg5[%c0_76, %c0_77] : memref<256x128xf32, #tpu.memory_space<vmem>>, vector<64x128xf32>
    tpu.vector_store %arg5[%c0_76, %c0_77], %89 {strides = array<i32>} : memref<256x128xf32, #tpu.memory_space<vmem>>, vector<64x128xf32>,
    %c64_78 = arith.constant 64 : index
    %c0_79 = arith.constant 0 : index
    %91 = vector.load %arg2[%c64_78, %c0_79] : memref<264x128xf32, #tpu.memory_space<vmem>>, vector<64x128xf32>
    %cst_80 = arith.constant dense<0.000000e+00> : vector<64x128xf32>
    %92 = tpu.matmul %87, %91, %cst_80 {dimension_numbers = #tpu.dot_dimension_numbers<[1], [0], [0], [1], [0, 0, 1, 1], [], []>} : vector<64x64xf32>, vector<64x128xf32>, vector<64x128xf32> -> vector<64x128xf32>
    %c64_81 = arith.constant 64 : index
    %c0_82 = arith.constant 0 : index
    %93 = vector.load %arg5[%c64_81, %c0_82] : memref<256x128xf32, #tpu.memory_space<vmem>>, vector<64x128xf32>
    tpu.vector_store %arg5[%c64_81, %c0_82], %92 {strides = array<i32>} : memref<256x128xf32, #tpu.memory_space<vmem>>, vector<64x128xf32>,
    %c128_83 = arith.constant 128 : index
    %c0_84 = arith.constant 0 : index
    %94 = vector.load %arg2[%c128_83, %c0_84] : memref<264x128xf32, #tpu.memory_space<vmem>>, vector<64x128xf32>
    %cst_85 = arith.constant dense<0.000000e+00> : vector<64x128xf32>
    %95 = tpu.matmul %87, %94, %cst_85 {dimension_numbers = #tpu.dot_dimension_numbers<[1], [0], [0], [1], [0, 0, 1, 1], [], []>} : vector<64x64xf32>, vector<64x128xf32>, vector<64x128xf32> -> vector<64x128xf32>
    %c128_86 = arith.constant 128 : index
    %c0_87 = arith.constant 0 : index
    %96 = vector.load %arg5[%c128_86, %c0_87] : memref<256x128xf32, #tpu.memory_space<vmem>>, vector<64x128xf32>
    tpu.vector_store %arg5[%c128_86, %c0_87], %95 {strides = array<i32>} : memref<256x128xf32, #tpu.memory_space<vmem>>, vector<64x128xf32>,
    %c192_88 = arith.constant 192 : index
    %c0_89 = arith.constant 0 : index
    %97 = vector.load %arg2[%c192_88, %c0_89] : memref<264x128xf32, #tpu.memory_space<vmem>>, vector<64x128xf32>
    %cst_90 = arith.constant dense<0.000000e+00> : vector<64x128xf32>
    %98 = tpu.matmul %87, %97, %cst_90 {dimension_numbers = #tpu.dot_dimension_numbers<[1], [0], [0], [1], [0, 0, 1, 1], [], []>} : vector<64x64xf32>, vector<64x128xf32>, vector<64x128xf32> -> vector<64x128xf32>
    %c192_91 = arith.constant 192 : index
    %c0_92 = arith.constant 0 : index
    %99 = vector.load %arg5[%c192_91, %c0_92] : memref<256x128xf32, #tpu.memory_space<vmem>>, vector<64x128xf32>
    tpu.vector_store %arg5[%c192_91, %c0_92], %98 {strides = array<i32>} : memref<256x128xf32, #tpu.memory_space<vmem>>, vector<64x128xf32>,
    %c0_93 = arith.constant 0 : index
    %c0_94 = arith.constant 0 : index
    %100 = vector.load %arg1[%c0_93, %c0_94] : memref<64x416xf32, #tpu.memory_space<vmem>>, vector<64x256xf32>
    %c0_95 = arith.constant 0 : index
    %c0_96 = arith.constant 0 : index
    %101 = vector.load %arg5[%c0_95, %c0_96] : memref<256x128xf32, #tpu.memory_space<vmem>>, vector<256x128xf32>
    %cst_97 = arith.constant dense<0.000000e+00> : vector<64x128xf32>
    %102 = tpu.matmul %100, %101, %cst_97 {dimension_numbers = #tpu.dot_dimension_numbers<[1], [0], [0], [1], [0, 0, 1, 1], [], []>} : vector<64x256xf32>, vector<256x128xf32>, vector<64x128xf32> -> vector<64x128xf32>
    %c0_98 = arith.constant 0 : index
    %c256_99 = arith.constant 256 : index
    %103 = vector.load %arg1[%c0_98, %c256_99] : memref<64x416xf32, #tpu.memory_space<vmem>>, vector<64x128xf32>
    %104 = arith.addf %102, %103 : vector<64x128xf32>
    %105 = vector.extract_strided_slice %104 {offsets = [0, 0], sizes = [64, 64], strides = [1, 1]} : vector<64x128xf32> to vector<64x64xf32>
    %106 = arith.negf %105 : vector<64x64xf32>
    %107 = math.exp %106 : vector<64x64xf32>
    %cst_100 = arith.constant 1.000000e+00 : f32
    %108 = vector.broadcast %cst_100 : f32 to vector<64x64xf32>
    %109 = arith.addf %108, %107 : vector<64x64xf32>
    %110 = arith.divf %108, %109 : vector<64x64xf32>
    %111 = vector.extract_strided_slice %110 {offsets = [0, 0], sizes = [64, 32], strides = [1, 1]} : vector<64x64xf32> to vector<64x32xf32>
    %112 = vector.extract_strided_slice %110 {offsets = [0, 32], sizes = [64, 32], strides = [1, 1]} : vector<64x64xf32> to vector<64x32xf32>
    %113 = vector.extract_strided_slice %104 {offsets = [0, 64], sizes = [64, 32], strides = [1, 1]} : vector<64x128xf32> to vector<64x32xf32>
    %114 = vector.extract_strided_slice %104 {offsets = [0, 96], sizes = [64, 32], strides = [1, 1]} : vector<64x128xf32> to vector<64x32xf32>
    %115 = arith.mulf %111, %114 : vector<64x32xf32>
    %116 = arith.addf %113, %115 : vector<64x32xf32>
    %117 = math.tanh %116 : vector<64x32xf32>
    %cst_101 = arith.constant 1.000000e+00 : f32
    %118 = vector.broadcast %cst_101 : f32 to vector<64x32xf32>
    %119 = arith.subf %118, %112 : vector<64x32xf32>
    %120 = arith.mulf %119, %117 : vector<64x32xf32>
    %121 = arith.mulf %112, %82 : vector<64x32xf32>
    %122 = arith.addf %120, %121 : vector<64x32xf32>
    %123 = vector.extract_strided_slice %122 {offsets = [0, 0], sizes = [32, 32], strides = [1, 1]} : vector<64x32xf32> to vector<32x32xf32>
    %c0_102 = arith.constant 0 : index
    %c0_103 = arith.constant 0 : index
    %124 = vector.load %arg4[%c0_102, %c0_103] : memref<64x64xf32, #tpu.memory_space<vmem>>, vector<32x32xf32>
    tpu.vector_store %arg4[%c0_102, %c0_103], %123 {strides = array<i32>} : memref<64x64xf32, #tpu.memory_space<vmem>>, vector<32x32xf32>,
    %125 = vector.extract_strided_slice %122 {offsets = [32, 0], sizes = [32, 32], strides = [1, 1]} : vector<64x32xf32> to vector<32x32xf32>
    %c32_104 = arith.constant 32 : index
    %c32_105 = arith.constant 32 : index
    %126 = vector.load %arg4[%c32_104, %c32_105] : memref<64x64xf32, #tpu.memory_space<vmem>>, vector<32x32xf32>
    tpu.vector_store %arg4[%c32_104, %c32_105], %125 {strides = array<i32>} : memref<64x64xf32, #tpu.memory_space<vmem>>, vector<32x32xf32>,
    %c0_106 = arith.constant 0 : index
    %c0_107 = arith.constant 0 : index
    %127 = vector.load %arg4[%c0_106, %c0_107] : memref<64x64xf32, #tpu.memory_space<vmem>>, vector<64x64xf32>
    %c0_108 = arith.constant 0 : index
    %c0_109 = arith.constant 0 : index
    %128 = vector.load %arg2[%c0_108, %c0_109] : memref<264x128xf32, #tpu.memory_space<vmem>>, vector<64x128xf32>
    %cst_110 = arith.constant dense<0.000000e+00> : vector<64x128xf32>
    %129 = tpu.matmul %127, %128, %cst_110 {dimension_numbers = #tpu.dot_dimension_numbers<[1], [0], [0], [1], [0, 0, 1, 1], [], []>} : vector<64x64xf32>, vector<64x128xf32>, vector<64x128xf32> -> vector<64x128xf32>
    %c0_111 = arith.constant 0 : index
    %c0_112 = arith.constant 0 : index
    %130 = vector.load %arg5[%c0_111, %c0_112] : memref<256x128xf32, #tpu.memory_space<vmem>>, vector<64x128xf32>
    tpu.vector_store %arg5[%c0_111, %c0_112], %129 {strides = array<i32>} : memref<256x128xf32, #tpu.memory_space<vmem>>, vector<64x128xf32>,
    %c64_113 = arith.constant 64 : index
    %c0_114 = arith.constant 0 : index
    %131 = vector.load %arg2[%c64_113, %c0_114] : memref<264x128xf32, #tpu.memory_space<vmem>>, vector<64x128xf32>
    %cst_115 = arith.constant dense<0.000000e+00> : vector<64x128xf32>
    %132 = tpu.matmul %127, %131, %cst_115 {dimension_numbers = #tpu.dot_dimension_numbers<[1], [0], [0], [1], [0, 0, 1, 1], [], []>} : vector<64x64xf32>, vector<64x128xf32>, vector<64x128xf32> -> vector<64x128xf32>
    %c64_116 = arith.constant 64 : index
    %c0_117 = arith.constant 0 : index
    %133 = vector.load %arg5[%c64_116, %c0_117] : memref<256x128xf32, #tpu.memory_space<vmem>>, vector<64x128xf32>
    tpu.vector_store %arg5[%c64_116, %c0_117], %132 {strides = array<i32>} : memref<256x128xf32, #tpu.memory_space<vmem>>, vector<64x128xf32>,
    %c128_118 = arith.constant 128 : index
    %c0_119 = arith.constant 0 : index
    %134 = vector.load %arg2[%c128_118, %c0_119] : memref<264x128xf32, #tpu.memory_space<vmem>>, vector<64x128xf32>
    %cst_120 = arith.constant dense<0.000000e+00> : vector<64x128xf32>
    %135 = tpu.matmul %127, %134, %cst_120 {dimension_numbers = #tpu.dot_dimension_numbers<[1], [0], [0], [1], [0, 0, 1, 1], [], []>} : vector<64x64xf32>, vector<64x128xf32>, vector<64x128xf32> -> vector<64x128xf32>
    %c128_121 = arith.constant 128 : index
    %c0_122 = arith.constant 0 : index
    %136 = vector.load %arg5[%c128_121, %c0_122] : memref<256x128xf32, #tpu.memory_space<vmem>>, vector<64x128xf32>
    tpu.vector_store %arg5[%c128_121, %c0_122], %135 {strides = array<i32>} : memref<256x128xf32, #tpu.memory_space<vmem>>, vector<64x128xf32>,
    %c192_123 = arith.constant 192 : index
    %c0_124 = arith.constant 0 : index
    %137 = vector.load %arg2[%c192_123, %c0_124] : memref<264x128xf32, #tpu.memory_space<vmem>>, vector<64x128xf32>
    %cst_125 = arith.constant dense<0.000000e+00> : vector<64x128xf32>
    %138 = tpu.matmul %127, %137, %cst_125 {dimension_numbers = #tpu.dot_dimension_numbers<[1], [0], [0], [1], [0, 0, 1, 1], [], []>} : vector<64x64xf32>, vector<64x128xf32>, vector<64x128xf32> -> vector<64x128xf32>
    %c192_126 = arith.constant 192 : index
    %c0_127 = arith.constant 0 : index
    %139 = vector.load %arg5[%c192_126, %c0_127] : memref<256x128xf32, #tpu.memory_space<vmem>>, vector<64x128xf32>
    tpu.vector_store %arg5[%c192_126, %c0_127], %138 {strides = array<i32>} : memref<256x128xf32, #tpu.memory_space<vmem>>, vector<64x128xf32>,
    %c0_128 = arith.constant 0 : index
    %c0_129 = arith.constant 0 : index
    %140 = vector.load %arg1[%c0_128, %c0_129] : memref<64x416xf32, #tpu.memory_space<vmem>>, vector<64x256xf32>
    %c0_130 = arith.constant 0 : index
    %c0_131 = arith.constant 0 : index
    %141 = vector.load %arg5[%c0_130, %c0_131] : memref<256x128xf32, #tpu.memory_space<vmem>>, vector<256x128xf32>
    %cst_132 = arith.constant dense<0.000000e+00> : vector<64x128xf32>
    %142 = tpu.matmul %140, %141, %cst_132 {dimension_numbers = #tpu.dot_dimension_numbers<[1], [0], [0], [1], [0, 0, 1, 1], [], []>} : vector<64x256xf32>, vector<256x128xf32>, vector<64x128xf32> -> vector<64x128xf32>
    %c0_133 = arith.constant 0 : index
    %c256_134 = arith.constant 256 : index
    %143 = vector.load %arg1[%c0_133, %c256_134] : memref<64x416xf32, #tpu.memory_space<vmem>>, vector<64x128xf32>
    %144 = arith.addf %142, %143 : vector<64x128xf32>
    %145 = vector.extract_strided_slice %144 {offsets = [0, 0], sizes = [64, 64], strides = [1, 1]} : vector<64x128xf32> to vector<64x64xf32>
    %146 = arith.negf %145 : vector<64x64xf32>
    %147 = math.exp %146 : vector<64x64xf32>
    %cst_135 = arith.constant 1.000000e+00 : f32
    %148 = vector.broadcast %cst_135 : f32 to vector<64x64xf32>
    %149 = arith.addf %148, %147 : vector<64x64xf32>
    %150 = arith.divf %148, %149 : vector<64x64xf32>
    %151 = vector.extract_strided_slice %150 {offsets = [0, 0], sizes = [64, 32], strides = [1, 1]} : vector<64x64xf32> to vector<64x32xf32>
    %152 = vector.extract_strided_slice %150 {offsets = [0, 32], sizes = [64, 32], strides = [1, 1]} : vector<64x64xf32> to vector<64x32xf32>
    %153 = vector.extract_strided_slice %144 {offsets = [0, 64], sizes = [64, 32], strides = [1, 1]} : vector<64x128xf32> to vector<64x32xf32>
    %154 = vector.extract_strided_slice %144 {offsets = [0, 96], sizes = [64, 32], strides = [1, 1]} : vector<64x128xf32> to vector<64x32xf32>
    %155 = arith.mulf %151, %154 : vector<64x32xf32>
    %156 = arith.addf %153, %155 : vector<64x32xf32>
    %157 = math.tanh %156 : vector<64x32xf32>
    %cst_136 = arith.constant 1.000000e+00 : f32
    %158 = vector.broadcast %cst_136 : f32 to vector<64x32xf32>
    %159 = arith.subf %158, %152 : vector<64x32xf32>
    %160 = arith.mulf %159, %157 : vector<64x32xf32>
    %161 = arith.mulf %152, %122 : vector<64x32xf32>
    %162 = arith.addf %160, %161 : vector<64x32xf32>
    %c256_137 = arith.constant 256 : index
    %c0_138 = arith.constant 0 : index
    %163 = vector.load %arg2[%c256_137, %c0_138] : memref<264x128xf32, #tpu.memory_space<vmem>>, vector<8x128xf32>
    %164 = vector.extract_strided_slice %163 {offsets = [0, 0], sizes = [4, 64], strides = [1, 1]} : vector<8x128xf32> to vector<4x64xf32>
    %165 = vector.extract_strided_slice %163 {offsets = [0, 64], sizes = [4, 64], strides = [1, 1]} : vector<8x128xf32> to vector<4x64xf32>
    %166 = vector.extract_strided_slice %163 {offsets = [4, 64], sizes = [4, 64], strides = [1, 1]} : vector<8x128xf32> to vector<4x64xf32>
    %167 = vector.extract_strided_slice %163 {offsets = [4, 0], sizes = [2, 64], strides = [1, 1]} : vector<8x128xf32> to vector<2x64xf32>
    %168 = vector.extract_strided_slice %163 {offsets = [6, 0], sizes = [1, 2], strides = [1, 1]} : vector<8x128xf32> to vector<1x2xf32>
    %cst_139 = arith.constant dense<0.000000e+00> : vector<4x32xf32>
    %169 = tpu.matmul %164, %162, %cst_139 {dimension_numbers = #tpu.dot_dimension_numbers<[1], [0], [0], [1], [0, 0, 1, 1], [], []>} : vector<4x64xf32>, vector<64x32xf32>, vector<4x32xf32> -> vector<4x32xf32>
    %cst_140 = arith.constant dense<0.000000e+00> : vector<4x32xf32>
    %170 = tpu.matmul %164, %0, %cst_140 {dimension_numbers = #tpu.dot_dimension_numbers<[1], [0], [0], [1], [0, 0, 1, 1], [], []>} : vector<4x64xf32>, vector<64x32xf32>, vector<4x32xf32> -> vector<4x32xf32>
    %171 = tpu.concatenate %169, %170 in 1 : vector<4x32xf32>, vector<4x32xf32> -> vector<4x64xf32>
    %172 = arith.mulf %171, %165 : vector<4x64xf32>
    %173 = arith.addf %172, %166 : vector<4x64xf32>
    %174 = vector.extract_strided_slice %173 {offsets = [0, 0], sizes = [2, 64], strides = [1, 1]} : vector<4x64xf32> to vector<2x64xf32>
    %175 = vector.extract_strided_slice %173 {offsets = [2, 0], sizes = [2, 64], strides = [1, 1]} : vector<4x64xf32> to vector<2x64xf32>
    %176 = arith.subf %174, %175 : vector<2x64xf32>
    %177 = arith.mulf %176, %176 : vector<2x64xf32>
    "tpu.trace_start"() <{level = 10 : i32, message = "bd,cd->bc"}> : () -> ()
    %cst_141 = arith.constant dense<0.000000e+00> : vector<2x2xf32>
    %178 = tpu.matmul %177, %167, %cst_141 {dimension_numbers = #tpu.dot_dimension_numbers<[1], [1], [0], [0], [0, 0, 1, 0], [], []>} : vector<2x64xf32>, vector<2x64xf32>, vector<2x2xf32> -> vector<2x2xf32>
    "tpu.trace_stop"() : () -> ()
    %179 = vector.broadcast %168 : vector<1x2xf32> to vector<2x2xf32>
    %180 = arith.addf %178, %179 : vector<2x2xf32>
    %cst_142 = arith.constant 0.000000e+00 : f32
    %181 = vector.broadcast %cst_142 : f32 to vector<2x2xf32>
    %182 = arith.cmpf oge, %180, %181 : vector<2x2xf32>
    %cst_143 = arith.constant 0.00999999977 : f32
    %183 = vector.broadcast %cst_143 : f32 to vector<2x2xf32>
    %184 = arith.mulf %183, %180 : vector<2x2xf32>
    %185 = arith.select %182, %180, %184 : vector<2x2xi1>, vector<2x2xf32>
    %cst_144 = arith.constant dense<0xFF800000> : vector<2xf32>
    %186 = vector.multi_reduction <maximumf>, %185, %cst_144 [1] : vector<2x2xf32> to vector<2xf32>
    %187 = vector.shape_cast %186 : vector<2xf32> to vector<2x1xf32>
    %188 = vector.broadcast %187 : vector<2x1xf32> to vector<2x2xf32>
    %189 = arith.subf %185, %188 : vector<2x2xf32>
    %190 = math.exp %189 : vector<2x2xf32>
    %cst_145 = arith.constant dense<0.000000e+00> : vector<2xf32>
    %191 = vector.multi_reduction <add>, %190, %cst_145 [1] : vector<2x2xf32> to vector<2xf32>
    %192 = vector.shape_cast %191 : vector<2xf32> to vector<2x1xf32>
    %193 = vector.broadcast %192 : vector<2x1xf32> to vector<2x2xf32>
    %194 = arith.divf %190, %193 : vector<2x2xf32>
    %c0_146 = arith.constant 0 : index
    %c0_147 = arith.constant 0 : index
    %195 = vector.load %arg3[%c0_146, %c0_147] : memref<2x2xf32, #tpu.memory_space<vmem>>, vector<2x2xf32>
    tpu.vector_store %arg3[%c0_146, %c0_147], %194 {strides = array<i32>} : memref<2x2xf32, #tpu.memory_space<vmem>>, vector<2x2xf32>,
    return
  }
  func.func @transform_0(%arg0: i32) -> (i32, i32) {
    %c0_i32 = arith.constant 0 : i32
    %c0_i32_0 = arith.constant 0 : i32
    %c0_i32_1 = arith.constant 0 : i32
    return %c0_i32, %c0_i32_0 : i32, i32
  }
  func.func @transform_1(%arg0: i32) -> (i32, i32) {
    %c0_i32 = arith.constant 0 : i32
    %c0_i32_0 = arith.constant 0 : i32
    %c0_i32_1 = arith.constant 0 : i32
    return %c0_i32, %c0_i32_0 : i32, i32
  }
  func.func @transform_2(%arg0: i32) -> (i32, i32) {
    %c0_i32 = arith.constant 0 : i32
    %c0_i32_0 = arith.constant 0 : i32
    %c0_i32_1 = arith.constant 0 : i32
    return %c0_i32, %c0_i32_0 : i32, i32
  }
}

</mosaic_0001>

<llo_original>
// kernel: pairwise_ggnn_forward.1
$region0: #{pairwise_ggnn_forward.1}
  #allocation0 [shape = 'u32[]', space=smem, size = 0x4, offset = 0x4, fixed_abs, tag = 'smem constant byte address 0x4 - core index']
  #allocation1 [shape = 'u32[144,128]{1,0:T(1,128)}', space=vmem, size = 0x12000, scoped, tag = 'internal scratch']
  #allocation2 [shape = 'f32[64,64]{1,0:T(8,128)}', space=vmem, size = 0x8000, scoped, tag = 'scratch operand']
  #allocation3 [shape = 'f32[256,128]{1,0:T(8,128)}', space=vmem, size = 0x20000, scoped, tag = 'scratch operand']
  %s0 = inlined_call_operand.vmem [shape: f32[64,416], index: 0, kind: input, shape index: {}]
  %s1 = inlined_call_operand.vmem [shape: f32[264,128], index: 1, kind: input, shape index: {}]
  %s2 = inlined_call_operand.hbm [shape: f32[2,2], index: 2, kind: output, shape index: {}]
  %s3 = sld [smem:[#allocation0]]
  $region18: #{pairwise_ggnn_forward.1} parent=0
    _
  %s5 = ssub.s32 1, %s3
  %s6 = scalar_select 0, %s5, %s3
  $region1: #{pairwise_ggnn_forward.1} parent=0
    #allocation4 [shape = 'u8[1024]{0}', space=vmem, size = 0x400, scoped, tag = 'output window, operand 0, single buffered']
    #allocation5 [shape = 's32[1]{0}', space=sflag, size = 0x4, scoped, tag = 'scoped memory for pairwise_ggnn_forward.1']
    %7 = vsyncpa [#allocation5], 0
    // Predicated region
    $region2: #{pairwise_ggnn_forward.1} parent=1 // pred_check
      _
    $region3: #{pairwise_ggnn_forward.1} parent=1 // pred_check_branch
      %9 = sbr.rel (0) target = $region5
    $region4: #{pairwise_ggnn_forward.1} parent=1 // pred_region
      _
    $region5: #{pairwise_ggnn_forward.1} parent=1 // pred_fallthru
      _
    // Predicated region
    $region6: #{pairwise_ggnn_forward.1} parent=1 // pred_check
      _
    $region7: #{pairwise_ggnn_forward.1} parent=1 // pred_check_branch
      %11 = sbr.rel (0) target = $region9
    $region8: #{pairwise_ggnn_forward.1} parent=1 // pred_region
      _
    $region9: #{pairwise_ggnn_forward.1} parent=1 // pred_fallthru
      _
    %v12 = vld [vmem:[%s0 + $0x18] sm:$0xff]
    %v13 = vld [vmem:[%s0 + $0x38] sm:$0xff]
    %v14 = vld [vmem:[%s0 + $0x58] sm:$0xff]
    %v15 = vld [vmem:[%s0 + $0x78] sm:$0xff]
    %v16 = vld [vmem:[%s0 + $0x98] sm:$0xff]
    %v17 = vld [vmem:[%s0 + $0xb8] sm:$0xff]
    %v18 = vld [vmem:[%s0 + $0xd8] sm:$0xff]
    %v19 = vld [vmem:[%s0 + $0xf8] sm:$0xff]
    %vm20 = vcmask 523264
    %21 = vst.msk [vmem:[#allocation2] sm:$0xff] %vm20, 0.0
    %22 = vst.msk [vmem:[#allocation2 + $0x8] sm:$0xff] %vm20, 0.0
    %23 = vst.msk [vmem:[#allocation2 + $0x10] sm:$0xff] %vm20, 0.0
    %24 = vst.msk [vmem:[#allocation2 + $0x18] sm:$0xff] %vm20, 0.0
    %25 = vst.msk [vmem:[#allocation2 + $0x20] sm:$0xff] %vm20, 0.0
    %26 = vst.msk [vmem:[#allocation2 + $0x28] sm:$0xff] %vm20, 0.0
    %27 = vst.msk [vmem:[#allocation2 + $0x30] sm:$0xff] %vm20, 0.0
    %28 = vst.msk [vmem:[#allocation2 + $0x38] sm:$0xff] %vm20, 0.0
    %vm29 = vcmask 261120
    %30 = vst.msk [vmem:[#allocation2] sm:$0xff] %vm29, %v12
    %31 = vst.msk [vmem:[#allocation2 + $0x8] sm:$0xff] %vm29, %v13
    %32 = vst.msk [vmem:[#allocation2 + $0x10] sm:$0xff] %vm29, %v14
    %33 = vst.msk [vmem:[#allocation2 + $0x18] sm:$0xff] %vm29, %v15
    %38 = vrot.lane.b32.xlu0 %v16, 32
    %v39 = vpop.permute.xlu0 %38
    %40 = vrot.lane.b32.xlu0 %v17, 32
    %v41 = vpop.permute.xlu0 %40
    %42 = vrot.lane.b32.xlu0 %v18, 32
    %v43 = vpop.permute.xlu0 %42
    %44 = vrot.lane.b32.xlu0 %v19, 32
    %v45 = vpop.permute.xlu0 %44
    %vm50 = vcmask 523520
    %51 = vst.msk [vmem:[#allocation2 + $0x20] sm:$0xff] %vm50, %v39
    %52 = vst.msk [vmem:[#allocation2 + $0x28] sm:$0xff] %vm50, %v41
    %53 = vst.msk [vmem:[#allocation2 + $0x30] sm:$0xff] %vm50, %v43
    %54 = vst.msk [vmem:[#allocation2 + $0x38] sm:$0xff] %vm50, %v45
    %v55 = vld [vmem:[#allocation2] sm:$0xff]
    %v56 = vld [vmem:[#allocation2 + $0x8] sm:$0xff]
    %v57 = vld [vmem:[#allocation2 + $0x10] sm:$0xff]
    %v58 = vld [vmem:[#allocation2 + $0x18] sm:$0xff]
    %v59 = vld [vmem:[#allocation2 + $0x20] sm:$0xff]
    %v60 = vld [vmem:[#allocation2 + $0x28] sm:$0xff]
    %v61 = vld [vmem:[#allocation2 + $0x30] sm:$0xff]
    %v62 = vld [vmem:[#allocation2 + $0x38] sm:$0xff]
    %v63 = vld [vmem:[%s1] sm:$0xff]
    %v64 = vld [vmem:[%s1 + $0x8] sm:$0xff]
    %v65 = vld [vmem:[%s1 + $0x10] sm:$0xff]
    %v66 = vld [vmem:[%s1 + $0x18] sm:$0xff]
    %v67 = vld [vmem:[%s1 + $0x20] sm:$0xff]
    %v68 = vld [vmem:[%s1 + $0x28] sm:$0xff]
    %v69 = vld [vmem:[%s1 + $0x30] sm:$0xff]
    %v70 = vld [vmem:[%s1 + $0x38] sm:$0xff]
    %v72 = vsel %vm20, %v55, 0
    %v75 = vsel %vm20, %v56, 0
    %v78 = vsel %vm20, %v57, 0
    %v81 = vsel %vm20, %v58, 0
    %v84 = vsel %vm20, %v59, 0
    %v87 = vsel %vm20, %v60, 0
    %v90 = vsel %vm20, %v61, 0
    %v93 = vsel %vm20, %v62, 0
    %95 = vmatprep.subr.mxu0 0.0
    %96 = vmatpush1.msra.mxu0 %v63
    %97 = vmatprep.subr.mxu0 0.0
    %98 = vmatpush1.msra.mxu0 %v64
    %99 = vmatprep.subr.mxu0 0.0
    %100 = vmatpush1.msra.mxu0 %v65
    %101 = vmatprep.subr.mxu0 0.0
    %102 = vmatpush1.msra.mxu0 %v66
    %103 = vmatprep.subr.mxu0 0.0
    %104 = vmatpush1.msra.mxu0 %v67
    %105 = vmatprep.subr.mxu0 0.0
    %106 = vmatpush1.msra.mxu0 %v68
    %107 = vmatprep.subr.mxu0 0.0
    %108 = vmatpush1.msra.mxu0 %v69
    %109 = vmatprep.subr.mxu0 0.0
    %110 = vmatpush1.msra.mxu0 %v70
    %111 = vmatprep.subr.mxu0 0.0
    %112 = vmatpush1.msra.mxu0 0.0
    %113 = vmatprep.subr.mxu0 0.0
    %114 = vmatpush1.msra.mxu0 0.0
    %115 = vmatprep.subr.mxu0 0.0
    %116 = vmatpush1.msra.mxu0 0.0
    %117 = vmatprep.subr.mxu0 0.0
    %118 = vmatpush1.msra.mxu0 0.0
    %119 = vmatprep.subr.mxu0 0.0
    %120 = vmatpush1.msra.mxu0 0.0
    %121 = vmatprep.subr.mxu0 0.0
    %122 = vmatpush1.msra.mxu0 0.0
    %123 = vmatprep.subr.mxu0 0.0
    %124 = vmatpush1.msra.mxu0 0.0
    %125 = vmatprep.subr.mxu0 0.0
    %126 = vmatpush1.msra.mxu0 0.0
    %127 = vmatprep.subr.mxu0 0.0
    %128 = vmatpush1.msra.mxu0 0.0
    %129 = vmatprep.subr.mxu0 0.0
    %130 = vmatpush1.msra.mxu0 0.0
    %131 = vmatprep.subr.mxu0 0.0
    %132 = vmatpush1.msra.mxu0 0.0
    %133 = vmatprep.subr.mxu0 0.0
    %134 = vmatpush1.msra.mxu0 0.0
    %135 = vmatprep.subr.mxu0 0.0
    %136 = vmatpush1.msra.mxu0 0.0
    %137 = vmatprep.subr.mxu0 0.0
    %138 = vmatpush1.msra.mxu0 0.0
    %139 = vmatprep.subr.mxu0 0.0
    %140 = vmatpush1.msra.mxu0 0.0
    %141 = vmatprep.subr.mxu0 0.0
    %142 = vmatpush1.msra.mxu0 0.0
    %143 = vmatprep.subr.mxu0 0.0
    %144 = vmatpush1.msra.mxu0 0.0
    %145 = vmatprep.subr.mxu0 0.0
    %146 = vmatpush1.msra.mxu0 0.0
    %147 = vmatprep.subr.mxu0 0.0
    %148 = vmatpush1.msra.mxu0 0.0
    %149 = vmatprep.subr.mxu0 0.0
    %150 = vmatpush1.msra.mxu0 0.0
    %151 = vmatprep.subr.mxu0 0.0
    %152 = vmatpush1.msra.mxu0 0.0
    %153 = vmatprep.subr.mxu0 0.0
    %154 = vmatpush1.msra.mxu0 0.0
    %155 = vmatprep.subr.mxu0 0.0
    %156 = vmatpush1.msra.mxu0 0.0
    %157 = vmatprep.subr.mxu0 0.0
    %158 = vmatpush1.msra.mxu0 0.0
    %159 = vmatprep.mubr.f32.mxu0 0.0
    %160 = vmatmul.mubr.f32.gmra.mrb[0].mxu0 %v72
    %v161 = vpop.f32.mrb[0].mxu0
    %v162 = vadd.f32 0.0, %v161
    %v163 = vpop.f32.mrb[0].mxu0
    %164 = vmatprep.mubr.f32.mxu0 0.0
    %165 = vmatmul.mubr.f32.gmra.mrb[0].mxu0 %v75
    %v166 = vpop.f32.mrb[0].mxu0
    %v167 = vadd.f32 0.0, %v166
    %v168 = vpop.f32.mrb[0].mxu0
    %169 = vmatprep.mubr.f32.mxu0 0.0
    %170 = vmatmul.mubr.f32.gmra.mrb[0].mxu0 %v78
    %v171 = vpop.f32.mrb[0].mxu0
    %v172 = vadd.f32 0.0, %v171
    %v173 = vpop.f32.mrb[0].mxu0
    %174 = vmatprep.mubr.f32.mxu0 0.0
    %175 = vmatmul.mubr.f32.gmra.mrb[0].mxu0 %v81
    %v176 = vpop.f32.mrb[0].mxu0
    %v177 = vadd.f32 0.0, %v176
    %v178 = vpop.f32.mrb[0].mxu0
    %179 = vmatprep.mubr.f32.mxu0 0.0
    %180 = vmatmul.mubr.f32.gmra.mrb[0].mxu0 %v84
    %v181 = vpop.f32.mrb[0].mxu0
    %v182 = vadd.f32 0.0, %v181
    %v183 = vpop.f32.mrb[0].mxu0
    %184 = vmatprep.mubr.f32.mxu0 0.0
    %185 = vmatmul.mubr.f32.gmra.mrb[0].mxu0 %v87
    %v186 = vpop.f32.mrb[0].mxu0
    %v187 = vadd.f32 0.0, %v186
    %v188 = vpop.f32.mrb[0].mxu0
    %189 = vmatprep.mubr.f32.mxu0 0.0
    %190 = vmatmul.mubr.f32.gmra.mrb[0].mxu0 %v90
    %v191 = vpop.f32.mrb[0].mxu0
    %v192 = vadd.f32 0.0, %v191
    %v193 = vpop.f32.mrb[0].mxu0
    %194 = vmatprep.mubr.f32.mxu0 0.0
    %195 = vmatmul.mubr.f32.gmra.mrb[0].mxu0 %v93
    %v196 = vpop.f32.mrb[0].mxu0
    %v197 = vadd.f32 0.0, %v196
    %v198 = vpop.f32.mrb[0].mxu0
    %199 = vdwg.mxu0
    %200 = vst [vmem:[#allocation3] sm:$0xff] %v162
    %201 = vst [vmem:[#allocation3 + $0x8] sm:$0xff] %v167
    %202 = vst [vmem:[#allocation3 + $0x10] sm:$0xff] %v172
    %203 = vst [vmem:[#allocation3 + $0x18] sm:$0xff] %v177
    %204 = vst [vmem:[#allocation3 + $0x20] sm:$0xff] %v182
    %205 = vst [vmem:[#allocation3 + $0x28] sm:$0xff] %v187
    %206 = vst [vmem:[#allocation3 + $0x30] sm:$0xff] %v192
    %207 = vst [vmem:[#allocation3 + $0x38] sm:$0xff] %v197
    %v208 = vld [vmem:[%s1 + $0x40] sm:$0xff]
    %v209 = vld [vmem:[%s1 + $0x48] sm:$0xff]
    %v210 = vld [vmem:[%s1 + $0x50] sm:$0xff]
    %v211 = vld [vmem:[%s1 + $0x58] sm:$0xff]
    %v212 = vld [vmem:[%s1 + $0x60] sm:$0xff]
    %v213 = vld [vmem:[%s1 + $0x68] sm:$0xff]
    %v214 = vld [vmem:[%s1 + $0x70] sm:$0xff]
    %v215 = vld [vmem:[%s1 + $0x78] sm:$0xff]
    %216 = vmatprep.subr.mxu0 0.0
    %217 = vmatpush1.msra.mxu0 %v208
    %218 = vmatprep.subr.mxu0 0.0
    %219 = vmatpush1.msra.mxu0 %v209
    %220 = vmatprep.subr.mxu0 0.0
    %221 = vmatpush1.msra.mxu0 %v210
    %222 = vmatprep.subr.mxu0 0.0
    %223 = vmatpush1.msra.mxu0 %v211
    %224 = vmatprep.subr.mxu0 0.0
    %225 = vmatpush1.msra.mxu0 %v212
    %226 = vmatprep.subr.mxu0 0.0
    %227 = vmatpush1.msra.mxu0 %v213
    %228 = vmatprep.subr.mxu0 0.0
    %229 = vmatpush1.msra.mxu0 %v214
    %230 = vmatprep.subr.mxu0 0.0
    %231 = vmatpush1.msra.mxu0 %v215
    %232 = vmatprep.subr.mxu0 0.0
    %233 = vmatpush1.msra.mxu0 0.0
    %234 = vmatprep.subr.mxu0 0.0
    %235 = vmatpush1.msra.mxu0 0.0
    %236 = vmatprep.subr.mxu0 0.0
    %237 = vmatpush1.msra.mxu0 0.0
    %238 = vmatprep.subr.mxu0 0.0
    %239 = vmatpush1.msra.mxu0 0.0
    %240 = vmatprep.subr.mxu0 0.0
    %241 = vmatpush1.msra.mxu0 0.0
    %242 = vmatprep.subr.mxu0 0.0
    %243 = vmatpush1.msra.mxu0 0.0
    %244 = vmatprep.subr.mxu0 0.0
    %245 = vmatpush1.msra.mxu0 0.0
    %246 = vmatprep.subr.mxu0 0.0
    %247 = vmatpush1.msra.mxu0 0.0
    %248 = vmatprep.subr.mxu0 0.0
    %249 = vmatpush1.msra.mxu0 0.0
    %250 = vmatprep.subr.mxu0 0.0
    %251 = vmatpush1.msra.mxu0 0.0
    %252 = vmatprep.subr.mxu0 0.0
    %253 = vmatpush1.msra.mxu0 0.0
    %254 = vmatprep.subr.mxu0 0.0
    %255 = vmatpush1.msra.mxu0 0.0
    %256 = vmatprep.subr.mxu0 0.0
    %257 = vmatpush1.msra.mxu0 0.0
    %258 = vmatprep.subr.mxu0 0.0
    %259 = vmatpush1.msra.mxu0 0.0
    %260 = vmatprep.subr.mxu0 0.0
    %261 = vmatpush1.msra.mxu0 0.0
    %262 = vmatprep.subr.mxu0 0.0
    %263 = vmatpush1.msra.mxu0 0.0
    %264 = vmatprep.subr.mxu0 0.0
    %265 = vmatpush1.msra.mxu0 0.0
    %266 = vmatprep.subr.mxu0 0.0
    %267 = vmatpush1.msra.mxu0 0.0
    %268 = vmatprep.subr.mxu0 0.0
    %269 = vmatpush1.msra.mxu0 0.0
    %270 = vmatprep.subr.mxu0 0.0
    %271 = vmatpush1.msra.mxu0 0.0
    %272 = vmatprep.subr.mxu0 0.0
    %273 = vmatpush1.msra.mxu0 0.0
    %274 = vmatprep.subr.mxu0 0.0
    %275 = vmatpush1.msra.mxu0 0.0
    %276 = vmatprep.subr.mxu0 0.0
    %277 = vmatpush1.msra.mxu0 0.0
    %278 = vmatprep.subr.mxu0 0.0
    %279 = vmatpush1.msra.mxu0 0.0
    %280 = vmatprep.mubr.f32.mxu0 0.0
    %281 = vmatmul.mubr.f32.gmra.mrb[0].mxu0 %v72
    %v282 = vpop.f32.mrb[0].mxu0
    %v283 = vadd.f32 0.0, %v282
    %v284 = vpop.f32.mrb[0].mxu0
    %285 = vmatprep.mubr.f32.mxu0 0.0
    %286 = vmatmul.mubr.f32.gmra.mrb[0].mxu0 %v75
    %v287 = vpop.f32.mrb[0].mxu0
    %v288 = vadd.f32 0.0, %v287
    %v289 = vpop.f32.mrb[0].mxu0
    %290 = vmatprep.mubr.f32.mxu0 0.0
    %291 = vmatmul.mubr.f32.gmra.mrb[0].mxu0 %v78
    %v292 = vpop.f32.mrb[0].mxu0
    %v293 = vadd.f32 0.0, %v292
    %v294 = vpop.f32.mrb[0].mxu0
    %295 = vmatprep.mubr.f32.mxu0 0.0
    %296 = vmatmul.mubr.f32.gmra.mrb[0].mxu0 %v81
    %v297 = vpop.f32.mrb[0].mxu0
    %v298 = vadd.f32 0.0, %v297
    %v299 = vpop.f32.mrb[0].mxu0
    %300 = vmatprep.mubr.f32.mxu0 0.0
    %301 = vmatmul.mubr.f32.gmra.mrb[0].mxu0 %v84
    %v302 = vpop.f32.mrb[0].mxu0
    %v303 = vadd.f32 0.0, %v302
    %v304 = vpop.f32.mrb[0].mxu0
    %305 = vmatprep.mubr.f32.mxu0 0.0
    %306 = vmatmul.mubr.f32.gmra.mrb[0].mxu0 %v87
    %v307 = vpop.f32.mrb[0].mxu0
    %v308 = vadd.f32 0.0, %v307
    %v309 = vpop.f32.mrb[0].mxu0
    %310 = vmatprep.mubr.f32.mxu0 0.0
    %311 = vmatmul.mubr.f32.gmra.mrb[0].mxu0 %v90
    %v312 = vpop.f32.mrb[0].mxu0
    %v313 = vadd.f32 0.0, %v312
    %v314 = vpop.f32.mrb[0].mxu0
    %315 = vmatprep.mubr.f32.mxu0 0.0
    %316 = vmatmul.mubr.f32.gmra.mrb[0].mxu0 %v93
    %v317 = vpop.f32.mrb[0].mxu0
    %v318 = vadd.f32 0.0, %v317
    %v319 = vpop.f32.mrb[0].mxu0
    %320 = vdwg.mxu0
    %321 = vst [vmem:[#allocation3 + $0x40] sm:$0xff] %v283
    %322 = vst [vmem:[#allocation3 + $0x48] sm:$0xff] %v288
    %323 = vst [vmem:[#allocation3 + $0x50] sm:$0xff] %v293
    %324 = vst [vmem:[#allocation3 + $0x58] sm:$0xff] %v298
    %325 = vst [vmem:[#allocation3 + $0x60] sm:$0xff] %v303
    %326 = vst [vmem:[#allocation3 + $0x68] sm:$0xff] %v308
    %327 = vst [vmem:[#allocation3 + $0x70] sm:$0xff] %v313
    %328 = vst [vmem:[#allocation3 + $0x78] sm:$0xff] %v318
    %v329 = vld [vmem:[%s1 + $0x80] sm:$0xff]
    %v330 = vld [vmem:[%s1 + $0x88] sm:$0xff]
    %v331 = vld [vmem:[%s1 + $0x90] sm:$0xff]
    %v332 = vld [vmem:[%s1 + $0x98] sm:$0xff]
    %v333 = vld [vmem:[%s1 + $0xa0] sm:$0xff]
    %v334 = vld [vmem:[%s1 + $0xa8] sm:$0xff]
    %v335 = vld [vmem:[%s1 + $0xb0] sm:$0xff]
    %v336 = vld [vmem:[%s1 + $0xb8] sm:$0xff]
    %337 = vmatprep.subr.mxu0 0.0
    %338 = vmatpush1.msra.mxu0 %v329
    %339 = vmatprep.subr.mxu0 0.0
    %340 = vmatpush1.msra.mxu0 %v330
    %341 = vmatprep.subr.mxu0 0.0
    %342 = vmatpush1.msra.mxu0 %v331
    %343 = vmatprep.subr.mxu0 0.0
    %344 = vmatpush1.msra.mxu0 %v332
    %345 = vmatprep.subr.mxu0 0.0
    %346 = vmatpush1.msra.mxu0 %v333
    %347 = vmatprep.subr.mxu0 0.0
    %348 = vmatpush1.msra.mxu0 %v334
    %349 = vmatprep.subr.mxu0 0.0
    %350 = vmatpush1.msra.mxu0 %v335
    %351 = vmatprep.subr.mxu0 0.0
    %352 = vmatpush1.msra.mxu0 %v336
    %353 = vmatprep.subr.mxu0 0.0
    %354 = vmatpush1.msra.mxu0 0.0
    %355 = vmatprep.subr.mxu0 0.0
    %356 = vmatpush1.msra.mxu0 0.0
    %357 = vmatprep.subr.mxu0 0.0
    %358 = vmatpush1.msra.mxu0 0.0
    %359 = vmatprep.subr.mxu0 0.0
    %360 = vmatpush1.msra.mxu0 0.0
    %361 = vmatprep.subr.mxu0 0.0
    %362 = vmatpush1.msra.mxu0 0.0
    %363 = vmatprep.subr.mxu0 0.0
    %364 = vmatpush1.msra.mxu0 0.0
    %365 = vmatprep.subr.mxu0 0.0
    %366 = vmatpush1.msra.mxu0 0.0
    %367 = vmatprep.subr.mxu0 0.0
    %368 = vmatpush1.msra.mxu0 0.0
    %369 = vmatprep.subr.mxu0 0.0
    %370 = vmatpush1.msra.mxu0 0.0
    %371 = vmatprep.subr.mxu0 0.0
    %372 = vmatpush1.msra.mxu0 0.0
    %373 = vmatprep.subr.mxu0 0.0
    %374 = vmatpush1.msra.mxu0 0.0
    %375 = vmatprep.subr.mxu0 0.0
    %376 = vmatpush1.msra.mxu0 0.0
    %377 = vmatprep.subr.mxu0 0.0
    %378 = vmatpush1.msra.mxu0 0.0
    %379 = vmatprep.subr.mxu0 0.0
    %380 = vmatpush1.msra.mxu0 0.0
    %381 = vmatprep.subr.mxu0 0.0
    %382 = vmatpush1.msra.mxu0 0.0
    %383 = vmatprep.subr.mxu0 0.0
    %384 = vmatpush1.msra.mxu0 0.0
    %385 = vmatprep.subr.mxu0 0.0
    %386 = vmatpush1.msra.mxu0 0.0
    %387 = vmatprep.subr.mxu0 0.0
    %388 = vmatpush1.msra.mxu0 0.0
    %389 = vmatprep.subr.mxu0 0.0
    %390 = vmatpush1.msra.mxu0 0.0
    %391 = vmatprep.subr.mxu0 0.0
    %392 = vmatpush1.msra.mxu0 0.0
    %393 = vmatprep.subr.mxu0 0.0
    %394 = vmatpush1.msra.mxu0 0.0
    %395 = vmatprep.subr.mxu0 0.0
    %396 = vmatpush1.msra.mxu0 0.0
    %397 = vmatprep.subr.mxu0 0.0
    %398 = vmatpush1.msra.mxu0 0.0
    %399 = vmatprep.subr.mxu0 0.0
    %400 = vmatpush1.msra.mxu0 0.0
    %401 = vmatprep.mubr.f32.mxu0 0.0
    %402 = vmatmul.mubr.f32.gmra.mrb[0].mxu0 %v72
    %v403 = vpop.f32.mrb[0].mxu0
    %v404 = vadd.f32 0.0, %v403
    %v405 = vpop.f32.mrb[0].mxu0
    %406 = vmatprep.mubr.f32.mxu0 0.0
    %407 = vmatmul.mubr.f32.gmra.mrb[0].mxu0 %v75
    %v408 = vpop.f32.mrb[0].mxu0
    %v409 = vadd.f32 0.0, %v408
    %v410 = vpop.f32.mrb[0].mxu0
    %411 = vmatprep.mubr.f32.mxu0 0.0
    %412 = vmatmul.mubr.f32.gmra.mrb[0].mxu0 %v78
    %v413 = vpop.f32.mrb[0].mxu0
    %v414 = vadd.f32 0.0, %v413
    %v415 = vpop.f32.mrb[0].mxu0
    %416 = vmatprep.mubr.f32.mxu0 0.0
    %417 = vmatmul.mubr.f32.gmra.mrb[0].mxu0 %v81
    %v418 = vpop.f32.mrb[0].mxu0
    %v419 = vadd.f32 0.0, %v418
    %v420 = vpop.f32.mrb[0].mxu0
    %421 = vmatprep.mubr.f32.mxu0 0.0
    %422 = vmatmul.mubr.f32.gmra.mrb[0].mxu0 %v84
    %v423 = vpop.f32.mrb[0].mxu0
    %v424 = vadd.f32 0.0, %v423
    %v425 = vpop.f32.mrb[0].mxu0
    %426 = vmatprep.mubr.f32.mxu0 0.0
    %427 = vmatmul.mubr.f32.gmra.mrb[0].mxu0 %v87
    %v428 = vpop.f32.mrb[0].mxu0
    %v429 = vadd.f32 0.0, %v428
    %v430 = vpop.f32.mrb[0].mxu0
    %431 = vmatprep.mubr.f32.mxu0 0.0
    %432 = vmatmul.mubr.f32.gmra.mrb[0].mxu0 %v90
    %v433 = vpop.f32.mrb[0].mxu0
    %v434 = vadd.f32 0.0, %v433
    %v435 = vpop.f32.mrb[0].mxu0
    %436 = vmatprep.mubr.f32.mxu0 0.0
    %437 = vmatmul.mubr.f32.gmra.mrb[0].mxu0 %v93
    %v438 = vpop.f32.mrb[0].mxu0
    %v439 = vadd.f32 0.0, %v438
    %v440 = vpop.f32.mrb[0].mxu0
    %441 = vdwg.mxu0
    %442 = vst [vmem:[#allocation3 + $0x80] sm:$0xff] %v404
    %443 = vst [vmem:[#allocation3 + $0x88] sm:$0xff] %v409
    %444 = vst [vmem:[#allocation3 + $0x90] sm:$0xff] %v414
    %445 = vst [vmem:[#allocation3 + $0x98] sm:$0xff] %v419
    %446 = vst [vmem:[#allocation3 + $0xa0] sm:$0xff] %v424
    %447 = vst [vmem:[#allocation3 + $0xa8] sm:$0xff] %v429
    %448 = vst [vmem:[#allocation3 + $0xb0] sm:$0xff] %v434
    %449 = vst [vmem:[#allocation3 + $0xb8] sm:$0xff] %v439
    %v450 = vld [vmem:[%s1 + $0xc0] sm:$0xff]
    %v451 = vld [vmem:[%s1 + $0xc8] sm:$0xff]
    %v452 = vld [vmem:[%s1 + $0xd0] sm:$0xff]
    %v453 = vld [vmem:[%s1 + $0xd8] sm:$0xff]
    %v454 = vld [vmem:[%s1 + $0xe0] sm:$0xff]
    %v455 = vld [vmem:[%s1 + $0xe8] sm:$0xff]
    %v456 = vld [vmem:[%s1 + $0xf0] sm:$0xff]
    %v457 = vld [vmem:[%s1 + $0xf8] sm:$0xff]
    %458 = vmatprep.subr.mxu0 0.0
    %459 = vmatpush1.msra.mxu0 %v450
    %460 = vmatprep.subr.mxu0 0.0
    %461 = vmatpush1.msra.mxu0 %v451
    %462 = vmatprep.subr.mxu0 0.0
    %463 = vmatpush1.msra.mxu0 %v452
    %464 = vmatprep.subr.mxu0 0.0
    %465 = vmatpush1.msra.mxu0 %v453
    %466 = vmatprep.subr.mxu0 0.0
    %467 = vmatpush1.msra.mxu0 %v454
    %468 = vmatprep.subr.mxu0 0.0
    %469 = vmatpush1.msra.mxu0 %v455
    %470 = vmatprep.subr.mxu0 0.0
    %471 = vmatpush1.msra.mxu0 %v456
    %472 = vmatprep.subr.mxu0 0.0
    %473 = vmatpush1.msra.mxu0 %v457
    %474 = vmatprep.subr.mxu0 0.0
    %475 = vmatpush1.msra.mxu0 0.0
    %476 = vmatprep.subr.mxu0 0.0
    %477 = vmatpush1.msra.mxu0 0.0
    %478 = vmatprep.subr.mxu0 0.0
    %479 = vmatpush1.msra.mxu0 0.0
    %480 = vmatprep.subr.mxu0 0.0
    %481 = vmatpush1.msra.mxu0 0.0
    %482 = vmatprep.subr.mxu0 0.0
    %483 = vmatpush1.msra.mxu0 0.0
    %484 = vmatprep.subr.mxu0 0.0
    %485 = vmatpush1.msra.mxu0 0.0
    %486 = vmatprep.subr.mxu0 0.0
    %487 = vmatpush1.msra.mxu0 0.0
    %488 = vmatprep.subr.mxu0 0.0
    %489 = vmatpush1.msra.mxu0 0.0
    %490 = vmatprep.subr.mxu0 0.0
    %491 = vmatpush1.msra.mxu0 0.0
    %492 = vmatprep.subr.mxu0 0.0
    %493 = vmatpush1.msra.mxu0 0.0
    %494 = vmatprep.subr.mxu0 0.0
    %495 = vmatpush1.msra.mxu0 0.0
    %496 = vmatprep.subr.mxu0 0.0
    %497 = vmatpush1.msra.mxu0 0.0
    %498 = vmatprep.subr.mxu0 0.0
    %499 = vmatpush1.msra.mxu0 0.0
    %500 = vmatprep.subr.mxu0 0.0
    %501 = vmatpush1.msra.mxu0 0.0
    %502 = vmatprep.subr.mxu0 0.0
    %503 = vmatpush1.msra.mxu0 0.0
    %504 = vmatprep.subr.mxu0 0.0
    %505 = vmatpush1.msra.mxu0 0.0
    %506 = vmatprep.subr.mxu0 0.0
    %507 = vmatpush1.msra.mxu0 0.0
    %508 = vmatprep.subr.mxu0 0.0
    %509 = vmatpush1.msra.mxu0 0.0
    %510 = vmatprep.subr.mxu0 0.0
    %511 = vmatpush1.msra.mxu0 0.0
    %512 = vmatprep.subr.mxu0 0.0
    %513 = vmatpush1.msra.mxu0 0.0
    %514 = vmatprep.subr.mxu0 0.0
    %515 = vmatpush1.msra.mxu0 0.0
    %516 = vmatprep.subr.mxu0 0.0
    %517 = vmatpush1.msra.mxu0 0.0
    %518 = vmatprep.subr.mxu0 0.0
    %519 = vmatpush1.msra.mxu0 0.0
    %520 = vmatprep.subr.mxu0 0.0
    %521 = vmatpush1.msra.mxu0 0.0
    %522 = vmatprep.mubr.f32.mxu0 0.0
    %523 = vmatmul.mubr.f32.gmra.mrb[0].mxu0 %v72
    %v524 = vpop.f32.mrb[0].mxu0
    %v525 = vadd.f32 0.0, %v524
    %v526 = vpop.f32.mrb[0].mxu0
    %527 = vmatprep.mubr.f32.mxu0 0.0
    %528 = vmatmul.mubr.f32.gmra.mrb[0].mxu0 %v75
    %v529 = vpop.f32.mrb[0].mxu0
    %v530 = vadd.f32 0.0, %v529
    %v531 = vpop.f32.mrb[0].mxu0
    %532 = vmatprep.mubr.f32.mxu0 0.0
    %533 = vmatmul.mubr.f32.gmra.mrb[0].mxu0 %v78
    %v534 = vpop.f32.mrb[0].mxu0
    %v535 = vadd.f32 0.0, %v534
    %v536 = vpop.f32.mrb[0].mxu0
    %537 = vmatprep.mubr.f32.mxu0 0.0
    %538 = vmatmul.mubr.f32.gmra.mrb[0].mxu0 %v81
    %v539 = vpop.f32.mrb[0].mxu0
    %v540 = vadd.f32 0.0, %v539
    %v541 = vpop.f32.mrb[0].mxu0
    %542 = vmatprep.mubr.f32.mxu0 0.0
    %543 = vmatmul.mubr.f32.gmra.mrb[0].mxu0 %v84
    %v544 = vpop.f32.mrb[0].mxu0
    %v545 = vadd.f32 0.0, %v544
    %v546 = vpop.f32.mrb[0].mxu0
    %547 = vmatprep.mubr.f32.mxu0 0.0
    %548 = vmatmul.mubr.f32.gmra.mrb[0].mxu0 %v87
    %v549 = vpop.f32.mrb[0].mxu0
    %v550 = vadd.f32 0.0, %v549
    %v551 = vpop.f32.mrb[0].mxu0
    %552 = vmatprep.mubr.f32.mxu0 0.0
    %553 = vmatmul.mubr.f32.gmra.mrb[0].mxu0 %v90
    %v554 = vpop.f32.mrb[0].mxu0
    %v555 = vadd.f32 0.0, %v554
    %v556 = vpop.f32.mrb[0].mxu0
    %557 = vmatprep.mubr.f32.mxu0 0.0
    %558 = vmatmul.mubr.f32.gmra.mrb[0].mxu0 %v93
    %v559 = vpop.f32.mrb[0].mxu0
    %v560 = vadd.f32 0.0, %v559
    %v561 = vpop.f32.mrb[0].mxu0
    %562 = vdwg.mxu0
    %563 = vst [vmem:[#allocation3 + $0xc0] sm:$0xff] %v525
    %564 = vst [vmem:[#allocation3 + $0xc8] sm:$0xff] %v530
    %565 = vst [vmem:[#allocation3 + $0xd0] sm:$0xff] %v535
    %566 = vst [vmem:[#allocation3 + $0xd8] sm:$0xff] %v540
    %567 = vst [vmem:[#allocation3 + $0xe0] sm:$0xff] %v545
    %568 = vst [vmem:[#allocation3 + $0xe8] sm:$0xff] %v550
    %569 = vst [vmem:[#allocation3 + $0xf0] sm:$0xff] %v555
    %570 = vst [vmem:[#allocation3 + $0xf8] sm:$0xff] %v560
    %v571 = vld [vmem:[%s0] sm:$0xff]
    %v572 = vld [vmem:[%s0 + $0x8] sm:$0xff]
    %v573 = vld [vmem:[%s0 + $0x20] sm:$0xff]
    %v574 = vld [vmem:[%s0 + $0x28] sm:$0xff]
    %v575 = vld [vmem:[%s0 + $0x40] sm:$0xff]
    %v576 = vld [vmem:[%s0 + $0x48] sm:$0xff]
    %v577 = vld [vmem:[%s0 + $0x60] sm:$0xff]
    %v578 = vld [vmem:[%s0 + $0x68] sm:$0xff]
    %v579 = vld [vmem:[%s0 + $0x80] sm:$0xff]
    %v580 = vld [vmem:[%s0 + $0x88] sm:$0xff]
    %v581 = vld [vmem:[%s0 + $0xa0] sm:$0xff]
    %v582 = vld [vmem:[%s0 + $0xa8] sm:$0xff]
    %v583 = vld [vmem:[%s0 + $0xc0] sm:$0xff]
    %v584 = vld [vmem:[%s0 + $0xc8] sm:$0xff]
    %v585 = vld [vmem:[%s0 + $0xe0] sm:$0xff]
    %v586 = vld [vmem:[%s0 + $0xe8] sm:$0xff]
    %v587 = vld [vmem:[#allocation3] sm:$0xff]
    %v588 = vld [vmem:[#allocation3 + $0x8] sm:$0xff]
    %v589 = vld [vmem:[#allocation3 + $0x10] sm:$0xff]
    %v590 = vld [vmem:[#allocation3 + $0x18] sm:$0xff]
    %v591 = vld [vmem:[#allocation3 + $0x20] sm:$0xff]
    %v592 = vld [vmem:[#allocation3 + $0x28] sm:$0xff]
    %v593 = vld [vmem:[#allocation3 + $0x30] sm:$0xff]
    %v594 = vld [vmem:[#allocation3 + $0x38] sm:$0xff]
    %v595 = vld [vmem:[#allocation3 + $0x40] sm:$0xff]
    %v596 = vld [vmem:[#allocation3 + $0x48] sm:$0xff]
    %v597 = vld [vmem:[#allocation3 + $0x50] sm:$0xff]
    %v598 = vld [vmem:[#allocation3 + $0x58] sm:$0xff]
    %v599 = vld [vmem:[#allocation3 + $0x60] sm:$0xff]
    %v600 = vld [vmem:[#allocation3 + $0x68] sm:$0xff]
    %v601 = vld [vmem:[#allocation3 + $0x70] sm:$0xff]
    %v602 = vld [vmem:[#allocation3 + $0x78] sm:$0xff]
    %v603 = vld [vmem:[#allocation3 + $0x80] sm:$0xff]
    %v604 = vld [vmem:[#allocation3 + $0x88] sm:$0xff]
    %v605 = vld [vmem:[#allocation3 + $0x90] sm:$0xff]
    %v606 = vld [vmem:[#allocation3 + $0x98] sm:$0xff]
    %v607 = vld [vmem:[#allocation3 + $0xa0] sm:$0xff]
    %v608 = vld [vmem:[#allocation3 + $0xa8] sm:$0xff]
    %v609 = vld [vmem:[#allocation3 + $0xb0] sm:$0xff]
    %v610 = vld [vmem:[#allocation3 + $0xb8] sm:$0xff]
    %v611 = vld [vmem:[#allocation3 + $0xc0] sm:$0xff]
    %v612 = vld [vmem:[#allocation3 + $0xc8] sm:$0xff]
    %v613 = vld [vmem:[#allocation3 + $0xd0] sm:$0xff]
    %v614 = vld [vmem:[#allocation3 + $0xd8] sm:$0xff]
    %v615 = vld [vmem:[#allocation3 + $0xe0] sm:$0xff]
    %v616 = vld [vmem:[#allocation3 + $0xe8] sm:$0xff]
    %v617 = vld [vmem:[#allocation3 + $0xf0] sm:$0xff]
    %v618 = vld [vmem:[#allocation3 + $0xf8] sm:$0xff]
    %v619 = vld [vmem:[%s0 + $0x10] sm:$0xff]
    %v620 = vld [vmem:[%s0 + $0x30] sm:$0xff]
    %v621 = vld [vmem:[%s0 + $0x50] sm:$0xff]
    %v622 = vld [vmem:[%s0 + $0x70] sm:$0xff]
    %v623 = vld [vmem:[%s0 + $0x90] sm:$0xff]
    %v624 = vld [vmem:[%s0 + $0xb0] sm:$0xff]
    %v625 = vld [vmem:[%s0 + $0xd0] sm:$0xff]
    %v626 = vld [vmem:[%s0 + $0xf0] sm:$0xff]
    %627 = vmatprep.subr.mxu0 0.0
    %628 = vmatpush1.msra.mxu0 %v587
    %629 = vmatprep.subr.mxu0 0.0
    %630 = vmatpush1.msra.mxu0 %v588
    %631 = vmatprep.subr.mxu0 0.0
    %632 = vmatpush1.msra.mxu0 %v589
    %633 = vmatprep.subr.mxu0 0.0
    %634 = vmatpush1.msra.mxu0 %v590
    %635 = vmatprep.subr.mxu0 0.0
    %636 = vmatpush1.msra.mxu0 %v591
    %637 = vmatprep.subr.mxu0 0.0
    %638 = vmatpush1.msra.mxu0 %v592
    %639 = vmatprep.subr.mxu0 0.0
    %640 = vmatpush1.msra.mxu0 %v593
    %641 = vmatprep.subr.mxu0 0.0
    %642 = vmatpush1.msra.mxu0 %v594
    %643 = vmatprep.subr.mxu0 0.0
    %644 = vmatpush1.msra.mxu0 %v595
    %645 = vmatprep.subr.mxu0 0.0
    %646 = vmatpush1.msra.mxu0 %v596
    %647 = vmatprep.subr.mxu0 0.0
    %648 = vmatpush1.msra.mxu0 %v597
    %649 = vmatprep.subr.mxu0 0.0
    %650 = vmatpush1.msra.mxu0 %v598
    %651 = vmatprep.subr.mxu0 0.0
    %652 = vmatpush1.msra.mxu0 %v599
    %653 = vmatprep.subr.mxu0 0.0
    %654 = vmatpush1.msra.mxu0 %v600
    %655 = vmatprep.subr.mxu0 0.0
    %656 = vmatpush1.msra.mxu0 %v601
    %657 = vmatprep.subr.mxu0 0.0
    %658 = vmatpush1.msra.mxu0 %v602
    %659 = vmatprep.subr.mxu0 0.0
    %660 = vmatpush1.msra.mxu0 %v603
    %661 = vmatprep.subr.mxu0 0.0
    %662 = vmatpush1.msra.mxu0 %v604
    %663 = vmatprep.subr.mxu0 0.0
    %664 = vmatpush1.msra.mxu0 %v605
    %665 = vmatprep.subr.mxu0 0.0
    %666 = vmatpush1.msra.mxu0 %v606
    %667 = vmatprep.subr.mxu0 0.0
    %668 = vmatpush1.msra.mxu0 %v607
    %669 = vmatprep.subr.mxu0 0.0
    %670 = vmatpush1.msra.mxu0 %v608
    %671 = vmatprep.subr.mxu0 0.0
    %672 = vmatpush1.msra.mxu0 %v609
    %673 = vmatprep.subr.mxu0 0.0
    %674 = vmatpush1.msra.mxu0 %v610
    %675 = vmatprep.subr.mxu0 0.0
    %676 = vmatpush1.msra.mxu0 %v611
    %677 = vmatprep.subr.mxu0 0.0
    %678 = vmatpush1.msra.mxu0 %v612
    %679 = vmatprep.subr.mxu0 0.0
    %680 = vmatpush1.msra.mxu0 %v613
    %681 = vmatprep.subr.mxu0 0.0
    %682 = vmatpush1.msra.mxu0 %v614
    %683 = vmatprep.subr.mxu0 0.0
    %684 = vmatpush1.msra.mxu0 %v615
    %685 = vmatprep.subr.mxu0 0.0
    %686 = vmatpush1.msra.mxu0 %v616
    %687 = vmatprep.subr.mxu0 0.0
    %688 = vmatpush1.msra.mxu0 %v617
    %689 = vmatprep.subr.mxu0 0.0
    %690 = vmatpush1.msra.mxu0 %v618
    %691 = vmatprep.mubr.f32.mxu0 %v572
    %692 = vmatmul.mubr.f32.gmra.mrb[0].mxu0 %v571
    %v693 = vpop.f32.mrb[0].mxu0
    %v694 = vadd.f32 %v619, %v693
    %v695 = vpop.f32.mrb[0].mxu0
    %696 = vmatprep.mubr.f32.mxu0 %v574
    %697 = vmatmul.mubr.f32.gmra.mrb[0].mxu0 %v573
    %v698 = vpop.f32.mrb[0].mxu0
    %v699 = vadd.f32 %v620, %v698
    %v700 = vpop.f32.mrb[0].mxu0
    %701 = vmatprep.mubr.f32.mxu0 %v576
    %702 = vmatmul.mubr.f32.gmra.mrb[0].mxu0 %v575
    %v703 = vpop.f32.mrb[0].mxu0
    %v704 = vadd.f32 %v621, %v703
    %v705 = vpop.f32.mrb[0].mxu0
    %706 = vmatprep.mubr.f32.mxu0 %v578
    %707 = vmatmul.mubr.f32.gmra.mrb[0].mxu0 %v577
    %v708 = vpop.f32.mrb[0].mxu0
    %v709 = vadd.f32 %v622, %v708
    %v710 = vpop.f32.mrb[0].mxu0
    %711 = vmatprep.mubr.f32.mxu0 %v580
    %712 = vmatmul.mubr.f32.gmra.mrb[0].mxu0 %v579
    %v713 = vpop.f32.mrb[0].mxu0
    %v714 = vadd.f32 %v623, %v713
    %v715 = vpop.f32.mrb[0].mxu0
    %716 = vmatprep.mubr.f32.mxu0 %v582
    %717 = vmatmul.mubr.f32.gmra.mrb[0].mxu0 %v581
    %v718 = vpop.f32.mrb[0].mxu0
    %v719 = vadd.f32 %v624, %v718
    %v720 = vpop.f32.mrb[0].mxu0
    %721 = vmatprep.mubr.f32.mxu0 %v584
    %722 = vmatmul.mubr.f32.gmra.mrb[0].mxu0 %v583
    %v723 = vpop.f32.mrb[0].mxu0
    %v724 = vadd.f32 %v625, %v723
    %v725 = vpop.f32.mrb[0].mxu0
    %726 = vmatprep.mubr.f32.mxu0 %v586
    %727 = vmatmul.mubr.f32.gmra.mrb[0].mxu0 %v585
    %v728 = vpop.f32.mrb[0].mxu0
    %v729 = vadd.f32 %v626, %v728
    %v730 = vpop.f32.mrb[0].mxu0
    %731 = vdwg.mxu0
    %v732 = vxor.u32 %v694, 2147483648
    %v733 = vxor.u32 %v699, 2147483648
    %v734 = vxor.u32 %v704, 2147483648
    %v735 = vxor.u32 %v709, 2147483648
    %v736 = vxor.u32 %v714, 2147483648
    %v737 = vxor.u32 %v719, 2147483648
    %v738 = vxor.u32 %v724, 2147483648
    %v739 = vxor.u32 %v729, 2147483648
    %v740 = vmul.f32 %v732, 1.442695
    %v741 = vpow.pop %v740
    %v742 = vmul.f32 %v733, 1.442695
    %v743 = vpow.pop %v742
    %v744 = vmul.f32 %v734, 1.442695
    %v745 = vpow.pop %v744
    %v746 = vmul.f32 %v735, 1.442695
    %v747 = vpow.pop %v746
    %v748 = vmul.f32 %v736, 1.442695
    %v749 = vpow.pop %v748
    %v750 = vmul.f32 %v737, 1.442695
    %v751 = vpow.pop %v750
    %v752 = vmul.f32 %v738, 1.442695
    %v753 = vpow.pop %v752
    %v754 = vmul.f32 %v739, 1.442695
    %v755 = vpow.pop %v754
    %v756 = vadd.f32 %v741, 1.0
    %v757 = vadd.f32 %v743, 1.0
    %v758 = vadd.f32 %v745, 1.0
    %v759 = vadd.f32 %v747, 1.0
    %v760 = vadd.f32 %v749, 1.0
    %v761 = vadd.f32 %v751, 1.0
    %v762 = vadd.f32 %v753, 1.0
    %v763 = vadd.f32 %v755, 1.0
    %v764 = vrcp.pop %v756
    %v765 = vmul.f32 1.0, %v764
    %v766 = vrcp.pop %v757
    %v767 = vmul.f32 1.0, %v766
    %v768 = vrcp.pop %v758
    %v769 = vmul.f32 1.0, %v768
    %v770 = vrcp.pop %v759
    %v771 = vmul.f32 1.0, %v770
    %v772 = vrcp.pop %v760
    %v773 = vmul.f32 1.0, %v772
    %v774 = vrcp.pop %v761
    %v775 = vmul.f32 1.0, %v774
    %v776 = vrcp.pop %v762
    %v777 = vmul.f32 1.0, %v776
    %v778 = vrcp.pop %v763
    %v779 = vmul.f32 1.0, %v778
    %788 = vrot.lane.b32.xlu0 %v694, 32
    %v789 = vpop.permute.xlu0 %788
    %790 = vrot.lane.b32.xlu0 %v699, 32
    %v791 = vpop.permute.xlu0 %790
    %792 = vrot.lane.b32.xlu0 %v704, 32
    %v793 = vpop.permute.xlu0 %792
    %794 = vrot.lane.b32.xlu0 %v709, 32
    %v795 = vpop.permute.xlu0 %794
    %796 = vrot.lane.b32.xlu0 %v714, 32
    %v797 = vpop.permute.xlu0 %796
    %798 = vrot.lane.b32.xlu0 %v719, 32
    %v799 = vpop.permute.xlu0 %798
    %800 = vrot.lane.b32.xlu0 %v724, 32
    %v801 = vpop.permute.xlu0 %800
    %802 = vrot.lane.b32.xlu0 %v729, 32
    %v803 = vpop.permute.xlu0 %802
    %v812 = vmul.f32 %v765, %v789
    %v813 = vmul.f32 %v767, %v791
    %v814 = vmul.f32 %v769, %v793
    %v815 = vmul.f32 %v771, %v795
    %v816 = vmul.f32 %v773, %v797
    %v817 = vmul.f32 %v775, %v799
    %v818 = vmul.f32 %v777, %v801
    %v819 = vmul.f32 %v779, %v803
    %828 = vrot.lane.b32.xlu0 %v812, 64
    %v829 = vpop.permute.xlu0 %828
    %830 = vrot.lane.b32.xlu0 %v813, 64
    %v831 = vpop.permute.xlu0 %830
    %832 = vrot.lane.b32.xlu0 %v814, 64
    %v833 = vpop.permute.xlu0 %832
    %834 = vrot.lane.b32.xlu0 %v815, 64
    %v835 = vpop.permute.xlu0 %834
    %836 = vrot.lane.b32.xlu0 %v816, 64
    %v837 = vpop.permute.xlu0 %836
    %838 = vrot.lane.b32.xlu0 %v817, 64
    %v839 = vpop.permute.xlu0 %838
    %840 = vrot.lane.b32.xlu0 %v818, 64
    %v841 = vpop.permute.xlu0 %840
    %842 = vrot.lane.b32.xlu0 %v819, 64
    %v843 = vpop.permute.xlu0 %842
    %v852 = vadd.f32 %v694, %v829
    %v853 = vadd.f32 %v699, %v831
    %v854 = vadd.f32 %v704, %v833
    %v855 = vadd.f32 %v709, %v835
    %v856 = vadd.f32 %v714, %v837
    %v857 = vadd.f32 %v719, %v839
    %v858 = vadd.f32 %v724, %v841
    %v859 = vadd.f32 %v729, %v843
    %v860 = vtanh.pop %v852
    %v861 = vtanh.pop %v853
    %v862 = vtanh.pop %v854
    %v863 = vtanh.pop %v855
    %v864 = vtanh.pop %v856
    %v865 = vtanh.pop %v857
    %v866 = vtanh.pop %v858
    %v867 = vtanh.pop %v859
    %v868 = vsub.f32 1.0, %v765
    %v869 = vsub.f32 1.0, %v767
    %v870 = vsub.f32 1.0, %v769
    %v871 = vsub.f32 1.0, %v771
    %v872 = vsub.f32 1.0, %v773
    %v873 = vsub.f32 1.0, %v775
    %v874 = vsub.f32 1.0, %v777
    %v875 = vsub.f32 1.0, %v779
    %884 = vrot.lane.b32.xlu0 %v860, 96
    %v885 = vpop.permute.xlu0 %884
    %886 = vrot.lane.b32.xlu0 %v861, 96
    %v887 = vpop.permute.xlu0 %886
    %888 = vrot.lane.b32.xlu0 %v862, 96
    %v889 = vpop.permute.xlu0 %888
    %890 = vrot.lane.b32.xlu0 %v863, 96
    %v891 = vpop.permute.xlu0 %890
    %892 = vrot.lane.b32.xlu0 %v864, 96
    %v893 = vpop.permute.xlu0 %892
    %894 = vrot.lane.b32.xlu0 %v865, 96
    %v895 = vpop.permute.xlu0 %894
    %896 = vrot.lane.b32.xlu0 %v866, 96
    %v897 = vpop.permute.xlu0 %896
    %898 = vrot.lane.b32.xlu0 %v867, 96
    %v899 = vpop.permute.xlu0 %898
    %v908 = vmul.f32 %v868, %v885
    %v909 = vmul.f32 %v869, %v887
    %v910 = vmul.f32 %v870, %v889
    %v911 = vmul.f32 %v871, %v891
    %v912 = vmul.f32 %v872, %v893
    %v913 = vmul.f32 %v873, %v895
    %v914 = vmul.f32 %v874, %v897
    %v915 = vmul.f32 %v875, %v899
    %920 = vrot.lane.b32.xlu0 %v12, 32
    %v921 = vpop.permute.xlu0 %920
    %922 = vrot.lane.b32.xlu0 %v13, 32
    %v923 = vpop.permute.xlu0 %922
    %924 = vrot.lane.b32.xlu0 %v14, 32
    %v925 = vpop.permute.xlu0 %924
    %926 = vrot.lane.b32.xlu0 %v15, 32
    %v927 = vpop.permute.xlu0 %926
    %v932 = vmul.f32 %v765, %v921
    %v933 = vmul.f32 %v767, %v923
    %v934 = vmul.f32 %v769, %v925
    %v935 = vmul.f32 %v771, %v927
    %v936 = vmul.f32 %v773, %v39
    %v937 = vmul.f32 %v775, %v41
    %v938 = vmul.f32 %v777, %v43
    %v939 = vmul.f32 %v779, %v45
    %v940 = vadd.f32 %v908, %v932
    %v941 = vadd.f32 %v909, %v933
    %v942 = vadd.f32 %v910, %v934
    %v943 = vadd.f32 %v911, %v935
    %v944 = vadd.f32 %v912, %v936
    %v945 = vadd.f32 %v913, %v937
    %v946 = vadd.f32 %v914, %v938
    %v947 = vadd.f32 %v915, %v939
    %952 = vrot.lane.b32.xlu0 %v940, 96
    %v953 = vpop.permute.xlu0 %952
    %954 = vrot.lane.b32.xlu0 %v941, 96
    %v955 = vpop.permute.xlu0 %954
    %956 = vrot.lane.b32.xlu0 %v942, 96
    %v957 = vpop.permute.xlu0 %956
    %958 = vrot.lane.b32.xlu0 %v943, 96
    %v959 = vpop.permute.xlu0 %958
    %964 = vst.msk [vmem:[#allocation2] sm:$0xff] %vm29, %v953
    %965 = vst.msk [vmem:[#allocation2 + $0x8] sm:$0xff] %vm29, %v955
    %966 = vst.msk [vmem:[#allocation2 + $0x10] sm:$0xff] %vm29, %v957
    %967 = vst.msk [vmem:[#allocation2 + $0x18] sm:$0xff] %vm29, %v959
    %968 = vst.msk [vmem:[#allocation2 + $0x20] sm:$0xff] %vm50, %v944
    %969 = vst.msk [vmem:[#allocation2 + $0x28] sm:$0xff] %vm50, %v945
    %970 = vst.msk [vmem:[#allocation2 + $0x30] sm:$0xff] %vm50, %v946
    %971 = vst.msk [vmem:[#allocation2 + $0x38] sm:$0xff] %vm50, %v947
    %v972 = vld [vmem:[#allocation2] sm:$0xff]
    %v973 = vld [vmem:[#allocation2 + $0x8] sm:$0xff]
    %v974 = vld [vmem:[#allocation2 + $0x10] sm:$0xff]
    %v975 = vld [vmem:[#allocation2 + $0x18] sm:$0xff]
    %v976 = vld [vmem:[#allocation2 + $0x20] sm:$0xff]
    %v977 = vld [vmem:[#allocation2 + $0x28] sm:$0xff]
    %v978 = vld [vmem:[#allocation2 + $0x30] sm:$0xff]
    %v979 = vld [vmem:[#allocation2 + $0x38] sm:$0xff]
    %v980 = vld [vmem:[%s1] sm:$0xff]
    %v981 = vld [vmem:[%s1 + $0x8] sm:$0xff]
    %v982 = vld [vmem:[%s1 + $0x10] sm:$0xff]
    %v983 = vld [vmem:[%s1 + $0x18] sm:$0xff]
    %v984 = vld [vmem:[%s1 + $0x20] sm:$0xff]
    %v985 = vld [vmem:[%s1 + $0x28] sm:$0xff]
    %v986 = vld [vmem:[%s1 + $0x30] sm:$0xff]
    %v987 = vld [vmem:[%s1 + $0x38] sm:$0xff]
    %v989 = vsel %vm20, %v972, 0
    %v992 = vsel %vm20, %v973, 0
    %v995 = vsel %vm20, %v974, 0
    %v998 = vsel %vm20, %v975, 0
    %v1001 = vsel %vm20, %v976, 0
    %v1004 = vsel %vm20, %v977, 0
    %v1007 = vsel %vm20, %v978, 0
    %v1010 = vsel %vm20, %v979, 0
    %1012 = vmatprep.subr.mxu0 0.0
    %1013 = vmatpush1.msra.mxu0 %v980
    %1014 = vmatprep.subr.mxu0 0.0
    %1015 = vmatpush1.msra.mxu0 %v981
    %1016 = vmatprep.subr.mxu0 0.0
    %1017 = vmatpush1.msra.mxu0 %v982
    %1018 = vmatprep.subr.mxu0 0.0
    %1019 = vmatpush1.msra.mxu0 %v983
    %1020 = vmatprep.subr.mxu0 0.0
    %1021 = vmatpush1.msra.mxu0 %v984
    %1022 = vmatprep.subr.mxu0 0.0
    %1023 = vmatpush1.msra.mxu0 %v985
    %1024 = vmatprep.subr.mxu0 0.0
    %1025 = vmatpush1.msra.mxu0 %v986
    %1026 = vmatprep.subr.mxu0 0.0
    %1027 = vmatpush1.msra.mxu0 %v987
    %1028 = vmatprep.subr.mxu0 0.0
    %1029 = vmatpush1.msra.mxu0 0.0
    %1030 = vmatprep.subr.mxu0 0.0
    %1031 = vmatpush1.msra.mxu0 0.0
    %1032 = vmatprep.subr.mxu0 0.0
    %1033 = vmatpush1.msra.mxu0 0.0
    %1034 = vmatprep.subr.mxu0 0.0
    %1035 = vmatpush1.msra.mxu0 0.0
    %1036 = vmatprep.subr.mxu0 0.0
    %1037 = vmatpush1.msra.mxu0 0.0
    %1038 = vmatprep.subr.mxu0 0.0
    %1039 = vmatpush1.msra.mxu0 0.0
    %1040 = vmatprep.subr.mxu0 0.0
    %1041 = vmatpush1.msra.mxu0 0.0
    %1042 = vmatprep.subr.mxu0 0.0
    %1043 = vmatpush1.msra.mxu0 0.0
    %1044 = vmatprep.subr.mxu0 0.0
    %1045 = vmatpush1.msra.mxu0 0.0
    %1046 = vmatprep.subr.mxu0 0.0
    %1047 = vmatpush1.msra.mxu0 0.0
    %1048 = vmatprep.subr.mxu0 0.0
    %1049 = vmatpush1.msra.mxu0 0.0
    %1050 = vmatprep.subr.mxu0 0.0
    %1051 = vmatpush1.msra.mxu0 0.0
    %1052 = vmatprep.subr.mxu0 0.0
    %1053 = vmatpush1.msra.mxu0 0.0
    %1054 = vmatprep.subr.mxu0 0.0
    %1055 = vmatpush1.msra.mxu0 0.0
    %1056 = vmatprep.subr.mxu0 0.0
    %1057 = vmatpush1.msra.mxu0 0.0
    %1058 = vmatprep.subr.mxu0 0.0
    %1059 = vmatpush1.msra.mxu0 0.0
    %1060 = vmatprep.subr.mxu0 0.0
    %1061 = vmatpush1.msra.mxu0 0.0
    %1062 = vmatprep.subr.mxu0 0.0
    %1063 = vmatpush1.msra.mxu0 0.0
    %1064 = vmatprep.subr.mxu0 0.0
    %1065 = vmatpush1.msra.mxu0 0.0
    %1066 = vmatprep.subr.mxu0 0.0
    %1067 = vmatpush1.msra.mxu0 0.0
    %1068 = vmatprep.subr.mxu0 0.0
    %1069 = vmatpush1.msra.mxu0 0.0
    %1070 = vmatprep.subr.mxu0 0.0
    %1071 = vmatpush1.msra.mxu0 0.0
    %1072 = vmatprep.subr.mxu0 0.0
    %1073 = vmatpush1.msra.mxu0 0.0
    %1074 = vmatprep.subr.mxu0 0.0
    %1075 = vmatpush1.msra.mxu0 0.0
    %1076 = vmatprep.mubr.f32.mxu0 0.0
    %1077 = vmatmul.mubr.f32.gmra.mrb[0].mxu0 %v989
    %v1078 = vpop.f32.mrb[0].mxu0
    %v1079 = vadd.f32 0.0, %v1078
    %v1080 = vpop.f32.mrb[0].mxu0
    %1081 = vmatprep.mubr.f32.mxu0 0.0
    %1082 = vmatmul.mubr.f32.gmra.mrb[0].mxu0 %v992
    %v1083 = vpop.f32.mrb[0].mxu0
    %v1084 = vadd.f32 0.0, %v1083
    %v1085 = vpop.f32.mrb[0].mxu0
    %1086 = vmatprep.mubr.f32.mxu0 0.0
    %1087 = vmatmul.mubr.f32.gmra.mrb[0].mxu0 %v995
    %v1088 = vpop.f32.mrb[0].mxu0
    %v1089 = vadd.f32 0.0, %v1088
    %v1090 = vpop.f32.mrb[0].mxu0
    %1091 = vmatprep.mubr.f32.mxu0 0.0
    %1092 = vmatmul.mubr.f32.gmra.mrb[0].mxu0 %v998
    %v1093 = vpop.f32.mrb[0].mxu0
    %v1094 = vadd.f32 0.0, %v1093
    %v1095 = vpop.f32.mrb[0].mxu0
    %1096 = vmatprep.mubr.f32.mxu0 0.0
    %1097 = vmatmul.mubr.f32.gmra.mrb[0].mxu0 %v1001
    %v1098 = vpop.f32.mrb[0].mxu0
    %v1099 = vadd.f32 0.0, %v1098
    %v1100 = vpop.f32.mrb[0].mxu0
    %1101 = vmatprep.mubr.f32.mxu0 0.0
    %1102 = vmatmul.mubr.f32.gmra.mrb[0].mxu0 %v1004
    %v1103 = vpop.f32.mrb[0].mxu0
    %v1104 = vadd.f32 0.0, %v1103
    %v1105 = vpop.f32.mrb[0].mxu0
    %1106 = vmatprep.mubr.f32.mxu0 0.0
    %1107 = vmatmul.mubr.f32.gmra.mrb[0].mxu0 %v1007
    %v1108 = vpop.f32.mrb[0].mxu0
    %v1109 = vadd.f32 0.0, %v1108
    %v1110 = vpop.f32.mrb[0].mxu0
    %1111 = vmatprep.mubr.f32.mxu0 0.0
    %1112 = vmatmul.mubr.f32.gmra.mrb[0].mxu0 %v1010
    %v1113 = vpop.f32.mrb[0].mxu0
    %v1114 = vadd.f32 0.0, %v1113
    %v1115 = vpop.f32.mrb[0].mxu0
    %1116 = vdwg.mxu0
    %1117 = vst [vmem:[#allocation3] sm:$0xff] %v1079
    %1118 = vst [vmem:[#allocation3 + $0x8] sm:$0xff] %v1084
    %1119 = vst [vmem:[#allocation3 + $0x10] sm:$0xff] %v1089
    %1120 = vst [vmem:[#allocation3 + $0x18] sm:$0xff] %v1094
    %1121 = vst [vmem:[#allocation3 + $0x20] sm:$0xff] %v1099
    %1122 = vst [vmem:[#allocation3 + $0x28] sm:$0xff] %v1104
    %1123 = vst [vmem:[#allocation3 + $0x30] sm:$0xff] %v1109
    %1124 = vst [vmem:[#allocation3 + $0x38] sm:$0xff] %v1114
    %v1125 = vld [vmem:[%s1 + $0x40] sm:$0xff]
    %v1126 = vld [vmem:[%s1 + $0x48] sm:$0xff]
    %v1127 = vld [vmem:[%s1 + $0x50] sm:$0xff]
    %v1128 = vld [vmem:[%s1 + $0x58] sm:$0xff]
    %v1129 = vld [vmem:[%s1 + $0x60] sm:$0xff]
    %v1130 = vld [vmem:[%s1 + $0x68] sm:$0xff]
    %v1131 = vld [vmem:[%s1 + $0x70] sm:$0xff]
    %v1132 = vld [vmem:[%s1 + $0x78] sm:$0xff]
    %1133 = vmatprep.subr.mxu0 0.0
    %1134 = vmatpush1.msra.mxu0 %v1125
    %1135 = vmatprep.subr.mxu0 0.0
    %1136 = vmatpush1.msra.mxu0 %v1126
    %1137 = vmatprep.subr.mxu0 0.0
    %1138 = vmatpush1.msra.mxu0 %v1127
    %1139 = vmatprep.subr.mxu0 0.0
    %1140 = vmatpush1.msra.mxu0 %v1128
    %1141 = vmatprep.subr.mxu0 0.0
    %1142 = vmatpush1.msra.mxu0 %v1129
    %1143 = vmatprep.subr.mxu0 0.0
    %1144 = vmatpush1.msra.mxu0 %v1130
    %1145 = vmatprep.subr.mxu0 0.0
    %1146 = vmatpush1.msra.mxu0 %v1131
    %1147 = vmatprep.subr.mxu0 0.0
    %1148 = vmatpush1.msra.mxu0 %v1132
    %1149 = vmatprep.subr.mxu0 0.0
    %1150 = vmatpush1.msra.mxu0 0.0
    %1151 = vmatprep.subr.mxu0 0.0
    %1152 = vmatpush1.msra.mxu0 0.0
    %1153 = vmatprep.subr.mxu0 0.0
    %1154 = vmatpush1.msra.mxu0 0.0
    %1155 = vmatprep.subr.mxu0 0.0
    %1156 = vmatpush1.msra.mxu0 0.0
    %1157 = vmatprep.subr.mxu0 0.0
    %1158 = vmatpush1.msra.mxu0 0.0
    %1159 = vmatprep.subr.mxu0 0.0
    %1160 = vmatpush1.msra.mxu0 0.0
    %1161 = vmatprep.subr.mxu0 0.0
    %1162 = vmatpush1.msra.mxu0 0.0
    %1163 = vmatprep.subr.mxu0 0.0
    %1164 = vmatpush1.msra.mxu0 0.0
    %1165 = vmatprep.subr.mxu0 0.0
    %1166 = vmatpush1.msra.mxu0 0.0
    %1167 = vmatprep.subr.mxu0 0.0
    %1168 = vmatpush1.msra.mxu0 0.0
    %1169 = vmatprep.subr.mxu0 0.0
    %1170 = vmatpush1.msra.mxu0 0.0
    %1171 = vmatprep.subr.mxu0 0.0
    %1172 = vmatpush1.msra.mxu0 0.0
    %1173 = vmatprep.subr.mxu0 0.0
    %1174 = vmatpush1.msra.mxu0 0.0
    %1175 = vmatprep.subr.mxu0 0.0
    %1176 = vmatpush1.msra.mxu0 0.0
    %1177 = vmatprep.subr.mxu0 0.0
    %1178 = vmatpush1.msra.mxu0 0.0
    %1179 = vmatprep.subr.mxu0 0.0
    %1180 = vmatpush1.msra.mxu0 0.0
    %1181 = vmatprep.subr.mxu0 0.0
    %1182 = vmatpush1.msra.mxu0 0.0
    %1183 = vmatprep.subr.mxu0 0.0
    %1184 = vmatpush1.msra.mxu0 0.0
    %1185 = vmatprep.subr.mxu0 0.0
    %1186 = vmatpush1.msra.mxu0 0.0
    %1187 = vmatprep.subr.mxu0 0.0
    %1188 = vmatpush1.msra.mxu0 0.0
    %1189 = vmatprep.subr.mxu0 0.0
    %1190 = vmatpush1.msra.mxu0 0.0
    %1191 = vmatprep.subr.mxu0 0.0
    %1192 = vmatpush1.msra.mxu0 0.0
    %1193 = vmatprep.subr.mxu0 0.0
    %1194 = vmatpush1.msra.mxu0 0.0
    %1195 = vmatprep.subr.mxu0 0.0
    %1196 = vmatpush1.msra.mxu0 0.0
    %1197 = vmatprep.mubr.f32.mxu0 0.0
    %1198 = vmatmul.mubr.f32.gmra.mrb[0].mxu0 %v989
    %v1199 = vpop.f32.mrb[0].mxu0
    %v1200 = vadd.f32 0.0, %v1199
    %v1201 = vpop.f32.mrb[0].mxu0
    %1202 = vmatprep.mubr.f32.mxu0 0.0
    %1203 = vmatmul.mubr.f32.gmra.mrb[0].mxu0 %v992
    %v1204 = vpop.f32.mrb[0].mxu0
    %v1205 = vadd.f32 0.0, %v1204
    %v1206 = vpop.f32.mrb[0].mxu0
    %1207 = vmatprep.mubr.f32.mxu0 0.0
    %1208 = vmatmul.mubr.f32.gmra.mrb[0].mxu0 %v995
    %v1209 = vpop.f32.mrb[0].mxu0
    %v1210 = vadd.f32 0.0, %v1209
    %v1211 = vpop.f32.mrb[0].mxu0
    %1212 = vmatprep.mubr.f32.mxu0 0.0
    %1213 = vmatmul.mubr.f32.gmra.mrb[0].mxu0 %v998
    %v1214 = vpop.f32.mrb[0].mxu0
    %v1215 = vadd.f32 0.0, %v1214
    %v1216 = vpop.f32.mrb[0].mxu0
    %1217 = vmatprep.mubr.f32.mxu0 0.0
    %1218 = vmatmul.mubr.f32.gmra.mrb[0].mxu0 %v1001
    %v1219 = vpop.f32.mrb[0].mxu0
    %v1220 = vadd.f32 0.0, %v1219
    %v1221 = vpop.f32.mrb[0].mxu0
    %1222 = vmatprep.mubr.f32.mxu0 0.0
    %1223 = vmatmul.mubr.f32.gmra.mrb[0].mxu0 %v1004
    %v1224 = vpop.f32.mrb[0].mxu0
    %v1225 = vadd.f32 0.0, %v1224
    %v1226 = vpop.f32.mrb[0].mxu0
    %1227 = vmatprep.mubr.f32.mxu0 0.0
    %1228 = vmatmul.mubr.f32.gmra.mrb[0].mxu0 %v1007
    %v1229 = vpop.f32.mrb[0].mxu0
    %v1230 = vadd.f32 0.0, %v1229
    %v1231 = vpop.f32.mrb[0].mxu0
    %1232 = vmatprep.mubr.f32.mxu0 0.0
    %1233 = vmatmul.mubr.f32.gmra.mrb[0].mxu0 %v1010
    %v1234 = vpop.f32.mrb[0].mxu0
    %v1235 = vadd.f32 0.0, %v1234
    %v1236 = vpop.f32.mrb[0].mxu0
    %1237 = vdwg.mxu0
    %1238 = vst [vmem:[#allocation3 + $0x40] sm:$0xff] %v1200
    %1239 = vst [vmem:[#allocation3 + $0x48] sm:$0xff] %v1205
    %1240 = vst [vmem:[#allocation3 + $0x50] sm:$0xff] %v1210
    %1241 = vst [vmem:[#allocation3 + $0x58] sm:$0xff] %v1215
    %1242 = vst [vmem:[#allocation3 + $0x60] sm:$0xff] %v1220
    %1243 = vst [vmem:[#allocation3 + $0x68] sm:$0xff] %v1225
    %1244 = vst [vmem:[#allocation3 + $0x70] sm:$0xff] %v1230
    %1245 = vst [vmem:[#allocation3 + $0x78] sm:$0xff] %v1235
    %v1246 = vld [vmem:[%s1 + $0x80] sm:$0xff]
    %v1247 = vld [vmem:[%s1 + $0x88] sm:$0xff]
    %v1248 = vld [vmem:[%s1 + $0x90] sm:$0xff]
    %v1249 = vld [vmem:[%s1 + $0x98] sm:$0xff]
    %v1250 = vld [vmem:[%s1 + $0xa0] sm:$0xff]
    %v1251 = vld [vmem:[%s1 + $0xa8] sm:$0xff]
    %v1252 = vld [vmem:[%s1 + $0xb0] sm:$0xff]
    %v1253 = vld [vmem:[%s1 + $0xb8] sm:$0xff]
    %1254 = vmatprep.subr.mxu0 0.0
    %1255 = vmatpush1.msra.mxu0 %v1246
    %1256 = vmatprep.subr.mxu0 0.0
    %1257 = vmatpush1.msra.mxu0 %v1247
    %1258 = vmatprep.subr.mxu0 0.0
    %1259 = vmatpush1.msra.mxu0 %v1248
    %1260 = vmatprep.subr.mxu0 0.0
    %1261 = vmatpush1.msra.mxu0 %v1249
    %1262 = vmatprep.subr.mxu0 0.0
    %1263 = vmatpush1.msra.mxu0 %v1250
    %1264 = vmatprep.subr.mxu0 0.0
    %1265 = vmatpush1.msra.mxu0 %v1251
    %1266 = vmatprep.subr.mxu0 0.0
    %1267 = vmatpush1.msra.mxu0 %v1252
    %1268 = vmatprep.subr.mxu0 0.0
    %1269 = vmatpush1.msra.mxu0 %v1253
    %1270 = vmatprep.subr.mxu0 0.0
    %1271 = vmatpush1.msra.mxu0 0.0
    %1272 = vmatprep.subr.mxu0 0.0
    %1273 = vmatpush1.msra.mxu0 0.0
    %1274 = vmatprep.subr.mxu0 0.0
    %1275 = vmatpush1.msra.mxu0 0.0
    %1276 = vmatprep.subr.mxu0 0.0
    %1277 = vmatpush1.msra.mxu0 0.0
    %1278 = vmatprep.subr.mxu0 0.0
    %1279 = vmatpush1.msra.mxu0 0.0
    %1280 = vmatprep.subr.mxu0 0.0
    %1281 = vmatpush1.msra.mxu0 0.0
    %1282 = vmatprep.subr.mxu0 0.0
    %1283 = vmatpush1.msra.mxu0 0.0
    %1284 = vmatprep.subr.mxu0 0.0
    %1285 = vmatpush1.msra.mxu0 0.0
    %1286 = vmatprep.subr.mxu0 0.0
    %1287 = vmatpush1.msra.mxu0 0.0
    %1288 = vmatprep.subr.mxu0 0.0
    %1289 = vmatpush1.msra.mxu0 0.0
    %1290 = vmatprep.subr.mxu0 0.0
    %1291 = vmatpush1.msra.mxu0 0.0
    %1292 = vmatprep.subr.mxu0 0.0
    %1293 = vmatpush1.msra.mxu0 0.0
    %1294 = vmatprep.subr.mxu0 0.0
    %1295 = vmatpush1.msra.mxu0 0.0
    %1296 = vmatprep.subr.mxu0 0.0
    %1297 = vmatpush1.msra.mxu0 0.0
    %1298 = vmatprep.subr.mxu0 0.0
    %1299 = vmatpush1.msra.mxu0 0.0
    %1300 = vmatprep.subr.mxu0 0.0
    %1301 = vmatpush1.msra.mxu0 0.0
    %1302 = vmatprep.subr.mxu0 0.0
    %1303 = vmatpush1.msra.mxu0 0.0
    %1304 = vmatprep.subr.mxu0 0.0
    %1305 = vmatpush1.msra.mxu0 0.0
    %1306 = vmatprep.subr.mxu0 0.0
    %1307 = vmatpush1.msra.mxu0 0.0
    %1308 = vmatprep.subr.mxu0 0.0
    %1309 = vmatpush1.msra.mxu0 0.0
    %1310 = vmatprep.subr.mxu0 0.0
    %1311 = vmatpush1.msra.mxu0 0.0
    %1312 = vmatprep.subr.mxu0 0.0
    %1313 = vmatpush1.msra.mxu0 0.0
    %1314 = vmatprep.subr.mxu0 0.0
    %1315 = vmatpush1.msra.mxu0 0.0
    %1316 = vmatprep.subr.mxu0 0.0
    %1317 = vmatpush1.msra.mxu0 0.0
    %1318 = vmatprep.mubr.f32.mxu0 0.0
    %1319 = vmatmul.mubr.f32.gmra.mrb[0].mxu0 %v989
    %v1320 = vpop.f32.mrb[0].mxu0
    %v1321 = vadd.f32 0.0, %v1320
    %v1322 = vpop.f32.mrb[0].mxu0
    %1323 = vmatprep.mubr.f32.mxu0 0.0
    %1324 = vmatmul.mubr.f32.gmra.mrb[0].mxu0 %v992
    %v1325 = vpop.f32.mrb[0].mxu0
    %v1326 = vadd.f32 0.0, %v1325
    %v1327 = vpop.f32.mrb[0].mxu0
    %1328 = vmatprep.mubr.f32.mxu0 0.0
    %1329 = vmatmul.mubr.f32.gmra.mrb[0].mxu0 %v995
    %v1330 = vpop.f32.mrb[0].mxu0
    %v1331 = vadd.f32 0.0, %v1330
    %v1332 = vpop.f32.mrb[0].mxu0
    %1333 = vmatprep.mubr.f32.mxu0 0.0
    %1334 = vmatmul.mubr.f32.gmra.mrb[0].mxu0 %v998
    %v1335 = vpop.f32.mrb[0].mxu0
    %v1336 = vadd.f32 0.0, %v1335
    %v1337 = vpop.f32.mrb[0].mxu0
    %1338 = vmatprep.mubr.f32.mxu0 0.0
    %1339 = vmatmul.mubr.f32.gmra.mrb[0].mxu0 %v1001
    %v1340 = vpop.f32.mrb[0].mxu0
    %v1341 = vadd.f32 0.0, %v1340
    %v1342 = vpop.f32.mrb[0].mxu0
    %1343 = vmatprep.mubr.f32.mxu0 0.0
    %1344 = vmatmul.mubr.f32.gmra.mrb[0].mxu0 %v1004
    %v1345 = vpop.f32.mrb[0].mxu0
    %v1346 = vadd.f32 0.0, %v1345
    %v1347 = vpop.f32.mrb[0].mxu0
    %1348 = vmatprep.mubr.f32.mxu0 0.0
    %1349 = vmatmul.mubr.f32.gmra.mrb[0].mxu0 %v1007
    %v1350 = vpop.f32.mrb[0].mxu0
    %v1351 = vadd.f32 0.0, %v1350
    %v1352 = vpop.f32.mrb[0].mxu0
    %1353 = vmatprep.mubr.f32.mxu0 0.0
    %1354 = vmatmul.mubr.f32.gmra.mrb[0].mxu0 %v1010
    %v1355 = vpop.f32.mrb[0].mxu0
    %v1356 = vadd.f32 0.0, %v1355
    %v1357 = vpop.f32.mrb[0].mxu0
    %1358 = vdwg.mxu0
    %1359 = vst [vmem:[#allocation3 + $0x80] sm:$0xff] %v1321
    %1360 = vst [vmem:[#allocation3 + $0x88] sm:$0xff] %v1326
    %1361 = vst [vmem:[#allocation3 + $0x90] sm:$0xff] %v1331
    %1362 = vst [vmem:[#allocation3 + $0x98] sm:$0xff] %v1336
    %1363 = vst [vmem:[#allocation3 + $0xa0] sm:$0xff] %v1341
    %1364 = vst [vmem:[#allocation3 + $0xa8] sm:$0xff] %v1346
    %1365 = vst [vmem:[#allocation3 + $0xb0] sm:$0xff] %v1351
    %1366 = vst [vmem:[#allocation3 + $0xb8] sm:$0xff] %v1356
    %v1367 = vld [vmem:[%s1 + $0xc0] sm:$0xff]
    %v1368 = vld [vmem:[%s1 + $0xc8] sm:$0xff]
    %v1369 = vld [vmem:[%s1 + $0xd0] sm:$0xff]
    %v1370 = vld [vmem:[%s1 + $0xd8] sm:$0xff]
    %v1371 = vld [vmem:[%s1 + $0xe0] sm:$0xff]
    %v1372 = vld [vmem:[%s1 + $0xe8] sm:$0xff]
    %v1373 = vld [vmem:[%s1 + $0xf0] sm:$0xff]
    %v1374 = vld [vmem:[%s1 + $0xf8] sm:$0xff]
    %1375 = vmatprep.subr.mxu0 0.0
    %1376 = vmatpush1.msra.mxu0 %v1367
    %1377 = vmatprep.subr.mxu0 0.0
    %1378 = vmatpush1.msra.mxu0 %v1368
    %1379 = vmatprep.subr.mxu0 0.0
    %1380 = vmatpush1.msra.mxu0 %v1369
    %1381 = vmatprep.subr.mxu0 0.0
    %1382 = vmatpush1.msra.mxu0 %v1370
    %1383 = vmatprep.subr.mxu0 0.0
    %1384 = vmatpush1.msra.mxu0 %v1371
    %1385 = vmatprep.subr.mxu0 0.0
    %1386 = vmatpush1.msra.mxu0 %v1372
    %1387 = vmatprep.subr.mxu0 0.0
    %1388 = vmatpush1.msra.mxu0 %v1373
    %1389 = vmatprep.subr.mxu0 0.0
    %1390 = vmatpush1.msra.mxu0 %v1374
    %1391 = vmatprep.subr.mxu0 0.0
    %1392 = vmatpush1.msra.mxu0 0.0
    %1393 = vmatprep.subr.mxu0 0.0
    %1394 = vmatpush1.msra.mxu0 0.0
    %1395 = vmatprep.subr.mxu0 0.0
    %1396 = vmatpush1.msra.mxu0 0.0
    %1397 = vmatprep.subr.mxu0 0.0
    %1398 = vmatpush1.msra.mxu0 0.0
    %1399 = vmatprep.subr.mxu0 0.0
    %1400 = vmatpush1.msra.mxu0 0.0
    %1401 = vmatprep.subr.mxu0 0.0
    %1402 = vmatpush1.msra.mxu0 0.0
    %1403 = vmatprep.subr.mxu0 0.0
    %1404 = vmatpush1.msra.mxu0 0.0
    %1405 = vmatprep.subr.mxu0 0.0
    %1406 = vmatpush1.msra.mxu0 0.0
    %1407 = vmatprep.subr.mxu0 0.0
    %1408 = vmatpush1.msra.mxu0 0.0
    %1409 = vmatprep.subr.mxu0 0.0
    %1410 = vmatpush1.msra.mxu0 0.0
    %1411 = vmatprep.subr.mxu0 0.0
    %1412 = vmatpush1.msra.mxu0 0.0
    %1413 = vmatprep.subr.mxu0 0.0
    %1414 = vmatpush1.msra.mxu0 0.0
    %1415 = vmatprep.subr.mxu0 0.0
    %1416 = vmatpush1.msra.mxu0 0.0
    %1417 = vmatprep.subr.mxu0 0.0
    %1418 = vmatpush1.msra.mxu0 0.0
    %1419 = vmatprep.subr.mxu0 0.0
    %1420 = vmatpush1.msra.mxu0 0.0
    %1421 = vmatprep.subr.mxu0 0.0
    %1422 = vmatpush1.msra.mxu0 0.0
    %1423 = vmatprep.subr.mxu0 0.0
    %1424 = vmatpush1.msra.mxu0 0.0
    %1425 = vmatprep.subr.mxu0 0.0
    %1426 = vmatpush1.msra.mxu0 0.0
    %1427 = vmatprep.subr.mxu0 0.0
    %1428 = vmatpush1.msra.mxu0 0.0
    %1429 = vmatprep.subr.mxu0 0.0
    %1430 = vmatpush1.msra.mxu0 0.0
    %1431 = vmatprep.subr.mxu0 0.0
    %1432 = vmatpush1.msra.mxu0 0.0
    %1433 = vmatprep.subr.mxu0 0.0
    %1434 = vmatpush1.msra.mxu0 0.0
    %1435 = vmatprep.subr.mxu0 0.0
    %1436 = vmatpush1.msra.mxu0 0.0
    %1437 = vmatprep.subr.mxu0 0.0
    %1438 = vmatpush1.msra.mxu0 0.0
    %1439 = vmatprep.mubr.f32.mxu0 0.0
    %1440 = vmatmul.mubr.f32.gmra.mrb[0].mxu0 %v989
    %v1441 = vpop.f32.mrb[0].mxu0
    %v1442 = vadd.f32 0.0, %v1441
    %v1443 = vpop.f32.mrb[0].mxu0
    %1444 = vmatprep.mubr.f32.mxu0 0.0
    %1445 = vmatmul.mubr.f32.gmra.mrb[0].mxu0 %v992
    %v1446 = vpop.f32.mrb[0].mxu0
    %v1447 = vadd.f32 0.0, %v1446
    %v1448 = vpop.f32.mrb[0].mxu0
    %1449 = vmatprep.mubr.f32.mxu0 0.0
    %1450 = vmatmul.mubr.f32.gmra.mrb[0].mxu0 %v995
    %v1451 = vpop.f32.mrb[0].mxu0
    %v1452 = vadd.f32 0.0, %v1451
    %v1453 = vpop.f32.mrb[0].mxu0
    %1454 = vmatprep.mubr.f32.mxu0 0.0
    %1455 = vmatmul.mubr.f32.gmra.mrb[0].mxu0 %v998
    %v1456 = vpop.f32.mrb[0].mxu0
    %v1457 = vadd.f32 0.0, %v1456
    %v1458 = vpop.f32.mrb[0].mxu0
    %1459 = vmatprep.mubr.f32.mxu0 0.0
    %1460 = vmatmul.mubr.f32.gmra.mrb[0].mxu0 %v1001
    %v1461 = vpop.f32.mrb[0].mxu0
    %v1462 = vadd.f32 0.0, %v1461
    %v1463 = vpop.f32.mrb[0].mxu0
    %1464 = vmatprep.mubr.f32.mxu0 0.0
    %1465 = vmatmul.mubr.f32.gmra.mrb[0].mxu0 %v1004
    %v1466 = vpop.f32.mrb[0].mxu0
    %v1467 = vadd.f32 0.0, %v1466
    %v1468 = vpop.f32.mrb[0].mxu0
    %1469 = vmatprep.mubr.f32.mxu0 0.0
    %1470 = vmatmul.mubr.f32.gmra.mrb[0].mxu0 %v1007
    %v1471 = vpop.f32.mrb[0].mxu0
    %v1472 = vadd.f32 0.0, %v1471
    %v1473 = vpop.f32.mrb[0].mxu0
    %1474 = vmatprep.mubr.f32.mxu0 0.0
    %1475 = vmatmul.mubr.f32.gmra.mrb[0].mxu0 %v1010
    %v1476 = vpop.f32.mrb[0].mxu0
    %v1477 = vadd.f32 0.0, %v1476
    %v1478 = vpop.f32.mrb[0].mxu0
    %1479 = vdwg.mxu0
    %1480 = vst [vmem:[#allocation3 + $0xc0] sm:$0xff] %v1442
    %1481 = vst [vmem:[#allocation3 + $0xc8] sm:$0xff] %v1447
    %1482 = vst [vmem:[#allocation3 + $0xd0] sm:$0xff] %v1452
    %1483 = vst [vmem:[#allocation3 + $0xd8] sm:$0xff] %v1457
    %1484 = vst [vmem:[#allocation3 + $0xe0] sm:$0xff] %v1462
    %1485 = vst [vmem:[#allocation3 + $0xe8] sm:$0xff] %v1467
    %1486 = vst [vmem:[#allocation3 + $0xf0] sm:$0xff] %v1472
    %1487 = vst [vmem:[#allocation3 + $0xf8] sm:$0xff] %v1477
    %v1488 = vld [vmem:[%s0] sm:$0xff]
    %v1489 = vld [vmem:[%s0 + $0x8] sm:$0xff]
    %v1490 = vld [vmem:[%s0 + $0x20] sm:$0xff]
    %v1491 = vld [vmem:[%s0 + $0x28] sm:$0xff]
    %v1492 = vld [vmem:[%s0 + $0x40] sm:$0xff]
    %v1493 = vld [vmem:[%s0 + $0x48] sm:$0xff]
    %v1494 = vld [vmem:[%s0 + $0x60] sm:$0xff]
    %v1495 = vld [vmem:[%s0 + $0x68] sm:$0xff]
    %v1496 = vld [vmem:[%s0 + $0x80] sm:$0xff]
    %v1497 = vld [vmem:[%s0 + $0x88] sm:$0xff]
    %v1498 = vld [vmem:[%s0 + $0xa0] sm:$0xff]
    %v1499 = vld [vmem:[%s0 + $0xa8] sm:$0xff]
    %v1500 = vld [vmem:[%s0 + $0xc0] sm:$0xff]
    %v1501 = vld [vmem:[%s0 + $0xc8] sm:$0xff]
    %v1502 = vld [vmem:[%s0 + $0xe0] sm:$0xff]
    %v1503 = vld [vmem:[%s0 + $0xe8] sm:$0xff]
    %v1504 = vld [vmem:[#allocation3] sm:$0xff]
    %v1505 = vld [vmem:[#allocation3 + $0x8] sm:$0xff]
    %v1506 = vld [vmem:[#allocation3 + $0x10] sm:$0xff]
    %v1507 = vld [vmem:[#allocation3 + $0x18] sm:$0xff]
    %v1508 = vld [vmem:[#allocation3 + $0x20] sm:$0xff]
    %v1509 = vld [vmem:[#allocation3 + $0x28] sm:$0xff]
    %v1510 = vld [vmem:[#allocation3 + $0x30] sm:$0xff]
    %v1511 = vld [vmem:[#allocation3 + $0x38] sm:$0xff]
    %v1512 = vld [vmem:[#allocation3 + $0x40] sm:$0xff]
    %v1513 = vld [vmem:[#allocation3 + $0x48] sm:$0xff]
    %v1514 = vld [vmem:[#allocation3 + $0x50] sm:$0xff]
    %v1515 = vld [vmem:[#allocation3 + $0x58] sm:$0xff]
    %v1516 = vld [vmem:[#allocation3 + $0x60] sm:$0xff]
    %v1517 = vld [vmem:[#allocation3 + $0x68] sm:$0xff]
    %v1518 = vld [vmem:[#allocation3 + $0x70] sm:$0xff]
    %v1519 = vld [vmem:[#allocation3 + $0x78] sm:$0xff]
    %v1520 = vld [vmem:[#allocation3 + $0x80] sm:$0xff]
    %v1521 = vld [vmem:[#allocation3 + $0x88] sm:$0xff]
    %v1522 = vld [vmem:[#allocation3 + $0x90] sm:$0xff]
    %v1523 = vld [vmem:[#allocation3 + $0x98] sm:$0xff]
    %v1524 = vld [vmem:[#allocation3 + $0xa0] sm:$0xff]
    %v1525 = vld [vmem:[#allocation3 + $0xa8] sm:$0xff]
    %v1526 = vld [vmem:[#allocation3 + $0xb0] sm:$0xff]
    %v1527 = vld [vmem:[#allocation3 + $0xb8] sm:$0xff]
    %v1528 = vld [vmem:[#allocation3 + $0xc0] sm:$0xff]
    %v1529 = vld [vmem:[#allocation3 + $0xc8] sm:$0xff]
    %v1530 = vld [vmem:[#allocation3 + $0xd0] sm:$0xff]
    %v1531 = vld [vmem:[#allocation3 + $0xd8] sm:$0xff]
    %v1532 = vld [vmem:[#allocation3 + $0xe0] sm:$0xff]
    %v1533 = vld [vmem:[#allocation3 + $0xe8] sm:$0xff]
    %v1534 = vld [vmem:[#allocation3 + $0xf0] sm:$0xff]
    %v1535 = vld [vmem:[#allocation3 + $0xf8] sm:$0xff]
    %v1536 = vld [vmem:[%s0 + $0x10] sm:$0xff]
    %v1537 = vld [vmem:[%s0 + $0x30] sm:$0xff]
    %v1538 = vld [vmem:[%s0 + $0x50] sm:$0xff]
    %v1539 = vld [vmem:[%s0 + $0x70] sm:$0xff]
    %v1540 = vld [vmem:[%s0 + $0x90] sm:$0xff]
    %v1541 = vld [vmem:[%s0 + $0xb0] sm:$0xff]
    %v1542 = vld [vmem:[%s0 + $0xd0] sm:$0xff]
    %v1543 = vld [vmem:[%s0 + $0xf0] sm:$0xff]
    %1544 = vmatprep.subr.mxu0 0.0
    %1545 = vmatpush1.msra.mxu0 %v1504
    %1546 = vmatprep.subr.mxu0 0.0
    %1547 = vmatpush1.msra.mxu0 %v1505
    %1548 = vmatprep.subr.mxu0 0.0
    %1549 = vmatpush1.msra.mxu0 %v1506
    %1550 = vmatprep.subr.mxu0 0.0
    %1551 = vmatpush1.msra.mxu0 %v1507
    %1552 = vmatprep.subr.mxu0 0.0
    %1553 = vmatpush1.msra.mxu0 %v1508
    %1554 = vmatprep.subr.mxu0 0.0
    %1555 = vmatpush1.msra.mxu0 %v1509
    %1556 = vmatprep.subr.mxu0 0.0
    %1557 = vmatpush1.msra.mxu0 %v1510
    %1558 = vmatprep.subr.mxu0 0.0
    %1559 = vmatpush1.msra.mxu0 %v1511
    %1560 = vmatprep.subr.mxu0 0.0
    %1561 = vmatpush1.msra.mxu0 %v1512
    %1562 = vmatprep.subr.mxu0 0.0
    %1563 = vmatpush1.msra.mxu0 %v1513
    %1564 = vmatprep.subr.mxu0 0.0
    %1565 = vmatpush1.msra.mxu0 %v1514
    %1566 = vmatprep.subr.mxu0 0.0
    %1567 = vmatpush1.msra.mxu0 %v1515
    %1568 = vmatprep.subr.mxu0 0.0
    %1569 = vmatpush1.msra.mxu0 %v1516
    %1570 = vmatprep.subr.mxu0 0.0
    %1571 = vmatpush1.msra.mxu0 %v1517
    %1572 = vmatprep.subr.mxu0 0.0
    %1573 = vmatpush1.msra.mxu0 %v1518
    %1574 = vmatprep.subr.mxu0 0.0
    %1575 = vmatpush1.msra.mxu0 %v1519
    %1576 = vmatprep.subr.mxu0 0.0
    %1577 = vmatpush1.msra.mxu0 %v1520
    %1578 = vmatprep.subr.mxu0 0.0
    %1579 = vmatpush1.msra.mxu0 %v1521
    %1580 = vmatprep.subr.mxu0 0.0
    %1581 = vmatpush1.msra.mxu0 %v1522
    %1582 = vmatprep.subr.mxu0 0.0
    %1583 = vmatpush1.msra.mxu0 %v1523
    %1584 = vmatprep.subr.mxu0 0.0
    %1585 = vmatpush1.msra.mxu0 %v1524
    %1586 = vmatprep.subr.mxu0 0.0
    %1587 = vmatpush1.msra.mxu0 %v1525
    %1588 = vmatprep.subr.mxu0 0.0
    %1589 = vmatpush1.msra.mxu0 %v1526
    %1590 = vmatprep.subr.mxu0 0.0
    %1591 = vmatpush1.msra.mxu0 %v1527
    %1592 = vmatprep.subr.mxu0 0.0
    %1593 = vmatpush1.msra.mxu0 %v1528
    %1594 = vmatprep.subr.mxu0 0.0
    %1595 = vmatpush1.msra.mxu0 %v1529
    %1596 = vmatprep.subr.mxu0 0.0
    %1597 = vmatpush1.msra.mxu0 %v1530
    %1598 = vmatprep.subr.mxu0 0.0
    %1599 = vmatpush1.msra.mxu0 %v1531
    %1600 = vmatprep.subr.mxu0 0.0
    %1601 = vmatpush1.msra.mxu0 %v1532
    %1602 = vmatprep.subr.mxu0 0.0
    %1603 = vmatpush1.msra.mxu0 %v1533
    %1604 = vmatprep.subr.mxu0 0.0
    %1605 = vmatpush1.msra.mxu0 %v1534
    %1606 = vmatprep.subr.mxu0 0.0
    %1607 = vmatpush1.msra.mxu0 %v1535
    %1608 = vmatprep.mubr.f32.mxu0 %v1489
    %1609 = vmatmul.mubr.f32.gmra.mrb[0].mxu0 %v1488
    %v1610 = vpop.f32.mrb[0].mxu0
    %v1611 = vadd.f32 %v1536, %v1610
    %v1612 = vpop.f32.mrb[0].mxu0
    %1613 = vmatprep.mubr.f32.mxu0 %v1491
    %1614 = vmatmul.mubr.f32.gmra.mrb[0].mxu0 %v1490
    %v1615 = vpop.f32.mrb[0].mxu0
    %v1616 = vadd.f32 %v1537, %v1615
    %v1617 = vpop.f32.mrb[0].mxu0
    %1618 = vmatprep.mubr.f32.mxu0 %v1493
    %1619 = vmatmul.mubr.f32.gmra.mrb[0].mxu0 %v1492
    %v1620 = vpop.f32.mrb[0].mxu0
    %v1621 = vadd.f32 %v1538, %v1620
    %v1622 = vpop.f32.mrb[0].mxu0
    %1623 = vmatprep.mubr.f32.mxu0 %v1495
    %1624 = vmatmul.mubr.f32.gmra.mrb[0].mxu0 %v1494
    %v1625 = vpop.f32.mrb[0].mxu0
    %v1626 = vadd.f32 %v1539, %v1625
    %v1627 = vpop.f32.mrb[0].mxu0
    %1628 = vmatprep.mubr.f32.mxu0 %v1497
    %1629 = vmatmul.mubr.f32.gmra.mrb[0].mxu0 %v1496
    %v1630 = vpop.f32.mrb[0].mxu0
    %v1631 = vadd.f32 %v1540, %v1630
    %v1632 = vpop.f32.mrb[0].mxu0
    %1633 = vmatprep.mubr.f32.mxu0 %v1499
    %1634 = vmatmul.mubr.f32.gmra.mrb[0].mxu0 %v1498
    %v1635 = vpop.f32.mrb[0].mxu0
    %v1636 = vadd.f32 %v1541, %v1635
    %v1637 = vpop.f32.mrb[0].mxu0
    %1638 = vmatprep.mubr.f32.mxu0 %v1501
    %1639 = vmatmul.mubr.f32.gmra.mrb[0].mxu0 %v1500
    %v1640 = vpop.f32.mrb[0].mxu0
    %v1641 = vadd.f32 %v1542, %v1640
    %v1642 = vpop.f32.mrb[0].mxu0
    %1643 = vmatprep.mubr.f32.mxu0 %v1503
    %1644 = vmatmul.mubr.f32.gmra.mrb[0].mxu0 %v1502
    %v1645 = vpop.f32.mrb[0].mxu0
    %v1646 = vadd.f32 %v1543, %v1645
    %v1647 = vpop.f32.mrb[0].mxu0
    %1648 = vdwg.mxu0
    %v1649 = vxor.u32 %v1611, 2147483648
    %v1650 = vxor.u32 %v1616, 2147483648
    %v1651 = vxor.u32 %v1621, 2147483648
    %v1652 = vxor.u32 %v1626, 2147483648
    %v1653 = vxor.u32 %v1631, 2147483648
    %v1654 = vxor.u32 %v1636, 2147483648
    %v1655 = vxor.u32 %v1641, 2147483648
    %v1656 = vxor.u32 %v1646, 2147483648
    %v1657 = vmul.f32 %v1649, 1.442695
    %v1658 = vpow.pop %v1657
    %v1659 = vmul.f32 %v1650, 1.442695
    %v1660 = vpow.pop %v1659
    %v1661 = vmul.f32 %v1651, 1.442695
    %v1662 = vpow.pop %v1661
    %v1663 = vmul.f32 %v1652, 1.442695
    %v1664 = vpow.pop %v1663
    %v1665 = vmul.f32 %v1653, 1.442695
    %v1666 = vpow.pop %v1665
    %v1667 = vmul.f32 %v1654, 1.442695
    %v1668 = vpow.pop %v1667
    %v1669 = vmul.f32 %v1655, 1.442695
    %v1670 = vpow.pop %v1669
    %v1671 = vmul.f32 %v1656, 1.442695
    %v1672 = vpow.pop %v1671
    %v1673 = vadd.f32 %v1658, 1.0
    %v1674 = vadd.f32 %v1660, 1.0
    %v1675 = vadd.f32 %v1662, 1.0
    %v1676 = vadd.f32 %v1664, 1.0
    %v1677 = vadd.f32 %v1666, 1.0
    %v1678 = vadd.f32 %v1668, 1.0
    %v1679 = vadd.f32 %v1670, 1.0
    %v1680 = vadd.f32 %v1672, 1.0
    %v1681 = vrcp.pop %v1673
    %v1682 = vmul.f32 1.0, %v1681
    %v1683 = vrcp.pop %v1674
    %v1684 = vmul.f32 1.0, %v1683
    %v1685 = vrcp.pop %v1675
    %v1686 = vmul.f32 1.0, %v1685
    %v1687 = vrcp.pop %v1676
    %v1688 = vmul.f32 1.0, %v1687
    %v1689 = vrcp.pop %v1677
    %v1690 = vmul.f32 1.0, %v1689
    %v1691 = vrcp.pop %v1678
    %v1692 = vmul.f32 1.0, %v1691
    %v1693 = vrcp.pop %v1679
    %v1694 = vmul.f32 1.0, %v1693
    %v1695 = vrcp.pop %v1680
    %v1696 = vmul.f32 1.0, %v1695
    %1705 = vrot.lane.b32.xlu0 %v1611, 32
    %v1706 = vpop.permute.xlu0 %1705
    %1707 = vrot.lane.b32.xlu0 %v1616, 32
    %v1708 = vpop.permute.xlu0 %1707
    %1709 = vrot.lane.b32.xlu0 %v1621, 32
    %v1710 = vpop.permute.xlu0 %1709
    %1711 = vrot.lane.b32.xlu0 %v1626, 32
    %v1712 = vpop.permute.xlu0 %1711
    %1713 = vrot.lane.b32.xlu0 %v1631, 32
    %v1714 = vpop.permute.xlu0 %1713
    %1715 = vrot.lane.b32.xlu0 %v1636, 32
    %v1716 = vpop.permute.xlu0 %1715
    %1717 = vrot.lane.b32.xlu0 %v1641, 32
    %v1718 = vpop.permute.xlu0 %1717
    %1719 = vrot.lane.b32.xlu0 %v1646, 32
    %v1720 = vpop.permute.xlu0 %1719
    %v1729 = vmul.f32 %v1682, %v1706
    %v1730 = vmul.f32 %v1684, %v1708
    %v1731 = vmul.f32 %v1686, %v1710
    %v1732 = vmul.f32 %v1688, %v1712
    %v1733 = vmul.f32 %v1690, %v1714
    %v1734 = vmul.f32 %v1692, %v1716
    %v1735 = vmul.f32 %v1694, %v1718
    %v1736 = vmul.f32 %v1696, %v1720
    %1745 = vrot.lane.b32.xlu0 %v1729, 64
    %v1746 = vpop.permute.xlu0 %1745
    %1747 = vrot.lane.b32.xlu0 %v1730, 64
    %v1748 = vpop.permute.xlu0 %1747
    %1749 = vrot.lane.b32.xlu0 %v1731, 64
    %v1750 = vpop.permute.xlu0 %1749
    %1751 = vrot.lane.b32.xlu0 %v1732, 64
    %v1752 = vpop.permute.xlu0 %1751
    %1753 = vrot.lane.b32.xlu0 %v1733, 64
    %v1754 = vpop.permute.xlu0 %1753
    %1755 = vrot.lane.b32.xlu0 %v1734, 64
    %v1756 = vpop.permute.xlu0 %1755
    %1757 = vrot.lane.b32.xlu0 %v1735, 64
    %v1758 = vpop.permute.xlu0 %1757
    %1759 = vrot.lane.b32.xlu0 %v1736, 64
    %v1760 = vpop.permute.xlu0 %1759
    %v1769 = vadd.f32 %v1611, %v1746
    %v1770 = vadd.f32 %v1616, %v1748
    %v1771 = vadd.f32 %v1621, %v1750
    %v1772 = vadd.f32 %v1626, %v1752
    %v1773 = vadd.f32 %v1631, %v1754
    %v1774 = vadd.f32 %v1636, %v1756
    %v1775 = vadd.f32 %v1641, %v1758
    %v1776 = vadd.f32 %v1646, %v1760
    %v1777 = vtanh.pop %v1769
    %v1778 = vtanh.pop %v1770
    %v1779 = vtanh.pop %v1771
    %v1780 = vtanh.pop %v1772
    %v1781 = vtanh.pop %v1773
    %v1782 = vtanh.pop %v1774
    %v1783 = vtanh.pop %v1775
    %v1784 = vtanh.pop %v1776
    %v1785 = vsub.f32 1.0, %v1682
    %v1786 = vsub.f32 1.0, %v1684
    %v1787 = vsub.f32 1.0, %v1686
    %v1788 = vsub.f32 1.0, %v1688
    %v1789 = vsub.f32 1.0, %v1690
    %v1790 = vsub.f32 1.0, %v1692
    %v1791 = vsub.f32 1.0, %v1694
    %v1792 = vsub.f32 1.0, %v1696
    %1801 = vrot.lane.b32.xlu0 %v1777, 96
    %v1802 = vpop.permute.xlu0 %1801
    %1803 = vrot.lane.b32.xlu0 %v1778, 96
    %v1804 = vpop.permute.xlu0 %1803
    %1805 = vrot.lane.b32.xlu0 %v1779, 96
    %v1806 = vpop.permute.xlu0 %1805
    %1807 = vrot.lane.b32.xlu0 %v1780, 96
    %v1808 = vpop.permute.xlu0 %1807
    %1809 = vrot.lane.b32.xlu0 %v1781, 96
    %v1810 = vpop.permute.xlu0 %1809
    %1811 = vrot.lane.b32.xlu0 %v1782, 96
    %v1812 = vpop.permute.xlu0 %1811
    %1813 = vrot.lane.b32.xlu0 %v1783, 96
    %v1814 = vpop.permute.xlu0 %1813
    %1815 = vrot.lane.b32.xlu0 %v1784, 96
    %v1816 = vpop.permute.xlu0 %1815
    %v1825 = vmul.f32 %v1785, %v1802
    %v1826 = vmul.f32 %v1786, %v1804
    %v1827 = vmul.f32 %v1787, %v1806
    %v1828 = vmul.f32 %v1788, %v1808
    %v1829 = vmul.f32 %v1789, %v1810
    %v1830 = vmul.f32 %v1790, %v1812
    %v1831 = vmul.f32 %v1791, %v1814
    %v1832 = vmul.f32 %v1792, %v1816
    %v1833 = vmul.f32 %v1682, %v940
    %v1834 = vmul.f32 %v1684, %v941
    %v1835 = vmul.f32 %v1686, %v942
    %v1836 = vmul.f32 %v1688, %v943
    %v1837 = vmul.f32 %v1690, %v944
    %v1838 = vmul.f32 %v1692, %v945
    %v1839 = vmul.f32 %v1694, %v946
    %v1840 = vmul.f32 %v1696, %v947
    %v1841 = vadd.f32 %v1825, %v1833
    %v1842 = vadd.f32 %v1826, %v1834
    %v1843 = vadd.f32 %v1827, %v1835
    %v1844 = vadd.f32 %v1828, %v1836
    %v1845 = vadd.f32 %v1829, %v1837
    %v1846 = vadd.f32 %v1830, %v1838
    %v1847 = vadd.f32 %v1831, %v1839
    %v1848 = vadd.f32 %v1832, %v1840
    %1853 = vrot.lane.b32.xlu0 %v1841, 96
    %v1854 = vpop.permute.xlu0 %1853
    %1855 = vrot.lane.b32.xlu0 %v1842, 96
    %v1856 = vpop.permute.xlu0 %1855
    %1857 = vrot.lane.b32.xlu0 %v1843, 96
    %v1858 = vpop.permute.xlu0 %1857
    %1859 = vrot.lane.b32.xlu0 %v1844, 96
    %v1860 = vpop.permute.xlu0 %1859
    %1865 = vst.msk [vmem:[#allocation2] sm:$0xff] %vm29, %v1854
    %1866 = vst.msk [vmem:[#allocation2 + $0x8] sm:$0xff] %vm29, %v1856
    %1867 = vst.msk [vmem:[#allocation2 + $0x10] sm:$0xff] %vm29, %v1858
    %1868 = vst.msk [vmem:[#allocation2 + $0x18] sm:$0xff] %vm29, %v1860
    %1869 = vst.msk [vmem:[#allocation2 + $0x20] sm:$0xff] %vm50, %v1845
    %1870 = vst.msk [vmem:[#allocation2 + $0x28] sm:$0xff] %vm50, %v1846
    %1871 = vst.msk [vmem:[#allocation2 + $0x30] sm:$0xff] %vm50, %v1847
    %1872 = vst.msk [vmem:[#allocation2 + $0x38] sm:$0xff] %vm50, %v1848
    %v1873 = vld [vmem:[#allocation2] sm:$0xff]
    %v1874 = vld [vmem:[#allocation2 + $0x8] sm:$0xff]
    %v1875 = vld [vmem:[#allocation2 + $0x10] sm:$0xff]
    %v1876 = vld [vmem:[#allocation2 + $0x18] sm:$0xff]
    %v1877 = vld [vmem:[#allocation2 + $0x20] sm:$0xff]
    %v1878 = vld [vmem:[#allocation2 + $0x28] sm:$0xff]
    %v1879 = vld [vmem:[#allocation2 + $0x30] sm:$0xff]
    %v1880 = vld [vmem:[#allocation2 + $0x38] sm:$0xff]
    %v1881 = vld [vmem:[%s1] sm:$0xff]
    %v1882 = vld [vmem:[%s1 + $0x8] sm:$0xff]
    %v1883 = vld [vmem:[%s1 + $0x10] sm:$0xff]
    %v1884 = vld [vmem:[%s1 + $0x18] sm:$0xff]
    %v1885 = vld [vmem:[%s1 + $0x20] sm:$0xff]
    %v1886 = vld [vmem:[%s1 + $0x28] sm:$0xff]
    %v1887 = vld [vmem:[%s1 + $0x30] sm:$0xff]
    %v1888 = vld [vmem:[%s1 + $0x38] sm:$0xff]
    %v1890 = vsel %vm20, %v1873, 0
    %v1893 = vsel %vm20, %v1874, 0
    %v1896 = vsel %vm20, %v1875, 0
    %v1899 = vsel %vm20, %v1876, 0
    %v1902 = vsel %vm20, %v1877, 0
    %v1905 = vsel %vm20, %v1878, 0
    %v1908 = vsel %vm20, %v1879, 0
    %v1911 = vsel %vm20, %v1880, 0
    %1913 = vmatprep.subr.mxu0 0.0
    %1914 = vmatpush1.msra.mxu0 %v1881
    %1915 = vmatprep.subr.mxu0 0.0
    %1916 = vmatpush1.msra.mxu0 %v1882
    %1917 = vmatprep.subr.mxu0 0.0
    %1918 = vmatpush1.msra.mxu0 %v1883
    %1919 = vmatprep.subr.mxu0 0.0
    %1920 = vmatpush1.msra.mxu0 %v1884
    %1921 = vmatprep.subr.mxu0 0.0
    %1922 = vmatpush1.msra.mxu0 %v1885
    %1923 = vmatprep.subr.mxu0 0.0
    %1924 = vmatpush1.msra.mxu0 %v1886
    %1925 = vmatprep.subr.mxu0 0.0
    %1926 = vmatpush1.msra.mxu0 %v1887
    %1927 = vmatprep.subr.mxu0 0.0
    %1928 = vmatpush1.msra.mxu0 %v1888
    %1929 = vmatprep.subr.mxu0 0.0
    %1930 = vmatpush1.msra.mxu0 0.0
    %1931 = vmatprep.subr.mxu0 0.0
    %1932 = vmatpush1.msra.mxu0 0.0
    %1933 = vmatprep.subr.mxu0 0.0
    %1934 = vmatpush1.msra.mxu0 0.0
    %1935 = vmatprep.subr.mxu0 0.0
    %1936 = vmatpush1.msra.mxu0 0.0
    %1937 = vmatprep.subr.mxu0 0.0
    %1938 = vmatpush1.msra.mxu0 0.0
    %1939 = vmatprep.subr.mxu0 0.0
    %1940 = vmatpush1.msra.mxu0 0.0
    %1941 = vmatprep.subr.mxu0 0.0
    %1942 = vmatpush1.msra.mxu0 0.0
    %1943 = vmatprep.subr.mxu0 0.0
    %1944 = vmatpush1.msra.mxu0 0.0
    %1945 = vmatprep.subr.mxu0 0.0
    %1946 = vmatpush1.msra.mxu0 0.0
    %1947 = vmatprep.subr.mxu0 0.0
    %1948 = vmatpush1.msra.mxu0 0.0
    %1949 = vmatprep.subr.mxu0 0.0
    %1950 = vmatpush1.msra.mxu0 0.0
    %1951 = vmatprep.subr.mxu0 0.0
    %1952 = vmatpush1.msra.mxu0 0.0
    %1953 = vmatprep.subr.mxu0 0.0
    %1954 = vmatpush1.msra.mxu0 0.0
    %1955 = vmatprep.subr.mxu0 0.0
    %1956 = vmatpush1.msra.mxu0 0.0
    %1957 = vmatprep.subr.mxu0 0.0
    %1958 = vmatpush1.msra.mxu0 0.0
    %1959 = vmatprep.subr.mxu0 0.0
    %1960 = vmatpush1.msra.mxu0 0.0
    %1961 = vmatprep.subr.mxu0 0.0
    %1962 = vmatpush1.msra.mxu0 0.0
    %1963 = vmatprep.subr.mxu0 0.0
    %1964 = vmatpush1.msra.mxu0 0.0
    %1965 = vmatprep.subr.mxu0 0.0
    %1966 = vmatpush1.msra.mxu0 0.0
    %1967 = vmatprep.subr.mxu0 0.0
    %1968 = vmatpush1.msra.mxu0 0.0
    %1969 = vmatprep.subr.mxu0 0.0
    %1970 = vmatpush1.msra.mxu0 0.0
    %1971 = vmatprep.subr.mxu0 0.0
    %1972 = vmatpush1.msra.mxu0 0.0
    %1973 = vmatprep.subr.mxu0 0.0
    %1974 = vmatpush1.msra.mxu0 0.0
    %1975 = vmatprep.subr.mxu0 0.0
    %1976 = vmatpush1.msra.mxu0 0.0
    %1977 = vmatprep.mubr.f32.mxu0 0.0
    %1978 = vmatmul.mubr.f32.gmra.mrb[0].mxu0 %v1890
    %v1979 = vpop.f32.mrb[0].mxu0
    %v1980 = vadd.f32 0.0, %v1979
    %v1981 = vpop.f32.mrb[0].mxu0
    %1982 = vmatprep.mubr.f32.mxu0 0.0
    %1983 = vmatmul.mubr.f32.gmra.mrb[0].mxu0 %v1893
    %v1984 = vpop.f32.mrb[0].mxu0
    %v1985 = vadd.f32 0.0, %v1984
    %v1986 = vpop.f32.mrb[0].mxu0
    %1987 = vmatprep.mubr.f32.mxu0 0.0
    %1988 = vmatmul.mubr.f32.gmra.mrb[0].mxu0 %v1896
    %v1989 = vpop.f32.mrb[0].mxu0
    %v1990 = vadd.f32 0.0, %v1989
    %v1991 = vpop.f32.mrb[0].mxu0
    %1992 = vmatprep.mubr.f32.mxu0 0.0
    %1993 = vmatmul.mubr.f32.gmra.mrb[0].mxu0 %v1899
    %v1994 = vpop.f32.mrb[0].mxu0
    %v1995 = vadd.f32 0.0, %v1994
    %v1996 = vpop.f32.mrb[0].mxu0
    %1997 = vmatprep.mubr.f32.mxu0 0.0
    %1998 = vmatmul.mubr.f32.gmra.mrb[0].mxu0 %v1902
    %v1999 = vpop.f32.mrb[0].mxu0
    %v2000 = vadd.f32 0.0, %v1999
    %v2001 = vpop.f32.mrb[0].mxu0
    %2002 = vmatprep.mubr.f32.mxu0 0.0
    %2003 = vmatmul.mubr.f32.gmra.mrb[0].mxu0 %v1905
    %v2004 = vpop.f32.mrb[0].mxu0
    %v2005 = vadd.f32 0.0, %v2004
    %v2006 = vpop.f32.mrb[0].mxu0
    %2007 = vmatprep.mubr.f32.mxu0 0.0
    %2008 = vmatmul.mubr.f32.gmra.mrb[0].mxu0 %v1908
    %v2009 = vpop.f32.mrb[0].mxu0
    %v2010 = vadd.f32 0.0, %v2009
    %v2011 = vpop.f32.mrb[0].mxu0
    %2012 = vmatprep.mubr.f32.mxu0 0.0
    %2013 = vmatmul.mubr.f32.gmra.mrb[0].mxu0 %v1911
    %v2014 = vpop.f32.mrb[0].mxu0
    %v2015 = vadd.f32 0.0, %v2014
    %v2016 = vpop.f32.mrb[0].mxu0
    %2017 = vdwg.mxu0
    %2018 = vst [vmem:[#allocation3] sm:$0xff] %v1980
    %2019 = vst [vmem:[#allocation3 + $0x8] sm:$0xff] %v1985
    %2020 = vst [vmem:[#allocation3 + $0x10] sm:$0xff] %v1990
    %2021 = vst [vmem:[#allocation3 + $0x18] sm:$0xff] %v1995
    %2022 = vst [vmem:[#allocation3 + $0x20] sm:$0xff] %v2000
    %2023 = vst [vmem:[#allocation3 + $0x28] sm:$0xff] %v2005
    %2024 = vst [vmem:[#allocation3 + $0x30] sm:$0xff] %v2010
    %2025 = vst [vmem:[#allocation3 + $0x38] sm:$0xff] %v2015
    %v2026 = vld [vmem:[%s1 + $0x40] sm:$0xff]
    %v2027 = vld [vmem:[%s1 + $0x48] sm:$0xff]
    %v2028 = vld [vmem:[%s1 + $0x50] sm:$0xff]
    %v2029 = vld [vmem:[%s1 + $0x58] sm:$0xff]
    %v2030 = vld [vmem:[%s1 + $0x60] sm:$0xff]
    %v2031 = vld [vmem:[%s1 + $0x68] sm:$0xff]
    %v2032 = vld [vmem:[%s1 + $0x70] sm:$0xff]
    %v2033 = vld [vmem:[%s1 + $0x78] sm:$0xff]
    %2034 = vmatprep.subr.mxu0 0.0
    %2035 = vmatpush1.msra.mxu0 %v2026
    %2036 = vmatprep.subr.mxu0 0.0
    %2037 = vmatpush1.msra.mxu0 %v2027
    %2038 = vmatprep.subr.mxu0 0.0
    %2039 = vmatpush1.msra.mxu0 %v2028
    %2040 = vmatprep.subr.mxu0 0.0
    %2041 = vmatpush1.msra.mxu0 %v2029
    %2042 = vmatprep.subr.mxu0 0.0
    %2043 = vmatpush1.msra.mxu0 %v2030
    %2044 = vmatprep.subr.mxu0 0.0
    %2045 = vmatpush1.msra.mxu0 %v2031
    %2046 = vmatprep.subr.mxu0 0.0
    %2047 = vmatpush1.msra.mxu0 %v2032
    %2048 = vmatprep.subr.mxu0 0.0
    %2049 = vmatpush1.msra.mxu0 %v2033
    %2050 = vmatprep.subr.mxu0 0.0
    %2051 = vmatpush1.msra.mxu0 0.0
    %2052 = vmatprep.subr.mxu0 0.0
    %2053 = vmatpush1.msra.mxu0 0.0
    %2054 = vmatprep.subr.mxu0 0.0
    %2055 = vmatpush1.msra.mxu0 0.0
    %2056 = vmatprep.subr.mxu0 0.0
    %2057 = vmatpush1.msra.mxu0 0.0
    %2058 = vmatprep.subr.mxu0 0.0
    %2059 = vmatpush1.msra.mxu0 0.0
    %2060 = vmatprep.subr.mxu0 0.0
    %2061 = vmatpush1.msra.mxu0 0.0
    %2062 = vmatprep.subr.mxu0 0.0
    %2063 = vmatpush1.msra.mxu0 0.0
    %2064 = vmatprep.subr.mxu0 0.0
    %2065 = vmatpush1.msra.mxu0 0.0
    %2066 = vmatprep.subr.mxu0 0.0
    %2067 = vmatpush1.msra.mxu0 0.0
    %2068 = vmatprep.subr.mxu0 0.0
    %2069 = vmatpush1.msra.mxu0 0.0
    %2070 = vmatprep.subr.mxu0 0.0
    %2071 = vmatpush1.msra.mxu0 0.0
    %2072 = vmatprep.subr.mxu0 0.0
    %2073 = vmatpush1.msra.mxu0 0.0
    %2074 = vmatprep.subr.mxu0 0.0
    %2075 = vmatpush1.msra.mxu0 0.0
    %2076 = vmatprep.subr.mxu0 0.0
    %2077 = vmatpush1.msra.mxu0 0.0
    %2078 = vmatprep.subr.mxu0 0.0
    %2079 = vmatpush1.msra.mxu0 0.0
    %2080 = vmatprep.subr.mxu0 0.0
    %2081 = vmatpush1.msra.mxu0 0.0
    %2082 = vmatprep.subr.mxu0 0.0
    %2083 = vmatpush1.msra.mxu0 0.0
    %2084 = vmatprep.subr.mxu0 0.0
    %2085 = vmatpush1.msra.mxu0 0.0
    %2086 = vmatprep.subr.mxu0 0.0
    %2087 = vmatpush1.msra.mxu0 0.0
    %2088 = vmatprep.subr.mxu0 0.0
    %2089 = vmatpush1.msra.mxu0 0.0
    %2090 = vmatprep.subr.mxu0 0.0
    %2091 = vmatpush1.msra.mxu0 0.0
    %2092 = vmatprep.subr.mxu0 0.0
    %2093 = vmatpush1.msra.mxu0 0.0
    %2094 = vmatprep.subr.mxu0 0.0
    %2095 = vmatpush1.msra.mxu0 0.0
    %2096 = vmatprep.subr.mxu0 0.0
    %2097 = vmatpush1.msra.mxu0 0.0
    %2098 = vmatprep.mubr.f32.mxu0 0.0
    %2099 = vmatmul.mubr.f32.gmra.mrb[0].mxu0 %v1890
    %v2100 = vpop.f32.mrb[0].mxu0
    %v2101 = vadd.f32 0.0, %v2100
    %v2102 = vpop.f32.mrb[0].mxu0
    %2103 = vmatprep.mubr.f32.mxu0 0.0
    %2104 = vmatmul.mubr.f32.gmra.mrb[0].mxu0 %v1893
    %v2105 = vpop.f32.mrb[0].mxu0
    %v2106 = vadd.f32 0.0, %v2105
    %v2107 = vpop.f32.mrb[0].mxu0
    %2108 = vmatprep.mubr.f32.mxu0 0.0
    %2109 = vmatmul.mubr.f32.gmra.mrb[0].mxu0 %v1896
    %v2110 = vpop.f32.mrb[0].mxu0
    %v2111 = vadd.f32 0.0, %v2110
    %v2112 = vpop.f32.mrb[0].mxu0
    %2113 = vmatprep.mubr.f32.mxu0 0.0
    %2114 = vmatmul.mubr.f32.gmra.mrb[0].mxu0 %v1899
    %v2115 = vpop.f32.mrb[0].mxu0
    %v2116 = vadd.f32 0.0, %v2115
    %v2117 = vpop.f32.mrb[0].mxu0
    %2118 = vmatprep.mubr.f32.mxu0 0.0
    %2119 = vmatmul.mubr.f32.gmra.mrb[0].mxu0 %v1902
    %v2120 = vpop.f32.mrb[0].mxu0
    %v2121 = vadd.f32 0.0, %v2120
    %v2122 = vpop.f32.mrb[0].mxu0
    %2123 = vmatprep.mubr.f32.mxu0 0.0
    %2124 = vmatmul.mubr.f32.gmra.mrb[0].mxu0 %v1905
    %v2125 = vpop.f32.mrb[0].mxu0
    %v2126 = vadd.f32 0.0, %v2125
    %v2127 = vpop.f32.mrb[0].mxu0
    %2128 = vmatprep.mubr.f32.mxu0 0.0
    %2129 = vmatmul.mubr.f32.gmra.mrb[0].mxu0 %v1908
    %v2130 = vpop.f32.mrb[0].mxu0
    %v2131 = vadd.f32 0.0, %v2130
    %v2132 = vpop.f32.mrb[0].mxu0
    %2133 = vmatprep.mubr.f32.mxu0 0.0
    %2134 = vmatmul.mubr.f32.gmra.mrb[0].mxu0 %v1911
    %v2135 = vpop.f32.mrb[0].mxu0
    %v2136 = vadd.f32 0.0, %v2135
    %v2137 = vpop.f32.mrb[0].mxu0
    %2138 = vdwg.mxu0
    %2139 = vst [vmem:[#allocation3 + $0x40] sm:$0xff] %v2101
    %2140 = vst [vmem:[#allocation3 + $0x48] sm:$0xff] %v2106
    %2141 = vst [vmem:[#allocation3 + $0x50] sm:$0xff] %v2111
    %2142 = vst [vmem:[#allocation3 + $0x58] sm:$0xff] %v2116
    %2143 = vst [vmem:[#allocation3 + $0x60] sm:$0xff] %v2121
    %2144 = vst [vmem:[#allocation3 + $0x68] sm:$0xff] %v2126
    %2145 = vst [vmem:[#allocation3 + $0x70] sm:$0xff] %v2131
    %2146 = vst [vmem:[#allocation3 + $0x78] sm:$0xff] %v2136
    %v2147 = vld [vmem:[%s1 + $0x80] sm:$0xff]
    %v2148 = vld [vmem:[%s1 + $0x88] sm:$0xff]
    %v2149 = vld [vmem:[%s1 + $0x90] sm:$0xff]
    %v2150 = vld [vmem:[%s1 + $0x98] sm:$0xff]
    %v2151 = vld [vmem:[%s1 + $0xa0] sm:$0xff]
    %v2152 = vld [vmem:[%s1 + $0xa8] sm:$0xff]
    %v2153 = vld [vmem:[%s1 + $0xb0] sm:$0xff]
    %v2154 = vld [vmem:[%s1 + $0xb8] sm:$0xff]
    %2155 = vmatprep.subr.mxu0 0.0
    %2156 = vmatpush1.msra.mxu0 %v2147
    %2157 = vmatprep.subr.mxu0 0.0
    %2158 = vmatpush1.msra.mxu0 %v2148
    %2159 = vmatprep.subr.mxu0 0.0
    %2160 = vmatpush1.msra.mxu0 %v2149
    %2161 = vmatprep.subr.mxu0 0.0
    %2162 = vmatpush1.msra.mxu0 %v2150
    %2163 = vmatprep.subr.mxu0 0.0
    %2164 = vmatpush1.msra.mxu0 %v2151
    %2165 = vmatprep.subr.mxu0 0.0
    %2166 = vmatpush1.msra.mxu0 %v2152
    %2167 = vmatprep.subr.mxu0 0.0
    %2168 = vmatpush1.msra.mxu0 %v2153
    %2169 = vmatprep.subr.mxu0 0.0
    %2170 = vmatpush1.msra.mxu0 %v2154
    %2171 = vmatprep.subr.mxu0 0.0
    %2172 = vmatpush1.msra.mxu0 0.0
    %2173 = vmatprep.subr.mxu0 0.0
    %2174 = vmatpush1.msra.mxu0 0.0
    %2175 = vmatprep.subr.mxu0 0.0
    %2176 = vmatpush1.msra.mxu0 0.0
    %2177 = vmatprep.subr.mxu0 0.0
    %2178 = vmatpush1.msra.mxu0 0.0
    %2179 = vmatprep.subr.mxu0 0.0
    %2180 = vmatpush1.msra.mxu0 0.0
    %2181 = vmatprep.subr.mxu0 0.0
    %2182 = vmatpush1.msra.mxu0 0.0
    %2183 = vmatprep.subr.mxu0 0.0
    %2184 = vmatpush1.msra.mxu0 0.0
    %2185 = vmatprep.subr.mxu0 0.0
    %2186 = vmatpush1.msra.mxu0 0.0
    %2187 = vmatprep.subr.mxu0 0.0
    %2188 = vmatpush1.msra.mxu0 0.0
    %2189 = vmatprep.subr.mxu0 0.0
    %2190 = vmatpush1.msra.mxu0 0.0
    %2191 = vmatprep.subr.mxu0 0.0
    %2192 = vmatpush1.msra.mxu0 0.0
    %2193 = vmatprep.subr.mxu0 0.0
    %2194 = vmatpush1.msra.mxu0 0.0
    %2195 = vmatprep.subr.mxu0 0.0
    %2196 = vmatpush1.msra.mxu0 0.0
    %2197 = vmatprep.subr.mxu0 0.0
    %2198 = vmatpush1.msra.mxu0 0.0
    %2199 = vmatprep.subr.mxu0 0.0
    %2200 = vmatpush1.msra.mxu0 0.0
    %2201 = vmatprep.subr.mxu0 0.0
    %2202 = vmatpush1.msra.mxu0 0.0
    %2203 = vmatprep.subr.mxu0 0.0
    %2204 = vmatpush1.msra.mxu0 0.0
    %2205 = vmatprep.subr.mxu0 0.0
    %2206 = vmatpush1.msra.mxu0 0.0
    %2207 = vmatprep.subr.mxu0 0.0
    %2208 = vmatpush1.msra.mxu0 0.0
    %2209 = vmatprep.subr.mxu0 0.0
    %2210 = vmatpush1.msra.mxu0 0.0
    %2211 = vmatprep.subr.mxu0 0.0
    %2212 = vmatpush1.msra.mxu0 0.0
    %2213 = vmatprep.subr.mxu0 0.0
    %2214 = vmatpush1.msra.mxu0 0.0
    %2215 = vmatprep.subr.mxu0 0.0
    %2216 = vmatpush1.msra.mxu0 0.0
    %2217 = vmatprep.subr.mxu0 0.0
    %2218 = vmatpush1.msra.mxu0 0.0
    %2219 = vmatprep.mubr.f32.mxu0 0.0
    %2220 = vmatmul.mubr.f32.gmra.mrb[0].mxu0 %v1890
    %v2221 = vpop.f32.mrb[0].mxu0
    %v2222 = vadd.f32 0.0, %v2221
    %v2223 = vpop.f32.mrb[0].mxu0
    %2224 = vmatprep.mubr.f32.mxu0 0.0
    %2225 = vmatmul.mubr.f32.gmra.mrb[0].mxu0 %v1893
    %v2226 = vpop.f32.mrb[0].mxu0
    %v2227 = vadd.f32 0.0, %v2226
    %v2228 = vpop.f32.mrb[0].mxu0
    %2229 = vmatprep.mubr.f32.mxu0 0.0
    %2230 = vmatmul.mubr.f32.gmra.mrb[0].mxu0 %v1896
    %v2231 = vpop.f32.mrb[0].mxu0
    %v2232 = vadd.f32 0.0, %v2231
    %v2233 = vpop.f32.mrb[0].mxu0
    %2234 = vmatprep.mubr.f32.mxu0 0.0
    %2235 = vmatmul.mubr.f32.gmra.mrb[0].mxu0 %v1899
    %v2236 = vpop.f32.mrb[0].mxu0
    %v2237 = vadd.f32 0.0, %v2236
    %v2238 = vpop.f32.mrb[0].mxu0
    %2239 = vmatprep.mubr.f32.mxu0 0.0
    %2240 = vmatmul.mubr.f32.gmra.mrb[0].mxu0 %v1902
    %v2241 = vpop.f32.mrb[0].mxu0
    %v2242 = vadd.f32 0.0, %v2241
    %v2243 = vpop.f32.mrb[0].mxu0
    %2244 = vmatprep.mubr.f32.mxu0 0.0
    %2245 = vmatmul.mubr.f32.gmra.mrb[0].mxu0 %v1905
    %v2246 = vpop.f32.mrb[0].mxu0
    %v2247 = vadd.f32 0.0, %v2246
    %v2248 = vpop.f32.mrb[0].mxu0
    %2249 = vmatprep.mubr.f32.mxu0 0.0
    %2250 = vmatmul.mubr.f32.gmra.mrb[0].mxu0 %v1908
    %v2251 = vpop.f32.mrb[0].mxu0
    %v2252 = vadd.f32 0.0, %v2251
    %v2253 = vpop.f32.mrb[0].mxu0
    %2254 = vmatprep.mubr.f32.mxu0 0.0
    %2255 = vmatmul.mubr.f32.gmra.mrb[0].mxu0 %v1911
    %v2256 = vpop.f32.mrb[0].mxu0
    %v2257 = vadd.f32 0.0, %v2256
    %v2258 = vpop.f32.mrb[0].mxu0
    %2259 = vdwg.mxu0
    %2260 = vst [vmem:[#allocation3 + $0x80] sm:$0xff] %v2222
    %2261 = vst [vmem:[#allocation3 + $0x88] sm:$0xff] %v2227
    %2262 = vst [vmem:[#allocation3 + $0x90] sm:$0xff] %v2232
    %2263 = vst [vmem:[#allocation3 + $0x98] sm:$0xff] %v2237
    %2264 = vst [vmem:[#allocation3 + $0xa0] sm:$0xff] %v2242
    %2265 = vst [vmem:[#allocation3 + $0xa8] sm:$0xff] %v2247
    %2266 = vst [vmem:[#allocation3 + $0xb0] sm:$0xff] %v2252
    %2267 = vst [vmem:[#allocation3 + $0xb8] sm:$0xff] %v2257
    %v2268 = vld [vmem:[%s1 + $0xc0] sm:$0xff]
    %v2269 = vld [vmem:[%s1 + $0xc8] sm:$0xff]
    %v2270 = vld [vmem:[%s1 + $0xd0] sm:$0xff]
    %v2271 = vld [vmem:[%s1 + $0xd8] sm:$0xff]
    %v2272 = vld [vmem:[%s1 + $0xe0] sm:$0xff]
    %v2273 = vld [vmem:[%s1 + $0xe8] sm:$0xff]
    %v2274 = vld [vmem:[%s1 + $0xf0] sm:$0xff]
    %v2275 = vld [vmem:[%s1 + $0xf8] sm:$0xff]
    %2276 = vmatprep.subr.mxu0 0.0
    %2277 = vmatpush1.msra.mxu0 %v2268
    %2278 = vmatprep.subr.mxu0 0.0
    %2279 = vmatpush1.msra.mxu0 %v2269
    %2280 = vmatprep.subr.mxu0 0.0
    %2281 = vmatpush1.msra.mxu0 %v2270
    %2282 = vmatprep.subr.mxu0 0.0
    %2283 = vmatpush1.msra.mxu0 %v2271
    %2284 = vmatprep.subr.mxu0 0.0
    %2285 = vmatpush1.msra.mxu0 %v2272
    %2286 = vmatprep.subr.mxu0 0.0
    %2287 = vmatpush1.msra.mxu0 %v2273
    %2288 = vmatprep.subr.mxu0 0.0
    %2289 = vmatpush1.msra.mxu0 %v2274
    %2290 = vmatprep.subr.mxu0 0.0
    %2291 = vmatpush1.msra.mxu0 %v2275
    %2292 = vmatprep.subr.mxu0 0.0
    %2293 = vmatpush1.msra.mxu0 0.0
    %2294 = vmatprep.subr.mxu0 0.0
    %2295 = vmatpush1.msra.mxu0 0.0
    %2296 = vmatprep.subr.mxu0 0.0
    %2297 = vmatpush1.msra.mxu0 0.0
    %2298 = vmatprep.subr.mxu0 0.0
    %2299 = vmatpush1.msra.mxu0 0.0
    %2300 = vmatprep.subr.mxu0 0.0
    %2301 = vmatpush1.msra.mxu0 0.0
    %2302 = vmatprep.subr.mxu0 0.0
    %2303 = vmatpush1.msra.mxu0 0.0
    %2304 = vmatprep.subr.mxu0 0.0
    %2305 = vmatpush1.msra.mxu0 0.0
    %2306 = vmatprep.subr.mxu0 0.0
    %2307 = vmatpush1.msra.mxu0 0.0
    %2308 = vmatprep.subr.mxu0 0.0
    %2309 = vmatpush1.msra.mxu0 0.0
    %2310 = vmatprep.subr.mxu0 0.0
    %2311 = vmatpush1.msra.mxu0 0.0
    %2312 = vmatprep.subr.mxu0 0.0
    %2313 = vmatpush1.msra.mxu0 0.0
    %2314 = vmatprep.subr.mxu0 0.0
    %2315 = vmatpush1.msra.mxu0 0.0
    %2316 = vmatprep.subr.mxu0 0.0
    %2317 = vmatpush1.msra.mxu0 0.0
    %2318 = vmatprep.subr.mxu0 0.0
    %2319 = vmatpush1.msra.mxu0 0.0
    %2320 = vmatprep.subr.mxu0 0.0
    %2321 = vmatpush1.msra.mxu0 0.0
    %2322 = vmatprep.subr.mxu0 0.0
    %2323 = vmatpush1.msra.mxu0 0.0
    %2324 = vmatprep.subr.mxu0 0.0
    %2325 = vmatpush1.msra.mxu0 0.0
    %2326 = vmatprep.subr.mxu0 0.0
    %2327 = vmatpush1.msra.mxu0 0.0
    %2328 = vmatprep.subr.mxu0 0.0
    %2329 = vmatpush1.msra.mxu0 0.0
    %2330 = vmatprep.subr.mxu0 0.0
    %2331 = vmatpush1.msra.mxu0 0.0
    %2332 = vmatprep.subr.mxu0 0.0
    %2333 = vmatpush1.msra.mxu0 0.0
    %2334 = vmatprep.subr.mxu0 0.0
    %2335 = vmatpush1.msra.mxu0 0.0
    %2336 = vmatprep.subr.mxu0 0.0
    %2337 = vmatpush1.msra.mxu0 0.0
    %2338 = vmatprep.subr.mxu0 0.0
    %2339 = vmatpush1.msra.mxu0 0.0
    %2340 = vmatprep.mubr.f32.mxu0 0.0
    %2341 = vmatmul.mubr.f32.gmra.mrb[0].mxu0 %v1890
    %v2342 = vpop.f32.mrb[0].mxu0
    %v2343 = vadd.f32 0.0, %v2342
    %v2344 = vpop.f32.mrb[0].mxu0
    %2345 = vmatprep.mubr.f32.mxu0 0.0
    %2346 = vmatmul.mubr.f32.gmra.mrb[0].mxu0 %v1893
    %v2347 = vpop.f32.mrb[0].mxu0
    %v2348 = vadd.f32 0.0, %v2347
    %v2349 = vpop.f32.mrb[0].mxu0
    %2350 = vmatprep.mubr.f32.mxu0 0.0
    %2351 = vmatmul.mubr.f32.gmra.mrb[0].mxu0 %v1896
    %v2352 = vpop.f32.mrb[0].mxu0
    %v2353 = vadd.f32 0.0, %v2352
    %v2354 = vpop.f32.mrb[0].mxu0
    %2355 = vmatprep.mubr.f32.mxu0 0.0
    %2356 = vmatmul.mubr.f32.gmra.mrb[0].mxu0 %v1899
    %v2357 = vpop.f32.mrb[0].mxu0
    %v2358 = vadd.f32 0.0, %v2357
    %v2359 = vpop.f32.mrb[0].mxu0
    %2360 = vmatprep.mubr.f32.mxu0 0.0
    %2361 = vmatmul.mubr.f32.gmra.mrb[0].mxu0 %v1902
    %v2362 = vpop.f32.mrb[0].mxu0
    %v2363 = vadd.f32 0.0, %v2362
    %v2364 = vpop.f32.mrb[0].mxu0
    %2365 = vmatprep.mubr.f32.mxu0 0.0
    %2366 = vmatmul.mubr.f32.gmra.mrb[0].mxu0 %v1905
    %v2367 = vpop.f32.mrb[0].mxu0
    %v2368 = vadd.f32 0.0, %v2367
    %v2369 = vpop.f32.mrb[0].mxu0
    %2370 = vmatprep.mubr.f32.mxu0 0.0
    %2371 = vmatmul.mubr.f32.gmra.mrb[0].mxu0 %v1908
    %v2372 = vpop.f32.mrb[0].mxu0
    %v2373 = vadd.f32 0.0, %v2372
    %v2374 = vpop.f32.mrb[0].mxu0
    %2375 = vmatprep.mubr.f32.mxu0 0.0
    %2376 = vmatmul.mubr.f32.gmra.mrb[0].mxu0 %v1911
    %v2377 = vpop.f32.mrb[0].mxu0
    %v2378 = vadd.f32 0.0, %v2377
    %v2379 = vpop.f32.mrb[0].mxu0
    %2380 = vdwg.mxu0
    %2381 = vst [vmem:[#allocation3 + $0xc0] sm:$0xff] %v2343
    %2382 = vst [vmem:[#allocation3 + $0xc8] sm:$0xff] %v2348
    %2383 = vst [vmem:[#allocation3 + $0xd0] sm:$0xff] %v2353
    %2384 = vst [vmem:[#allocation3 + $0xd8] sm:$0xff] %v2358
    %2385 = vst [vmem:[#allocation3 + $0xe0] sm:$0xff] %v2363
    %2386 = vst [vmem:[#allocation3 + $0xe8] sm:$0xff] %v2368
    %2387 = vst [vmem:[#allocation3 + $0xf0] sm:$0xff] %v2373
    %2388 = vst [vmem:[#allocation3 + $0xf8] sm:$0xff] %v2378
    %v2389 = vld [vmem:[%s0] sm:$0xff]
    %v2390 = vld [vmem:[%s0 + $0x8] sm:$0xff]
    %v2391 = vld [vmem:[%s0 + $0x20] sm:$0xff]
    %v2392 = vld [vmem:[%s0 + $0x28] sm:$0xff]
    %v2393 = vld [vmem:[%s0 + $0x40] sm:$0xff]
    %v2394 = vld [vmem:[%s0 + $0x48] sm:$0xff]
    %v2395 = vld [vmem:[%s0 + $0x60] sm:$0xff]
    %v2396 = vld [vmem:[%s0 + $0x68] sm:$0xff]
    %v2397 = vld [vmem:[%s0 + $0x80] sm:$0xff]
    %v2398 = vld [vmem:[%s0 + $0x88] sm:$0xff]
    %v2399 = vld [vmem:[%s0 + $0xa0] sm:$0xff]
    %v2400 = vld [vmem:[%s0 + $0xa8] sm:$0xff]
    %v2401 = vld [vmem:[%s0 + $0xc0] sm:$0xff]
    %v2402 = vld [vmem:[%s0 + $0xc8] sm:$0xff]
    %v2403 = vld [vmem:[%s0 + $0xe0] sm:$0xff]
    %v2404 = vld [vmem:[%s0 + $0xe8] sm:$0xff]
    %v2405 = vld [vmem:[#allocation3] sm:$0xff]
    %v2406 = vld [vmem:[#allocation3 + $0x8] sm:$0xff]
    %v2407 = vld [vmem:[#allocation3 + $0x10] sm:$0xff]
    %v2408 = vld [vmem:[#allocation3 + $0x18] sm:$0xff]
    %v2409 = vld [vmem:[#allocation3 + $0x20] sm:$0xff]
    %v2410 = vld [vmem:[#allocation3 + $0x28] sm:$0xff]
    %v2411 = vld [vmem:[#allocation3 + $0x30] sm:$0xff]
    %v2412 = vld [vmem:[#allocation3 + $0x38] sm:$0xff]
    %v2413 = vld [vmem:[#allocation3 + $0x40] sm:$0xff]
    %v2414 = vld [vmem:[#allocation3 + $0x48] sm:$0xff]
    %v2415 = vld [vmem:[#allocation3 + $0x50] sm:$0xff]
    %v2416 = vld [vmem:[#allocation3 + $0x58] sm:$0xff]
    %v2417 = vld [vmem:[#allocation3 + $0x60] sm:$0xff]
    %v2418 = vld [vmem:[#allocation3 + $0x68] sm:$0xff]
    %v2419 = vld [vmem:[#allocation3 + $0x70] sm:$0xff]
    %v2420 = vld [vmem:[#allocation3 + $0x78] sm:$0xff]
    %v2421 = vld [vmem:[#allocation3 + $0x80] sm:$0xff]
    %v2422 = vld [vmem:[#allocation3 + $0x88] sm:$0xff]
    %v2423 = vld [vmem:[#allocation3 + $0x90] sm:$0xff]
    %v2424 = vld [vmem:[#allocation3 + $0x98] sm:$0xff]
    %v2425 = vld [vmem:[#allocation3 + $0xa0] sm:$0xff]
    %v2426 = vld [vmem:[#allocation3 + $0xa8] sm:$0xff]
    %v2427 = vld [vmem:[#allocation3 + $0xb0] sm:$0xff]
    %v2428 = vld [vmem:[#allocation3 + $0xb8] sm:$0xff]
    %v2429 = vld [vmem:[#allocation3 + $0xc0] sm:$0xff]
    %v2430 = vld [vmem:[#allocation3 + $0xc8] sm:$0xff]
    %v2431 = vld [vmem:[#allocation3 + $0xd0] sm:$0xff]
    %v2432 = vld [vmem:[#allocation3 + $0xd8] sm:$0xff]
    %v2433 = vld [vmem:[#allocation3 + $0xe0] sm:$0xff]
    %v2434 = vld [vmem:[#allocation3 + $0xe8] sm:$0xff]
    %v2435 = vld [vmem:[#allocation3 + $0xf0] sm:$0xff]
    %v2436 = vld [vmem:[#allocation3 + $0xf8] sm:$0xff]
    %v2437 = vld [vmem:[%s0 + $0x10] sm:$0xff]
    %v2438 = vld [vmem:[%s0 + $0x30] sm:$0xff]
    %v2439 = vld [vmem:[%s0 + $0x50] sm:$0xff]
    %v2440 = vld [vmem:[%s0 + $0x70] sm:$0xff]
    %v2441 = vld [vmem:[%s0 + $0x90] sm:$0xff]
    %v2442 = vld [vmem:[%s0 + $0xb0] sm:$0xff]
    %v2443 = vld [vmem:[%s0 + $0xd0] sm:$0xff]
    %v2444 = vld [vmem:[%s0 + $0xf0] sm:$0xff]
    %2445 = vmatprep.subr.mxu0 0.0
    %2446 = vmatpush1.msra.mxu0 %v2405
    %2447 = vmatprep.subr.mxu0 0.0
    %2448 = vmatpush1.msra.mxu0 %v2406
    %2449 = vmatprep.subr.mxu0 0.0
    %2450 = vmatpush1.msra.mxu0 %v2407
    %2451 = vmatprep.subr.mxu0 0.0
    %2452 = vmatpush1.msra.mxu0 %v2408
    %2453 = vmatprep.subr.mxu0 0.0
    %2454 = vmatpush1.msra.mxu0 %v2409
    %2455 = vmatprep.subr.mxu0 0.0
    %2456 = vmatpush1.msra.mxu0 %v2410
    %2457 = vmatprep.subr.mxu0 0.0
    %2458 = vmatpush1.msra.mxu0 %v2411
    %2459 = vmatprep.subr.mxu0 0.0
    %2460 = vmatpush1.msra.mxu0 %v2412
    %2461 = vmatprep.subr.mxu0 0.0
    %2462 = vmatpush1.msra.mxu0 %v2413
    %2463 = vmatprep.subr.mxu0 0.0
    %2464 = vmatpush1.msra.mxu0 %v2414
    %2465 = vmatprep.subr.mxu0 0.0
    %2466 = vmatpush1.msra.mxu0 %v2415
    %2467 = vmatprep.subr.mxu0 0.0
    %2468 = vmatpush1.msra.mxu0 %v2416
    %2469 = vmatprep.subr.mxu0 0.0
    %2470 = vmatpush1.msra.mxu0 %v2417
    %2471 = vmatprep.subr.mxu0 0.0
    %2472 = vmatpush1.msra.mxu0 %v2418
    %2473 = vmatprep.subr.mxu0 0.0
    %2474 = vmatpush1.msra.mxu0 %v2419
    %2475 = vmatprep.subr.mxu0 0.0
    %2476 = vmatpush1.msra.mxu0 %v2420
    %2477 = vmatprep.subr.mxu0 0.0
    %2478 = vmatpush1.msra.mxu0 %v2421
    %2479 = vmatprep.subr.mxu0 0.0
    %2480 = vmatpush1.msra.mxu0 %v2422
    %2481 = vmatprep.subr.mxu0 0.0
    %2482 = vmatpush1.msra.mxu0 %v2423
    %2483 = vmatprep.subr.mxu0 0.0
    %2484 = vmatpush1.msra.mxu0 %v2424
    %2485 = vmatprep.subr.mxu0 0.0
    %2486 = vmatpush1.msra.mxu0 %v2425
    %2487 = vmatprep.subr.mxu0 0.0
    %2488 = vmatpush1.msra.mxu0 %v2426
    %2489 = vmatprep.subr.mxu0 0.0
    %2490 = vmatpush1.msra.mxu0 %v2427
    %2491 = vmatprep.subr.mxu0 0.0
    %2492 = vmatpush1.msra.mxu0 %v2428
    %2493 = vmatprep.subr.mxu0 0.0
    %2494 = vmatpush1.msra.mxu0 %v2429
    %2495 = vmatprep.subr.mxu0 0.0
    %2496 = vmatpush1.msra.mxu0 %v2430
    %2497 = vmatprep.subr.mxu0 0.0
    %2498 = vmatpush1.msra.mxu0 %v2431
    %2499 = vmatprep.subr.mxu0 0.0
    %2500 = vmatpush1.msra.mxu0 %v2432
    %2501 = vmatprep.subr.mxu0 0.0
    %2502 = vmatpush1.msra.mxu0 %v2433
    %2503 = vmatprep.subr.mxu0 0.0
    %2504 = vmatpush1.msra.mxu0 %v2434
    %2505 = vmatprep.subr.mxu0 0.0
    %2506 = vmatpush1.msra.mxu0 %v2435
    %2507 = vmatprep.subr.mxu0 0.0
    %2508 = vmatpush1.msra.mxu0 %v2436
    %2509 = vmatprep.mubr.f32.mxu0 %v2390
    %2510 = vmatmul.mubr.f32.gmra.mrb[0].mxu0 %v2389
    %v2511 = vpop.f32.mrb[0].mxu0
    %v2512 = vadd.f32 %v2437, %v2511
    %v2513 = vpop.f32.mrb[0].mxu0
    %2514 = vmatprep.mubr.f32.mxu0 %v2392
    %2515 = vmatmul.mubr.f32.gmra.mrb[0].mxu0 %v2391
    %v2516 = vpop.f32.mrb[0].mxu0
    %v2517 = vadd.f32 %v2438, %v2516
    %v2518 = vpop.f32.mrb[0].mxu0
    %2519 = vmatprep.mubr.f32.mxu0 %v2394
    %2520 = vmatmul.mubr.f32.gmra.mrb[0].mxu0 %v2393
    %v2521 = vpop.f32.mrb[0].mxu0
    %v2522 = vadd.f32 %v2439, %v2521
    %v2523 = vpop.f32.mrb[0].mxu0
    %2524 = vmatprep.mubr.f32.mxu0 %v2396
    %2525 = vmatmul.mubr.f32.gmra.mrb[0].mxu0 %v2395
    %v2526 = vpop.f32.mrb[0].mxu0
    %v2527 = vadd.f32 %v2440, %v2526
    %v2528 = vpop.f32.mrb[0].mxu0
    %2529 = vmatprep.mubr.f32.mxu0 %v2398
    %2530 = vmatmul.mubr.f32.gmra.mrb[0].mxu0 %v2397
    %v2531 = vpop.f32.mrb[0].mxu0
    %v2532 = vadd.f32 %v2441, %v2531
    %v2533 = vpop.f32.mrb[0].mxu0
    %2534 = vmatprep.mubr.f32.mxu0 %v2400
    %2535 = vmatmul.mubr.f32.gmra.mrb[0].mxu0 %v2399
    %v2536 = vpop.f32.mrb[0].mxu0
    %v2537 = vadd.f32 %v2442, %v2536
    %v2538 = vpop.f32.mrb[0].mxu0
    %2539 = vmatprep.mubr.f32.mxu0 %v2402
    %2540 = vmatmul.mubr.f32.gmra.mrb[0].mxu0 %v2401
    %v2541 = vpop.f32.mrb[0].mxu0
    %v2542 = vadd.f32 %v2443, %v2541
    %v2543 = vpop.f32.mrb[0].mxu0
    %2544 = vmatprep.mubr.f32.mxu0 %v2404
    %2545 = vmatmul.mubr.f32.gmra.mrb[0].mxu0 %v2403
    %v2546 = vpop.f32.mrb[0].mxu0
    %v2547 = vadd.f32 %v2444, %v2546
    %v2548 = vpop.f32.mrb[0].mxu0
    %2549 = vdwg.mxu0
    %v2550 = vxor.u32 %v2512, 2147483648
    %v2551 = vxor.u32 %v2517, 2147483648
    %v2552 = vxor.u32 %v2522, 2147483648
    %v2553 = vxor.u32 %v2527, 2147483648
    %v2554 = vxor.u32 %v2532, 2147483648
    %v2555 = vxor.u32 %v2537, 2147483648
    %v2556 = vxor.u32 %v2542, 2147483648
    %v2557 = vxor.u32 %v2547, 2147483648
    %v2558 = vmul.f32 %v2550, 1.442695
    %v2559 = vpow.pop %v2558
    %v2560 = vmul.f32 %v2551, 1.442695
    %v2561 = vpow.pop %v2560
    %v2562 = vmul.f32 %v2552, 1.442695
    %v2563 = vpow.pop %v2562
    %v2564 = vmul.f32 %v2553, 1.442695
    %v2565 = vpow.pop %v2564
    %v2566 = vmul.f32 %v2554, 1.442695
    %v2567 = vpow.pop %v2566
    %v2568 = vmul.f32 %v2555, 1.442695
    %v2569 = vpow.pop %v2568
    %v2570 = vmul.f32 %v2556, 1.442695
    %v2571 = vpow.pop %v2570
    %v2572 = vmul.f32 %v2557, 1.442695
    %v2573 = vpow.pop %v2572
    %v2574 = vadd.f32 %v2559, 1.0
    %v2575 = vadd.f32 %v2561, 1.0
    %v2576 = vadd.f32 %v2563, 1.0
    %v2577 = vadd.f32 %v2565, 1.0
    %v2578 = vadd.f32 %v2567, 1.0
    %v2579 = vadd.f32 %v2569, 1.0
    %v2580 = vadd.f32 %v2571, 1.0
    %v2581 = vadd.f32 %v2573, 1.0
    %v2582 = vrcp.pop %v2574
    %v2583 = vmul.f32 1.0, %v2582
    %v2584 = vrcp.pop %v2575
    %v2585 = vmul.f32 1.0, %v2584
    %v2586 = vrcp.pop %v2576
    %v2587 = vmul.f32 1.0, %v2586
    %v2588 = vrcp.pop %v2577
    %v2589 = vmul.f32 1.0, %v2588
    %v2590 = vrcp.pop %v2578
    %v2591 = vmul.f32 1.0, %v2590
    %v2592 = vrcp.pop %v2579
    %v2593 = vmul.f32 1.0, %v2592
    %v2594 = vrcp.pop %v2580
    %v2595 = vmul.f32 1.0, %v2594
    %v2596 = vrcp.pop %v2581
    %v2597 = vmul.f32 1.0, %v2596
    %2606 = vrot.lane.b32.xlu0 %v2512, 32
    %v2607 = vpop.permute.xlu0 %2606
    %2608 = vrot.lane.b32.xlu0 %v2517, 32
    %v2609 = vpop.permute.xlu0 %2608
    %2610 = vrot.lane.b32.xlu0 %v2522, 32
    %v2611 = vpop.permute.xlu0 %2610
    %2612 = vrot.lane.b32.xlu0 %v2527, 32
    %v2613 = vpop.permute.xlu0 %2612
    %2614 = vrot.lane.b32.xlu0 %v2532, 32
    %v2615 = vpop.permute.xlu0 %2614
    %2616 = vrot.lane.b32.xlu0 %v2537, 32
    %v2617 = vpop.permute.xlu0 %2616
    %2618 = vrot.lane.b32.xlu0 %v2542, 32
    %v2619 = vpop.permute.xlu0 %2618
    %2620 = vrot.lane.b32.xlu0 %v2547, 32
    %v2621 = vpop.permute.xlu0 %2620
    %v2630 = vmul.f32 %v2583, %v2607
    %v2631 = vmul.f32 %v2585, %v2609
    %v2632 = vmul.f32 %v2587, %v2611
    %v2633 = vmul.f32 %v2589, %v2613
    %v2634 = vmul.f32 %v2591, %v2615
    %v2635 = vmul.f32 %v2593, %v2617
    %v2636 = vmul.f32 %v2595, %v2619
    %v2637 = vmul.f32 %v2597, %v2621
    %2646 = vrot.lane.b32.xlu0 %v2630, 64
    %v2647 = vpop.permute.xlu0 %2646
    %2648 = vrot.lane.b32.xlu0 %v2631, 64
    %v2649 = vpop.permute.xlu0 %2648
    %2650 = vrot.lane.b32.xlu0 %v2632, 64
    %v2651 = vpop.permute.xlu0 %2650
    %2652 = vrot.lane.b32.xlu0 %v2633, 64
    %v2653 = vpop.permute.xlu0 %2652
    %2654 = vrot.lane.b32.xlu0 %v2634, 64
    %v2655 = vpop.permute.xlu0 %2654
    %2656 = vrot.lane.b32.xlu0 %v2635, 64
    %v2657 = vpop.permute.xlu0 %2656
    %2658 = vrot.lane.b32.xlu0 %v2636, 64
    %v2659 = vpop.permute.xlu0 %2658
    %2660 = vrot.lane.b32.xlu0 %v2637, 64
    %v2661 = vpop.permute.xlu0 %2660
    %v2670 = vadd.f32 %v2512, %v2647
    %v2671 = vadd.f32 %v2517, %v2649
    %v2672 = vadd.f32 %v2522, %v2651
    %v2673 = vadd.f32 %v2527, %v2653
    %v2674 = vadd.f32 %v2532, %v2655
    %v2675 = vadd.f32 %v2537, %v2657
    %v2676 = vadd.f32 %v2542, %v2659
    %v2677 = vadd.f32 %v2547, %v2661
    %v2678 = vtanh.pop %v2670
    %v2679 = vtanh.pop %v2671
    %v2680 = vtanh.pop %v2672
    %v2681 = vtanh.pop %v2673
    %v2682 = vtanh.pop %v2674
    %v2683 = vtanh.pop %v2675
    %v2684 = vtanh.pop %v2676
    %v2685 = vtanh.pop %v2677
    %v2686 = vsub.f32 1.0, %v2583
    %v2687 = vsub.f32 1.0, %v2585
    %v2688 = vsub.f32 1.0, %v2587
    %v2689 = vsub.f32 1.0, %v2589
    %v2690 = vsub.f32 1.0, %v2591
    %v2691 = vsub.f32 1.0, %v2593
    %v2692 = vsub.f32 1.0, %v2595
    %v2693 = vsub.f32 1.0, %v2597
    %2702 = vrot.lane.b32.xlu0 %v2678, 96
    %v2703 = vpop.permute.xlu0 %2702
    %2704 = vrot.lane.b32.xlu0 %v2679, 96
    %v2705 = vpop.permute.xlu0 %2704
    %2706 = vrot.lane.b32.xlu0 %v2680, 96
    %v2707 = vpop.permute.xlu0 %2706
    %2708 = vrot.lane.b32.xlu0 %v2681, 96
    %v2709 = vpop.permute.xlu0 %2708
    %2710 = vrot.lane.b32.xlu0 %v2682, 96
    %v2711 = vpop.permute.xlu0 %2710
    %2712 = vrot.lane.b32.xlu0 %v2683, 96
    %v2713 = vpop.permute.xlu0 %2712
    %2714 = vrot.lane.b32.xlu0 %v2684, 96
    %v2715 = vpop.permute.xlu0 %2714
    %2716 = vrot.lane.b32.xlu0 %v2685, 96
    %v2717 = vpop.permute.xlu0 %2716
    %v2726 = vmul.f32 %v2686, %v2703
    %v2727 = vmul.f32 %v2687, %v2705
    %v2728 = vmul.f32 %v2688, %v2707
    %v2729 = vmul.f32 %v2689, %v2709
    %v2730 = vmul.f32 %v2690, %v2711
    %v2731 = vmul.f32 %v2691, %v2713
    %v2732 = vmul.f32 %v2692, %v2715
    %v2733 = vmul.f32 %v2693, %v2717
    %v2734 = vmul.f32 %v2583, %v1841
    %v2735 = vmul.f32 %v2585, %v1842
    %v2736 = vmul.f32 %v2587, %v1843
    %v2737 = vmul.f32 %v2589, %v1844
    %v2738 = vmul.f32 %v2591, %v1845
    %v2739 = vmul.f32 %v2593, %v1846
    %v2740 = vmul.f32 %v2595, %v1847
    %v2741 = vmul.f32 %v2597, %v1848
    %v2742 = vadd.f32 %v2726, %v2734
    %v2743 = vadd.f32 %v2727, %v2735
    %v2744 = vadd.f32 %v2728, %v2736
    %v2745 = vadd.f32 %v2729, %v2737
    %v2746 = vadd.f32 %v2730, %v2738
    %v2747 = vadd.f32 %v2731, %v2739
    %v2748 = vadd.f32 %v2732, %v2740
    %v2749 = vadd.f32 %v2733, %v2741
    %2754 = vrot.lane.b32.xlu0 %v2742, 96
    %v2755 = vpop.permute.xlu0 %2754
    %2756 = vrot.lane.b32.xlu0 %v2743, 96
    %v2757 = vpop.permute.xlu0 %2756
    %2758 = vrot.lane.b32.xlu0 %v2744, 96
    %v2759 = vpop.permute.xlu0 %2758
    %2760 = vrot.lane.b32.xlu0 %v2745, 96
    %v2761 = vpop.permute.xlu0 %2760
    %2766 = vst.msk [vmem:[#allocation2] sm:$0xff] %vm29, %v2755
    %2767 = vst.msk [vmem:[#allocation2 + $0x8] sm:$0xff] %vm29, %v2757
    %2768 = vst.msk [vmem:[#allocation2 + $0x10] sm:$0xff] %vm29, %v2759
    %2769 = vst.msk [vmem:[#allocation2 + $0x18] sm:$0xff] %vm29, %v2761
    %2770 = vst.msk [vmem:[#allocation2 + $0x20] sm:$0xff] %vm50, %v2746
    %2771 = vst.msk [vmem:[#allocation2 + $0x28] sm:$0xff] %vm50, %v2747
    %2772 = vst.msk [vmem:[#allocation2 + $0x30] sm:$0xff] %vm50, %v2748
    %2773 = vst.msk [vmem:[#allocation2 + $0x38] sm:$0xff] %vm50, %v2749
    %v2774 = vld [vmem:[#allocation2] sm:$0xff]
    %v2775 = vld [vmem:[#allocation2 + $0x8] sm:$0xff]
    %v2776 = vld [vmem:[#allocation2 + $0x10] sm:$0xff]
    %v2777 = vld [vmem:[#allocation2 + $0x18] sm:$0xff]
    %v2778 = vld [vmem:[#allocation2 + $0x20] sm:$0xff]
    %v2779 = vld [vmem:[#allocation2 + $0x28] sm:$0xff]
    %v2780 = vld [vmem:[#allocation2 + $0x30] sm:$0xff]
    %v2781 = vld [vmem:[#allocation2 + $0x38] sm:$0xff]
    %v2782 = vld [vmem:[%s1] sm:$0xff]
    %v2783 = vld [vmem:[%s1 + $0x8] sm:$0xff]
    %v2784 = vld [vmem:[%s1 + $0x10] sm:$0xff]
    %v2785 = vld [vmem:[%s1 + $0x18] sm:$0xff]
    %v2786 = vld [vmem:[%s1 + $0x20] sm:$0xff]
    %v2787 = vld [vmem:[%s1 + $0x28] sm:$0xff]
    %v2788 = vld [vmem:[%s1 + $0x30] sm:$0xff]
    %v2789 = vld [vmem:[%s1 + $0x38] sm:$0xff]
    %v2791 = vsel %vm20, %v2774, 0
    %v2794 = vsel %vm20, %v2775, 0
    %v2797 = vsel %vm20, %v2776, 0
    %v2800 = vsel %vm20, %v2777, 0
    %v2803 = vsel %vm20, %v2778, 0
    %v2806 = vsel %vm20, %v2779, 0
    %v2809 = vsel %vm20, %v2780, 0
    %v2812 = vsel %vm20, %v2781, 0
    %2814 = vmatprep.subr.mxu0 0.0
    %2815 = vmatpush1.msra.mxu0 %v2782
    %2816 = vmatprep.subr.mxu0 0.0
    %2817 = vmatpush1.msra.mxu0 %v2783
    %2818 = vmatprep.subr.mxu0 0.0
    %2819 = vmatpush1.msra.mxu0 %v2784
    %2820 = vmatprep.subr.mxu0 0.0
    %2821 = vmatpush1.msra.mxu0 %v2785
    %2822 = vmatprep.subr.mxu0 0.0
    %2823 = vmatpush1.msra.mxu0 %v2786
    %2824 = vmatprep.subr.mxu0 0.0
    %2825 = vmatpush1.msra.mxu0 %v2787
    %2826 = vmatprep.subr.mxu0 0.0
    %2827 = vmatpush1.msra.mxu0 %v2788
    %2828 = vmatprep.subr.mxu0 0.0
    %2829 = vmatpush1.msra.mxu0 %v2789
    %2830 = vmatprep.subr.mxu0 0.0
    %2831 = vmatpush1.msra.mxu0 0.0
    %2832 = vmatprep.subr.mxu0 0.0
    %2833 = vmatpush1.msra.mxu0 0.0
    %2834 = vmatprep.subr.mxu0 0.0
    %2835 = vmatpush1.msra.mxu0 0.0
    %2836 = vmatprep.subr.mxu0 0.0
    %2837 = vmatpush1.msra.mxu0 0.0
    %2838 = vmatprep.subr.mxu0 0.0
    %2839 = vmatpush1.msra.mxu0 0.0
    %2840 = vmatprep.subr.mxu0 0.0
    %2841 = vmatpush1.msra.mxu0 0.0
    %2842 = vmatprep.subr.mxu0 0.0
    %2843 = vmatpush1.msra.mxu0 0.0
    %2844 = vmatprep.subr.mxu0 0.0
    %2845 = vmatpush1.msra.mxu0 0.0
    %2846 = vmatprep.subr.mxu0 0.0
    %2847 = vmatpush1.msra.mxu0 0.0
    %2848 = vmatprep.subr.mxu0 0.0
    %2849 = vmatpush1.msra.mxu0 0.0
    %2850 = vmatprep.subr.mxu0 0.0
    %2851 = vmatpush1.msra.mxu0 0.0
    %2852 = vmatprep.subr.mxu0 0.0
    %2853 = vmatpush1.msra.mxu0 0.0
    %2854 = vmatprep.subr.mxu0 0.0
    %2855 = vmatpush1.msra.mxu0 0.0
    %2856 = vmatprep.subr.mxu0 0.0
    %2857 = vmatpush1.msra.mxu0 0.0
    %2858 = vmatprep.subr.mxu0 0.0
    %2859 = vmatpush1.msra.mxu0 0.0
    %2860 = vmatprep.subr.mxu0 0.0
    %2861 = vmatpush1.msra.mxu0 0.0
    %2862 = vmatprep.subr.mxu0 0.0
    %2863 = vmatpush1.msra.mxu0 0.0
    %2864 = vmatprep.subr.mxu0 0.0
    %2865 = vmatpush1.msra.mxu0 0.0
    %2866 = vmatprep.subr.mxu0 0.0
    %2867 = vmatpush1.msra.mxu0 0.0
    %2868 = vmatprep.subr.mxu0 0.0
    %2869 = vmatpush1.msra.mxu0 0.0
    %2870 = vmatprep.subr.mxu0 0.0
    %2871 = vmatpush1.msra.mxu0 0.0
    %2872 = vmatprep.subr.mxu0 0.0
    %2873 = vmatpush1.msra.mxu0 0.0
    %2874 = vmatprep.subr.mxu0 0.0
    %2875 = vmatpush1.msra.mxu0 0.0
    %2876 = vmatprep.subr.mxu0 0.0
    %2877 = vmatpush1.msra.mxu0 0.0
    %2878 = vmatprep.mubr.f32.mxu0 0.0
    %2879 = vmatmul.mubr.f32.gmra.mrb[0].mxu0 %v2791
    %v2880 = vpop.f32.mrb[0].mxu0
    %v2881 = vadd.f32 0.0, %v2880
    %v2882 = vpop.f32.mrb[0].mxu0
    %2883 = vmatprep.mubr.f32.mxu0 0.0
    %2884 = vmatmul.mubr.f32.gmra.mrb[0].mxu0 %v2794
    %v2885 = vpop.f32.mrb[0].mxu0
    %v2886 = vadd.f32 0.0, %v2885
    %v2887 = vpop.f32.mrb[0].mxu0
    %2888 = vmatprep.mubr.f32.mxu0 0.0
    %2889 = vmatmul.mubr.f32.gmra.mrb[0].mxu0 %v2797
    %v2890 = vpop.f32.mrb[0].mxu0
    %v2891 = vadd.f32 0.0, %v2890
    %v2892 = vpop.f32.mrb[0].mxu0
    %2893 = vmatprep.mubr.f32.mxu0 0.0
    %2894 = vmatmul.mubr.f32.gmra.mrb[0].mxu0 %v2800
    %v2895 = vpop.f32.mrb[0].mxu0
    %v2896 = vadd.f32 0.0, %v2895
    %v2897 = vpop.f32.mrb[0].mxu0
    %2898 = vmatprep.mubr.f32.mxu0 0.0
    %2899 = vmatmul.mubr.f32.gmra.mrb[0].mxu0 %v2803
    %v2900 = vpop.f32.mrb[0].mxu0
    %v2901 = vadd.f32 0.0, %v2900
    %v2902 = vpop.f32.mrb[0].mxu0
    %2903 = vmatprep.mubr.f32.mxu0 0.0
    %2904 = vmatmul.mubr.f32.gmra.mrb[0].mxu0 %v2806
    %v2905 = vpop.f32.mrb[0].mxu0
    %v2906 = vadd.f32 0.0, %v2905
    %v2907 = vpop.f32.mrb[0].mxu0
    %2908 = vmatprep.mubr.f32.mxu0 0.0
    %2909 = vmatmul.mubr.f32.gmra.mrb[0].mxu0 %v2809
    %v2910 = vpop.f32.mrb[0].mxu0
    %v2911 = vadd.f32 0.0, %v2910
    %v2912 = vpop.f32.mrb[0].mxu0
    %2913 = vmatprep.mubr.f32.mxu0 0.0
    %2914 = vmatmul.mubr.f32.gmra.mrb[0].mxu0 %v2812
    %v2915 = vpop.f32.mrb[0].mxu0
    %v2916 = vadd.f32 0.0, %v2915
    %v2917 = vpop.f32.mrb[0].mxu0
    %2918 = vdwg.mxu0
    %2919 = vst [vmem:[#allocation3] sm:$0xff] %v2881
    %2920 = vst [vmem:[#allocation3 + $0x8] sm:$0xff] %v2886
    %2921 = vst [vmem:[#allocation3 + $0x10] sm:$0xff] %v2891
    %2922 = vst [vmem:[#allocation3 + $0x18] sm:$0xff] %v2896
    %2923 = vst [vmem:[#allocation3 + $0x20] sm:$0xff] %v2901
    %2924 = vst [vmem:[#allocation3 + $0x28] sm:$0xff] %v2906
    %2925 = vst [vmem:[#allocation3 + $0x30] sm:$0xff] %v2911
    %2926 = vst [vmem:[#allocation3 + $0x38] sm:$0xff] %v2916
    %v2927 = vld [vmem:[%s1 + $0x40] sm:$0xff]
    %v2928 = vld [vmem:[%s1 + $0x48] sm:$0xff]
    %v2929 = vld [vmem:[%s1 + $0x50] sm:$0xff]
    %v2930 = vld [vmem:[%s1 + $0x58] sm:$0xff]
    %v2931 = vld [vmem:[%s1 + $0x60] sm:$0xff]
    %v2932 = vld [vmem:[%s1 + $0x68] sm:$0xff]
    %v2933 = vld [vmem:[%s1 + $0x70] sm:$0xff]
    %v2934 = vld [vmem:[%s1 + $0x78] sm:$0xff]
    %2935 = vmatprep.subr.mxu0 0.0
    %2936 = vmatpush1.msra.mxu0 %v2927
    %2937 = vmatprep.subr.mxu0 0.0
    %2938 = vmatpush1.msra.mxu0 %v2928
    %2939 = vmatprep.subr.mxu0 0.0
    %2940 = vmatpush1.msra.mxu0 %v2929
    %2941 = vmatprep.subr.mxu0 0.0
    %2942 = vmatpush1.msra.mxu0 %v2930
    %2943 = vmatprep.subr.mxu0 0.0
    %2944 = vmatpush1.msra.mxu0 %v2931
    %2945 = vmatprep.subr.mxu0 0.0
    %2946 = vmatpush1.msra.mxu0 %v2932
    %2947 = vmatprep.subr.mxu0 0.0
    %2948 = vmatpush1.msra.mxu0 %v2933
    %2949 = vmatprep.subr.mxu0 0.0
    %2950 = vmatpush1.msra.mxu0 %v2934
    %2951 = vmatprep.subr.mxu0 0.0
    %2952 = vmatpush1.msra.mxu0 0.0
    %2953 = vmatprep.subr.mxu0 0.0
    %2954 = vmatpush1.msra.mxu0 0.0
    %2955 = vmatprep.subr.mxu0 0.0
    %2956 = vmatpush1.msra.mxu0 0.0
    %2957 = vmatprep.subr.mxu0 0.0
    %2958 = vmatpush1.msra.mxu0 0.0
    %2959 = vmatprep.subr.mxu0 0.0
    %2960 = vmatpush1.msra.mxu0 0.0
    %2961 = vmatprep.subr.mxu0 0.0
    %2962 = vmatpush1.msra.mxu0 0.0
    %2963 = vmatprep.subr.mxu0 0.0
    %2964 = vmatpush1.msra.mxu0 0.0
    %2965 = vmatprep.subr.mxu0 0.0
    %2966 = vmatpush1.msra.mxu0 0.0
    %2967 = vmatprep.subr.mxu0 0.0
    %2968 = vmatpush1.msra.mxu0 0.0
    %2969 = vmatprep.subr.mxu0 0.0
    %2970 = vmatpush1.msra.mxu0 0.0
    %2971 = vmatprep.subr.mxu0 0.0
    %2972 = vmatpush1.msra.mxu0 0.0
    %2973 = vmatprep.subr.mxu0 0.0
    %2974 = vmatpush1.msra.mxu0 0.0
    %2975 = vmatprep.subr.mxu0 0.0
    %2976 = vmatpush1.msra.mxu0 0.0
    %2977 = vmatprep.subr.mxu0 0.0
    %2978 = vmatpush1.msra.mxu0 0.0
    %2979 = vmatprep.subr.mxu0 0.0
    %2980 = vmatpush1.msra.mxu0 0.0
    %2981 = vmatprep.subr.mxu0 0.0
    %2982 = vmatpush1.msra.mxu0 0.0
    %2983 = vmatprep.subr.mxu0 0.0
    %2984 = vmatpush1.msra.mxu0 0.0
    %2985 = vmatprep.subr.mxu0 0.0
    %2986 = vmatpush1.msra.mxu0 0.0
    %2987 = vmatprep.subr.mxu0 0.0
    %2988 = vmatpush1.msra.mxu0 0.0
    %2989 = vmatprep.subr.mxu0 0.0
    %2990 = vmatpush1.msra.mxu0 0.0
    %2991 = vmatprep.subr.mxu0 0.0
    %2992 = vmatpush1.msra.mxu0 0.0
    %2993 = vmatprep.subr.mxu0 0.0
    %2994 = vmatpush1.msra.mxu0 0.0
    %2995 = vmatprep.subr.mxu0 0.0
    %2996 = vmatpush1.msra.mxu0 0.0
    %2997 = vmatprep.subr.mxu0 0.0
    %2998 = vmatpush1.msra.mxu0 0.0
    %2999 = vmatprep.mubr.f32.mxu0 0.0
    %3000 = vmatmul.mubr.f32.gmra.mrb[0].mxu0 %v2791
    %v3001 = vpop.f32.mrb[0].mxu0
    %v3002 = vadd.f32 0.0, %v3001
    %v3003 = vpop.f32.mrb[0].mxu0
    %3004 = vmatprep.mubr.f32.mxu0 0.0
    %3005 = vmatmul.mubr.f32.gmra.mrb[0].mxu0 %v2794
    %v3006 = vpop.f32.mrb[0].mxu0
    %v3007 = vadd.f32 0.0, %v3006
    %v3008 = vpop.f32.mrb[0].mxu0
    %3009 = vmatprep.mubr.f32.mxu0 0.0
    %3010 = vmatmul.mubr.f32.gmra.mrb[0].mxu0 %v2797
    %v3011 = vpop.f32.mrb[0].mxu0
    %v3012 = vadd.f32 0.0, %v3011
    %v3013 = vpop.f32.mrb[0].mxu0
    %3014 = vmatprep.mubr.f32.mxu0 0.0
    %3015 = vmatmul.mubr.f32.gmra.mrb[0].mxu0 %v2800
    %v3016 = vpop.f32.mrb[0].mxu0
    %v3017 = vadd.f32 0.0, %v3016
    %v3018 = vpop.f32.mrb[0].mxu0
    %3019 = vmatprep.mubr.f32.mxu0 0.0
    %3020 = vmatmul.mubr.f32.gmra.mrb[0].mxu0 %v2803
    %v3021 = vpop.f32.mrb[0].mxu0
    %v3022 = vadd.f32 0.0, %v3021
    %v3023 = vpop.f32.mrb[0].mxu0
    %3024 = vmatprep.mubr.f32.mxu0 0.0
    %3025 = vmatmul.mubr.f32.gmra.mrb[0].mxu0 %v2806
    %v3026 = vpop.f32.mrb[0].mxu0
    %v3027 = vadd.f32 0.0, %v3026
    %v3028 = vpop.f32.mrb[0].mxu0
    %3029 = vmatprep.mubr.f32.mxu0 0.0
    %3030 = vmatmul.mubr.f32.gmra.mrb[0].mxu0 %v2809
    %v3031 = vpop.f32.mrb[0].mxu0
    %v3032 = vadd.f32 0.0, %v3031
    %v3033 = vpop.f32.mrb[0].mxu0
    %3034 = vmatprep.mubr.f32.mxu0 0.0
    %3035 = vmatmul.mubr.f32.gmra.mrb[0].mxu0 %v2812
    %v3036 = vpop.f32.mrb[0].mxu0
    %v3037 = vadd.f32 0.0, %v3036
    %v3038 = vpop.f32.mrb[0].mxu0
    %3039 = vdwg.mxu0
    %3040 = vst [vmem:[#allocation3 + $0x40] sm:$0xff] %v3002
    %3041 = vst [vmem:[#allocation3 + $0x48] sm:$0xff] %v3007
    %3042 = vst [vmem:[#allocation3 + $0x50] sm:$0xff] %v3012
    %3043 = vst [vmem:[#allocation3 + $0x58] sm:$0xff] %v3017
    %3044 = vst [vmem:[#allocation3 + $0x60] sm:$0xff] %v3022
    %3045 = vst [vmem:[#allocation3 + $0x68] sm:$0xff] %v3027
    %3046 = vst [vmem:[#allocation3 + $0x70] sm:$0xff] %v3032
    %3047 = vst [vmem:[#allocation3 + $0x78] sm:$0xff] %v3037
    %v3048 = vld [vmem:[%s1 + $0x80] sm:$0xff]
    %v3049 = vld [vmem:[%s1 + $0x88] sm:$0xff]
    %v3050 = vld [vmem:[%s1 + $0x90] sm:$0xff]
    %v3051 = vld [vmem:[%s1 + $0x98] sm:$0xff]
    %v3052 = vld [vmem:[%s1 + $0xa0] sm:$0xff]
    %v3053 = vld [vmem:[%s1 + $0xa8] sm:$0xff]
    %v3054 = vld [vmem:[%s1 + $0xb0] sm:$0xff]
    %v3055 = vld [vmem:[%s1 + $0xb8] sm:$0xff]
    %3056 = vmatprep.subr.mxu0 0.0
    %3057 = vmatpush1.msra.mxu0 %v3048
    %3058 = vmatprep.subr.mxu0 0.0
    %3059 = vmatpush1.msra.mxu0 %v3049
    %3060 = vmatprep.subr.mxu0 0.0
    %3061 = vmatpush1.msra.mxu0 %v3050
    %3062 = vmatprep.subr.mxu0 0.0
    %3063 = vmatpush1.msra.mxu0 %v3051
    %3064 = vmatprep.subr.mxu0 0.0
    %3065 = vmatpush1.msra.mxu0 %v3052
    %3066 = vmatprep.subr.mxu0 0.0
    %3067 = vmatpush1.msra.mxu0 %v3053
    %3068 = vmatprep.subr.mxu0 0.0
    %3069 = vmatpush1.msra.mxu0 %v3054
    %3070 = vmatprep.subr.mxu0 0.0
    %3071 = vmatpush1.msra.mxu0 %v3055
    %3072 = vmatprep.subr.mxu0 0.0
    %3073 = vmatpush1.msra.mxu0 0.0
    %3074 = vmatprep.subr.mxu0 0.0
    %3075 = vmatpush1.msra.mxu0 0.0
    %3076 = vmatprep.subr.mxu0 0.0
    %3077 = vmatpush1.msra.mxu0 0.0
    %3078 = vmatprep.subr.mxu0 0.0
    %3079 = vmatpush1.msra.mxu0 0.0
    %3080 = vmatprep.subr.mxu0 0.0
    %3081 = vmatpush1.msra.mxu0 0.0
    %3082 = vmatprep.subr.mxu0 0.0
    %3083 = vmatpush1.msra.mxu0 0.0
    %3084 = vmatprep.subr.mxu0 0.0
    %3085 = vmatpush1.msra.mxu0 0.0
    %3086 = vmatprep.subr.mxu0 0.0
    %3087 = vmatpush1.msra.mxu0 0.0
    %3088 = vmatprep.subr.mxu0 0.0
    %3089 = vmatpush1.msra.mxu0 0.0
    %3090 = vmatprep.subr.mxu0 0.0
    %3091 = vmatpush1.msra.mxu0 0.0
    %3092 = vmatprep.subr.mxu0 0.0
    %3093 = vmatpush1.msra.mxu0 0.0
    %3094 = vmatprep.subr.mxu0 0.0
    %3095 = vmatpush1.msra.mxu0 0.0
    %3096 = vmatprep.subr.mxu0 0.0
    %3097 = vmatpush1.msra.mxu0 0.0
    %3098 = vmatprep.subr.mxu0 0.0
    %3099 = vmatpush1.msra.mxu0 0.0
    %3100 = vmatprep.subr.mxu0 0.0
    %3101 = vmatpush1.msra.mxu0 0.0
    %3102 = vmatprep.subr.mxu0 0.0
    %3103 = vmatpush1.msra.mxu0 0.0
    %3104 = vmatprep.subr.mxu0 0.0
    %3105 = vmatpush1.msra.mxu0 0.0
    %3106 = vmatprep.subr.mxu0 0.0
    %3107 = vmatpush1.msra.mxu0 0.0
    %3108 = vmatprep.subr.mxu0 0.0
    %3109 = vmatpush1.msra.mxu0 0.0
    %3110 = vmatprep.subr.mxu0 0.0
    %3111 = vmatpush1.msra.mxu0 0.0
    %3112 = vmatprep.subr.mxu0 0.0
    %3113 = vmatpush1.msra.mxu0 0.0
    %3114 = vmatprep.subr.mxu0 0.0
    %3115 = vmatpush1.msra.mxu0 0.0
    %3116 = vmatprep.subr.mxu0 0.0
    %3117 = vmatpush1.msra.mxu0 0.0
    %3118 = vmatprep.subr.mxu0 0.0
    %3119 = vmatpush1.msra.mxu0 0.0
    %3120 = vmatprep.mubr.f32.mxu0 0.0
    %3121 = vmatmul.mubr.f32.gmra.mrb[0].mxu0 %v2791
    %v3122 = vpop.f32.mrb[0].mxu0
    %v3123 = vadd.f32 0.0, %v3122
    %v3124 = vpop.f32.mrb[0].mxu0
    %3125 = vmatprep.mubr.f32.mxu0 0.0
    %3126 = vmatmul.mubr.f32.gmra.mrb[0].mxu0 %v2794
    %v3127 = vpop.f32.mrb[0].mxu0
    %v3128 = vadd.f32 0.0, %v3127
    %v3129 = vpop.f32.mrb[0].mxu0
    %3130 = vmatprep.mubr.f32.mxu0 0.0
    %3131 = vmatmul.mubr.f32.gmra.mrb[0].mxu0 %v2797
    %v3132 = vpop.f32.mrb[0].mxu0
    %v3133 = vadd.f32 0.0, %v3132
    %v3134 = vpop.f32.mrb[0].mxu0
    %3135 = vmatprep.mubr.f32.mxu0 0.0
    %3136 = vmatmul.mubr.f32.gmra.mrb[0].mxu0 %v2800
    %v3137 = vpop.f32.mrb[0].mxu0
    %v3138 = vadd.f32 0.0, %v3137
    %v3139 = vpop.f32.mrb[0].mxu0
    %3140 = vmatprep.mubr.f32.mxu0 0.0
    %3141 = vmatmul.mubr.f32.gmra.mrb[0].mxu0 %v2803
    %v3142 = vpop.f32.mrb[0].mxu0
    %v3143 = vadd.f32 0.0, %v3142
    %v3144 = vpop.f32.mrb[0].mxu0
    %3145 = vmatprep.mubr.f32.mxu0 0.0
    %3146 = vmatmul.mubr.f32.gmra.mrb[0].mxu0 %v2806
    %v3147 = vpop.f32.mrb[0].mxu0
    %v3148 = vadd.f32 0.0, %v3147
    %v3149 = vpop.f32.mrb[0].mxu0
    %3150 = vmatprep.mubr.f32.mxu0 0.0
    %3151 = vmatmul.mubr.f32.gmra.mrb[0].mxu0 %v2809
    %v3152 = vpop.f32.mrb[0].mxu0
    %v3153 = vadd.f32 0.0, %v3152
    %v3154 = vpop.f32.mrb[0].mxu0
    %3155 = vmatprep.mubr.f32.mxu0 0.0
    %3156 = vmatmul.mubr.f32.gmra.mrb[0].mxu0 %v2812
    %v3157 = vpop.f32.mrb[0].mxu0
    %v3158 = vadd.f32 0.0, %v3157
    %v3159 = vpop.f32.mrb[0].mxu0
    %3160 = vdwg.mxu0
    %3161 = vst [vmem:[#allocation3 + $0x80] sm:$0xff] %v3123
    %3162 = vst [vmem:[#allocation3 + $0x88] sm:$0xff] %v3128
    %3163 = vst [vmem:[#allocation3 + $0x90] sm:$0xff] %v3133
    %3164 = vst [vmem:[#allocation3 + $0x98] sm:$0xff] %v3138
    %3165 = vst [vmem:[#allocation3 + $0xa0] sm:$0xff] %v3143
    %3166 = vst [vmem:[#allocation3 + $0xa8] sm:$0xff] %v3148
    %3167 = vst [vmem:[#allocation3 + $0xb0] sm:$0xff] %v3153
    %3168 = vst [vmem:[#allocation3 + $0xb8] sm:$0xff] %v3158
    %v3169 = vld [vmem:[%s1 + $0xc0] sm:$0xff]
    %v3170 = vld [vmem:[%s1 + $0xc8] sm:$0xff]
    %v3171 = vld [vmem:[%s1 + $0xd0] sm:$0xff]
    %v3172 = vld [vmem:[%s1 + $0xd8] sm:$0xff]
    %v3173 = vld [vmem:[%s1 + $0xe0] sm:$0xff]
    %v3174 = vld [vmem:[%s1 + $0xe8] sm:$0xff]
    %v3175 = vld [vmem:[%s1 + $0xf0] sm:$0xff]
    %v3176 = vld [vmem:[%s1 + $0xf8] sm:$0xff]
    %3177 = vmatprep.subr.mxu0 0.0
    %3178 = vmatpush1.msra.mxu0 %v3169
    %3179 = vmatprep.subr.mxu0 0.0
    %3180 = vmatpush1.msra.mxu0 %v3170
    %3181 = vmatprep.subr.mxu0 0.0
    %3182 = vmatpush1.msra.mxu0 %v3171
    %3183 = vmatprep.subr.mxu0 0.0
    %3184 = vmatpush1.msra.mxu0 %v3172
    %3185 = vmatprep.subr.mxu0 0.0
    %3186 = vmatpush1.msra.mxu0 %v3173
    %3187 = vmatprep.subr.mxu0 0.0
    %3188 = vmatpush1.msra.mxu0 %v3174
    %3189 = vmatprep.subr.mxu0 0.0
    %3190 = vmatpush1.msra.mxu0 %v3175
    %3191 = vmatprep.subr.mxu0 0.0
    %3192 = vmatpush1.msra.mxu0 %v3176
    %3193 = vmatprep.subr.mxu0 0.0
    %3194 = vmatpush1.msra.mxu0 0.0
    %3195 = vmatprep.subr.mxu0 0.0
    %3196 = vmatpush1.msra.mxu0 0.0
    %3197 = vmatprep.subr.mxu0 0.0
    %3198 = vmatpush1.msra.mxu0 0.0
    %3199 = vmatprep.subr.mxu0 0.0
    %3200 = vmatpush1.msra.mxu0 0.0
    %3201 = vmatprep.subr.mxu0 0.0
    %3202 = vmatpush1.msra.mxu0 0.0
    %3203 = vmatprep.subr.mxu0 0.0
    %3204 = vmatpush1.msra.mxu0 0.0
    %3205 = vmatprep.subr.mxu0 0.0
    %3206 = vmatpush1.msra.mxu0 0.0
    %3207 = vmatprep.subr.mxu0 0.0
    %3208 = vmatpush1.msra.mxu0 0.0
    %3209 = vmatprep.subr.mxu0 0.0
    %3210 = vmatpush1.msra.mxu0 0.0
    %3211 = vmatprep.subr.mxu0 0.0
    %3212 = vmatpush1.msra.mxu0 0.0
    %3213 = vmatprep.subr.mxu0 0.0
    %3214 = vmatpush1.msra.mxu0 0.0
    %3215 = vmatprep.subr.mxu0 0.0
    %3216 = vmatpush1.msra.mxu0 0.0
    %3217 = vmatprep.subr.mxu0 0.0
    %3218 = vmatpush1.msra.mxu0 0.0
    %3219 = vmatprep.subr.mxu0 0.0
    %3220 = vmatpush1.msra.mxu0 0.0
    %3221 = vmatprep.subr.mxu0 0.0
    %3222 = vmatpush1.msra.mxu0 0.0
    %3223 = vmatprep.subr.mxu0 0.0
    %3224 = vmatpush1.msra.mxu0 0.0
    %3225 = vmatprep.subr.mxu0 0.0
    %3226 = vmatpush1.msra.mxu0 0.0
    %3227 = vmatprep.subr.mxu0 0.0
    %3228 = vmatpush1.msra.mxu0 0.0
    %3229 = vmatprep.subr.mxu0 0.0
    %3230 = vmatpush1.msra.mxu0 0.0
    %3231 = vmatprep.subr.mxu0 0.0
    %3232 = vmatpush1.msra.mxu0 0.0
    %3233 = vmatprep.subr.mxu0 0.0
    %3234 = vmatpush1.msra.mxu0 0.0
    %3235 = vmatprep.subr.mxu0 0.0
    %3236 = vmatpush1.msra.mxu0 0.0
    %3237 = vmatprep.subr.mxu0 0.0
    %3238 = vmatpush1.msra.mxu0 0.0
    %3239 = vmatprep.subr.mxu0 0.0
    %3240 = vmatpush1.msra.mxu0 0.0
    %3241 = vmatprep.mubr.f32.mxu0 0.0
    %3242 = vmatmul.mubr.f32.gmra.mrb[0].mxu0 %v2791
    %v3243 = vpop.f32.mrb[0].mxu0
    %v3244 = vadd.f32 0.0, %v3243
    %v3245 = vpop.f32.mrb[0].mxu0
    %3246 = vmatprep.mubr.f32.mxu0 0.0
    %3247 = vmatmul.mubr.f32.gmra.mrb[0].mxu0 %v2794
    %v3248 = vpop.f32.mrb[0].mxu0
    %v3249 = vadd.f32 0.0, %v3248
    %v3250 = vpop.f32.mrb[0].mxu0
    %3251 = vmatprep.mubr.f32.mxu0 0.0
    %3252 = vmatmul.mubr.f32.gmra.mrb[0].mxu0 %v2797
    %v3253 = vpop.f32.mrb[0].mxu0
    %v3254 = vadd.f32 0.0, %v3253
    %v3255 = vpop.f32.mrb[0].mxu0
    %3256 = vmatprep.mubr.f32.mxu0 0.0
    %3257 = vmatmul.mubr.f32.gmra.mrb[0].mxu0 %v2800
    %v3258 = vpop.f32.mrb[0].mxu0
    %v3259 = vadd.f32 0.0, %v3258
    %v3260 = vpop.f32.mrb[0].mxu0
    %3261 = vmatprep.mubr.f32.mxu0 0.0
    %3262 = vmatmul.mubr.f32.gmra.mrb[0].mxu0 %v2803
    %v3263 = vpop.f32.mrb[0].mxu0
    %v3264 = vadd.f32 0.0, %v3263
    %v3265 = vpop.f32.mrb[0].mxu0
    %3266 = vmatprep.mubr.f32.mxu0 0.0
    %3267 = vmatmul.mubr.f32.gmra.mrb[0].mxu0 %v2806
    %v3268 = vpop.f32.mrb[0].mxu0
    %v3269 = vadd.f32 0.0, %v3268
    %v3270 = vpop.f32.mrb[0].mxu0
    %3271 = vmatprep.mubr.f32.mxu0 0.0
    %3272 = vmatmul.mubr.f32.gmra.mrb[0].mxu0 %v2809
    %v3273 = vpop.f32.mrb[0].mxu0
    %v3274 = vadd.f32 0.0, %v3273
    %v3275 = vpop.f32.mrb[0].mxu0
    %3276 = vmatprep.mubr.f32.mxu0 0.0
    %3277 = vmatmul.mubr.f32.gmra.mrb[0].mxu0 %v2812
    %v3278 = vpop.f32.mrb[0].mxu0
    %v3279 = vadd.f32 0.0, %v3278
    %v3280 = vpop.f32.mrb[0].mxu0
    %3281 = vdwg.mxu0
    %3282 = vst [vmem:[#allocation3 + $0xc0] sm:$0xff] %v3244
    %3283 = vst [vmem:[#allocation3 + $0xc8] sm:$0xff] %v3249
    %3284 = vst [vmem:[#allocation3 + $0xd0] sm:$0xff] %v3254
    %3285 = vst [vmem:[#allocation3 + $0xd8] sm:$0xff] %v3259
    %3286 = vst [vmem:[#allocation3 + $0xe0] sm:$0xff] %v3264
    %3287 = vst [vmem:[#allocation3 + $0xe8] sm:$0xff] %v3269
    %3288 = vst [vmem:[#allocation3 + $0xf0] sm:$0xff] %v3274
    %3289 = vst [vmem:[#allocation3 + $0xf8] sm:$0xff] %v3279
    %v3290 = vld [vmem:[%s0] sm:$0xff]
    %v3291 = vld [vmem:[%s0 + $0x8] sm:$0xff]
    %v3292 = vld [vmem:[%s0 + $0x20] sm:$0xff]
    %v3293 = vld [vmem:[%s0 + $0x28] sm:$0xff]
    %v3294 = vld [vmem:[%s0 + $0x40] sm:$0xff]
    %v3295 = vld [vmem:[%s0 + $0x48] sm:$0xff]
    %v3296 = vld [vmem:[%s0 + $0x60] sm:$0xff]
    %v3297 = vld [vmem:[%s0 + $0x68] sm:$0xff]
    %v3298 = vld [vmem:[%s0 + $0x80] sm:$0xff]
    %v3299 = vld [vmem:[%s0 + $0x88] sm:$0xff]
    %v3300 = vld [vmem:[%s0 + $0xa0] sm:$0xff]
    %v3301 = vld [vmem:[%s0 + $0xa8] sm:$0xff]
    %v3302 = vld [vmem:[%s0 + $0xc0] sm:$0xff]
    %v3303 = vld [vmem:[%s0 + $0xc8] sm:$0xff]
    %v3304 = vld [vmem:[%s0 + $0xe0] sm:$0xff]
    %v3305 = vld [vmem:[%s0 + $0xe8] sm:$0xff]
    %v3306 = vld [vmem:[#allocation3] sm:$0xff]
    %v3307 = vld [vmem:[#allocation3 + $0x8] sm:$0xff]
    %v3308 = vld [vmem:[#allocation3 + $0x10] sm:$0xff]
    %v3309 = vld [vmem:[#allocation3 + $0x18] sm:$0xff]
    %v3310 = vld [vmem:[#allocation3 + $0x20] sm:$0xff]
    %v3311 = vld [vmem:[#allocation3 + $0x28] sm:$0xff]
    %v3312 = vld [vmem:[#allocation3 + $0x30] sm:$0xff]
    %v3313 = vld [vmem:[#allocation3 + $0x38] sm:$0xff]
    %v3314 = vld [vmem:[#allocation3 + $0x40] sm:$0xff]
    %v3315 = vld [vmem:[#allocation3 + $0x48] sm:$0xff]
    %v3316 = vld [vmem:[#allocation3 + $0x50] sm:$0xff]
    %v3317 = vld [vmem:[#allocation3 + $0x58] sm:$0xff]
    %v3318 = vld [vmem:[#allocation3 + $0x60] sm:$0xff]
    %v3319 = vld [vmem:[#allocation3 + $0x68] sm:$0xff]
    %v3320 = vld [vmem:[#allocation3 + $0x70] sm:$0xff]
    %v3321 = vld [vmem:[#allocation3 + $0x78] sm:$0xff]
    %v3322 = vld [vmem:[#allocation3 + $0x80] sm:$0xff]
    %v3323 = vld [vmem:[#allocation3 + $0x88] sm:$0xff]
    %v3324 = vld [vmem:[#allocation3 + $0x90] sm:$0xff]
    %v3325 = vld [vmem:[#allocation3 + $0x98] sm:$0xff]
    %v3326 = vld [vmem:[#allocation3 + $0xa0] sm:$0xff]
    %v3327 = vld [vmem:[#allocation3 + $0xa8] sm:$0xff]
    %v3328 = vld [vmem:[#allocation3 + $0xb0] sm:$0xff]
    %v3329 = vld [vmem:[#allocation3 + $0xb8] sm:$0xff]
    %v3330 = vld [vmem:[#allocation3 + $0xc0] sm:$0xff]
    %v3331 = vld [vmem:[#allocation3 + $0xc8] sm:$0xff]
    %v3332 = vld [vmem:[#allocation3 + $0xd0] sm:$0xff]
    %v3333 = vld [vmem:[#allocation3 + $0xd8] sm:$0xff]
    %v3334 = vld [vmem:[#allocation3 + $0xe0] sm:$0xff]
    %v3335 = vld [vmem:[#allocation3 + $0xe8] sm:$0xff]
    %v3336 = vld [vmem:[#allocation3 + $0xf0] sm:$0xff]
    %v3337 = vld [vmem:[#allocation3 + $0xf8] sm:$0xff]
    %v3338 = vld [vmem:[%s0 + $0x10] sm:$0xff]
    %v3339 = vld [vmem:[%s0 + $0x30] sm:$0xff]
    %v3340 = vld [vmem:[%s0 + $0x50] sm:$0xff]
    %v3341 = vld [vmem:[%s0 + $0x70] sm:$0xff]
    %v3342 = vld [vmem:[%s0 + $0x90] sm:$0xff]
    %v3343 = vld [vmem:[%s0 + $0xb0] sm:$0xff]
    %v3344 = vld [vmem:[%s0 + $0xd0] sm:$0xff]
    %v3345 = vld [vmem:[%s0 + $0xf0] sm:$0xff]
    %3346 = vmatprep.subr.mxu0 0.0
    %3347 = vmatpush1.msra.mxu0 %v3306
    %3348 = vmatprep.subr.mxu0 0.0
    %3349 = vmatpush1.msra.mxu0 %v3307
    %3350 = vmatprep.subr.mxu0 0.0
    %3351 = vmatpush1.msra.mxu0 %v3308
    %3352 = vmatprep.subr.mxu0 0.0
    %3353 = vmatpush1.msra.mxu0 %v3309
    %3354 = vmatprep.subr.mxu0 0.0
    %3355 = vmatpush1.msra.mxu0 %v3310
    %3356 = vmatprep.subr.mxu0 0.0
    %3357 = vmatpush1.msra.mxu0 %v3311
    %3358 = vmatprep.subr.mxu0 0.0
    %3359 = vmatpush1.msra.mxu0 %v3312
    %3360 = vmatprep.subr.mxu0 0.0
    %3361 = vmatpush1.msra.mxu0 %v3313
    %3362 = vmatprep.subr.mxu0 0.0
    %3363 = vmatpush1.msra.mxu0 %v3314
    %3364 = vmatprep.subr.mxu0 0.0
    %3365 = vmatpush1.msra.mxu0 %v3315
    %3366 = vmatprep.subr.mxu0 0.0
    %3367 = vmatpush1.msra.mxu0 %v3316
    %3368 = vmatprep.subr.mxu0 0.0
    %3369 = vmatpush1.msra.mxu0 %v3317
    %3370 = vmatprep.subr.mxu0 0.0
    %3371 = vmatpush1.msra.mxu0 %v3318
    %3372 = vmatprep.subr.mxu0 0.0
    %3373 = vmatpush1.msra.mxu0 %v3319
    %3374 = vmatprep.subr.mxu0 0.0
    %3375 = vmatpush1.msra.mxu0 %v3320
    %3376 = vmatprep.subr.mxu0 0.0
    %3377 = vmatpush1.msra.mxu0 %v3321
    %3378 = vmatprep.subr.mxu0 0.0
    %3379 = vmatpush1.msra.mxu0 %v3322
    %3380 = vmatprep.subr.mxu0 0.0
    %3381 = vmatpush1.msra.mxu0 %v3323
    %3382 = vmatprep.subr.mxu0 0.0
    %3383 = vmatpush1.msra.mxu0 %v3324
    %3384 = vmatprep.subr.mxu0 0.0
    %3385 = vmatpush1.msra.mxu0 %v3325
    %3386 = vmatprep.subr.mxu0 0.0
    %3387 = vmatpush1.msra.mxu0 %v3326
    %3388 = vmatprep.subr.mxu0 0.0
    %3389 = vmatpush1.msra.mxu0 %v3327
    %3390 = vmatprep.subr.mxu0 0.0
    %3391 = vmatpush1.msra.mxu0 %v3328
    %3392 = vmatprep.subr.mxu0 0.0
    %3393 = vmatpush1.msra.mxu0 %v3329
    %3394 = vmatprep.subr.mxu0 0.0
    %3395 = vmatpush1.msra.mxu0 %v3330
    %3396 = vmatprep.subr.mxu0 0.0
    %3397 = vmatpush1.msra.mxu0 %v3331
    %3398 = vmatprep.subr.mxu0 0.0
    %3399 = vmatpush1.msra.mxu0 %v3332
    %3400 = vmatprep.subr.mxu0 0.0
    %3401 = vmatpush1.msra.mxu0 %v3333
    %3402 = vmatprep.subr.mxu0 0.0
    %3403 = vmatpush1.msra.mxu0 %v3334
    %3404 = vmatprep.subr.mxu0 0.0
    %3405 = vmatpush1.msra.mxu0 %v3335
    %3406 = vmatprep.subr.mxu0 0.0
    %3407 = vmatpush1.msra.mxu0 %v3336
    %3408 = vmatprep.subr.mxu0 0.0
    %3409 = vmatpush1.msra.mxu0 %v3337
    %3410 = vmatprep.mubr.f32.mxu0 %v3291
    %3411 = vmatmul.mubr.f32.gmra.mrb[0].mxu0 %v3290
    %v3412 = vpop.f32.mrb[0].mxu0
    %v3413 = vadd.f32 %v3338, %v3412
    %v3414 = vpop.f32.mrb[0].mxu0
    %3415 = vmatprep.mubr.f32.mxu0 %v3293
    %3416 = vmatmul.mubr.f32.gmra.mrb[0].mxu0 %v3292
    %v3417 = vpop.f32.mrb[0].mxu0
    %v3418 = vadd.f32 %v3339, %v3417
    %v3419 = vpop.f32.mrb[0].mxu0
    %3420 = vmatprep.mubr.f32.mxu0 %v3295
    %3421 = vmatmul.mubr.f32.gmra.mrb[0].mxu0 %v3294
    %v3422 = vpop.f32.mrb[0].mxu0
    %v3423 = vadd.f32 %v3340, %v3422
    %v3424 = vpop.f32.mrb[0].mxu0
    %3425 = vmatprep.mubr.f32.mxu0 %v3297
    %3426 = vmatmul.mubr.f32.gmra.mrb[0].mxu0 %v3296
    %v3427 = vpop.f32.mrb[0].mxu0
    %v3428 = vadd.f32 %v3341, %v3427
    %v3429 = vpop.f32.mrb[0].mxu0
    %3430 = vmatprep.mubr.f32.mxu0 %v3299
    %3431 = vmatmul.mubr.f32.gmra.mrb[0].mxu0 %v3298
    %v3432 = vpop.f32.mrb[0].mxu0
    %v3433 = vadd.f32 %v3342, %v3432
    %v3434 = vpop.f32.mrb[0].mxu0
    %3435 = vmatprep.mubr.f32.mxu0 %v3301
    %3436 = vmatmul.mubr.f32.gmra.mrb[0].mxu0 %v3300
    %v3437 = vpop.f32.mrb[0].mxu0
    %v3438 = vadd.f32 %v3343, %v3437
    %v3439 = vpop.f32.mrb[0].mxu0
    %3440 = vmatprep.mubr.f32.mxu0 %v3303
    %3441 = vmatmul.mubr.f32.gmra.mrb[0].mxu0 %v3302
    %v3442 = vpop.f32.mrb[0].mxu0
    %v3443 = vadd.f32 %v3344, %v3442
    %v3444 = vpop.f32.mrb[0].mxu0
    %3445 = vmatprep.mubr.f32.mxu0 %v3305
    %3446 = vmatmul.mubr.f32.gmra.mrb[0].mxu0 %v3304
    %v3447 = vpop.f32.mrb[0].mxu0
    %v3448 = vadd.f32 %v3345, %v3447
    %v3449 = vpop.f32.mrb[0].mxu0
    %3450 = vdwg.mxu0
    %v3451 = vxor.u32 %v3413, 2147483648
    %v3452 = vxor.u32 %v3418, 2147483648
    %v3453 = vxor.u32 %v3423, 2147483648
    %v3454 = vxor.u32 %v3428, 2147483648
    %v3455 = vxor.u32 %v3433, 2147483648
    %v3456 = vxor.u32 %v3438, 2147483648
    %v3457 = vxor.u32 %v3443, 2147483648
    %v3458 = vxor.u32 %v3448, 2147483648
    %v3459 = vmul.f32 %v3451, 1.442695
    %v3460 = vpow.pop %v3459
    %v3461 = vmul.f32 %v3452, 1.442695
    %v3462 = vpow.pop %v3461
    %v3463 = vmul.f32 %v3453, 1.442695
    %v3464 = vpow.pop %v3463
    %v3465 = vmul.f32 %v3454, 1.442695
    %v3466 = vpow.pop %v3465
    %v3467 = vmul.f32 %v3455, 1.442695
    %v3468 = vpow.pop %v3467
    %v3469 = vmul.f32 %v3456, 1.442695
    %v3470 = vpow.pop %v3469
    %v3471 = vmul.f32 %v3457, 1.442695
    %v3472 = vpow.pop %v3471
    %v3473 = vmul.f32 %v3458, 1.442695
    %v3474 = vpow.pop %v3473
    %v3475 = vadd.f32 %v3460, 1.0
    %v3476 = vadd.f32 %v3462, 1.0
    %v3477 = vadd.f32 %v3464, 1.0
    %v3478 = vadd.f32 %v3466, 1.0
    %v3479 = vadd.f32 %v3468, 1.0
    %v3480 = vadd.f32 %v3470, 1.0
    %v3481 = vadd.f32 %v3472, 1.0
    %v3482 = vadd.f32 %v3474, 1.0
    %v3483 = vrcp.pop %v3475
    %v3484 = vmul.f32 1.0, %v3483
    %v3485 = vrcp.pop %v3476
    %v3486 = vmul.f32 1.0, %v3485
    %v3487 = vrcp.pop %v3477
    %v3488 = vmul.f32 1.0, %v3487
    %v3489 = vrcp.pop %v3478
    %v3490 = vmul.f32 1.0, %v3489
    %v3491 = vrcp.pop %v3479
    %v3492 = vmul.f32 1.0, %v3491
    %v3493 = vrcp.pop %v3480
    %v3494 = vmul.f32 1.0, %v3493
    %v3495 = vrcp.pop %v3481
    %v3496 = vmul.f32 1.0, %v3495
    %v3497 = vrcp.pop %v3482
    %v3498 = vmul.f32 1.0, %v3497
    %3507 = vrot.lane.b32.xlu0 %v3413, 32
    %v3508 = vpop.permute.xlu0 %3507
    %3509 = vrot.lane.b32.xlu0 %v3418, 32
    %v3510 = vpop.permute.xlu0 %3509
    %3511 = vrot.lane.b32.xlu0 %v3423, 32
    %v3512 = vpop.permute.xlu0 %3511
    %3513 = vrot.lane.b32.xlu0 %v3428, 32
    %v3514 = vpop.permute.xlu0 %3513
    %3515 = vrot.lane.b32.xlu0 %v3433, 32
    %v3516 = vpop.permute.xlu0 %3515
    %3517 = vrot.lane.b32.xlu0 %v3438, 32
    %v3518 = vpop.permute.xlu0 %3517
    %3519 = vrot.lane.b32.xlu0 %v3443, 32
    %v3520 = vpop.permute.xlu0 %3519
    %3521 = vrot.lane.b32.xlu0 %v3448, 32
    %v3522 = vpop.permute.xlu0 %3521
    %v3531 = vmul.f32 %v3484, %v3508
    %v3532 = vmul.f32 %v3486, %v3510
    %v3533 = vmul.f32 %v3488, %v3512
    %v3534 = vmul.f32 %v3490, %v3514
    %v3535 = vmul.f32 %v3492, %v3516
    %v3536 = vmul.f32 %v3494, %v3518
    %v3537 = vmul.f32 %v3496, %v3520
    %v3538 = vmul.f32 %v3498, %v3522
    %3547 = vrot.lane.b32.xlu0 %v3531, 64
    %v3548 = vpop.permute.xlu0 %3547
    %3549 = vrot.lane.b32.xlu0 %v3532, 64
    %v3550 = vpop.permute.xlu0 %3549
    %3551 = vrot.lane.b32.xlu0 %v3533, 64
    %v3552 = vpop.permute.xlu0 %3551
    %3553 = vrot.lane.b32.xlu0 %v3534, 64
    %v3554 = vpop.permute.xlu0 %3553
    %3555 = vrot.lane.b32.xlu0 %v3535, 64
    %v3556 = vpop.permute.xlu0 %3555
    %3557 = vrot.lane.b32.xlu0 %v3536, 64
    %v3558 = vpop.permute.xlu0 %3557
    %3559 = vrot.lane.b32.xlu0 %v3537, 64
    %v3560 = vpop.permute.xlu0 %3559
    %3561 = vrot.lane.b32.xlu0 %v3538, 64
    %v3562 = vpop.permute.xlu0 %3561
    %v3571 = vadd.f32 %v3413, %v3548
    %v3572 = vadd.f32 %v3418, %v3550
    %v3573 = vadd.f32 %v3423, %v3552
    %v3574 = vadd.f32 %v3428, %v3554
    %v3575 = vadd.f32 %v3433, %v3556
    %v3576 = vadd.f32 %v3438, %v3558
    %v3577 = vadd.f32 %v3443, %v3560
    %v3578 = vadd.f32 %v3448, %v3562
    %v3579 = vtanh.pop %v3571
    %v3580 = vtanh.pop %v3572
    %v3581 = vtanh.pop %v3573
    %v3582 = vtanh.pop %v3574
    %v3583 = vtanh.pop %v3575
    %v3584 = vtanh.pop %v3576
    %v3585 = vtanh.pop %v3577
    %v3586 = vtanh.pop %v3578
    %v3587 = vsub.f32 1.0, %v3484
    %v3588 = vsub.f32 1.0, %v3486
    %v3589 = vsub.f32 1.0, %v3488
    %v3590 = vsub.f32 1.0, %v3490
    %v3591 = vsub.f32 1.0, %v3492
    %v3592 = vsub.f32 1.0, %v3494
    %v3593 = vsub.f32 1.0, %v3496
    %v3594 = vsub.f32 1.0, %v3498
    %3603 = vrot.lane.b32.xlu0 %v3579, 96
    %v3604 = vpop.permute.xlu0 %3603
    %3605 = vrot.lane.b32.xlu0 %v3580, 96
    %v3606 = vpop.permute.xlu0 %3605
    %3607 = vrot.lane.b32.xlu0 %v3581, 96
    %v3608 = vpop.permute.xlu0 %3607
    %3609 = vrot.lane.b32.xlu0 %v3582, 96
    %v3610 = vpop.permute.xlu0 %3609
    %3611 = vrot.lane.b32.xlu0 %v3583, 96
    %v3612 = vpop.permute.xlu0 %3611
    %3613 = vrot.lane.b32.xlu0 %v3584, 96
    %v3614 = vpop.permute.xlu0 %3613
    %3615 = vrot.lane.b32.xlu0 %v3585, 96
    %v3616 = vpop.permute.xlu0 %3615
    %3617 = vrot.lane.b32.xlu0 %v3586, 96
    %v3618 = vpop.permute.xlu0 %3617
    %v3627 = vmul.f32 %v3587, %v3604
    %v3628 = vmul.f32 %v3588, %v3606
    %v3629 = vmul.f32 %v3589, %v3608
    %v3630 = vmul.f32 %v3590, %v3610
    %v3631 = vmul.f32 %v3591, %v3612
    %v3632 = vmul.f32 %v3592, %v3614
    %v3633 = vmul.f32 %v3593, %v3616
    %v3634 = vmul.f32 %v3594, %v3618
    %v3635 = vmul.f32 %v3484, %v2742
    %v3636 = vmul.f32 %v3486, %v2743
    %v3637 = vmul.f32 %v3488, %v2744
    %v3638 = vmul.f32 %v3490, %v2745
    %v3639 = vmul.f32 %v3492, %v2746
    %v3640 = vmul.f32 %v3494, %v2747
    %v3641 = vmul.f32 %v3496, %v2748
    %v3642 = vmul.f32 %v3498, %v2749
    %v3643 = vadd.f32 %v3627, %v3635
    %v3644 = vadd.f32 %v3628, %v3636
    %v3645 = vadd.f32 %v3629, %v3637
    %v3646 = vadd.f32 %v3630, %v3638
    %v3647 = vadd.f32 %v3631, %v3639
    %v3648 = vadd.f32 %v3632, %v3640
    %v3649 = vadd.f32 %v3633, %v3641
    %v3650 = vadd.f32 %v3634, %v3642
    %v3651 = vld [vmem:[%s1 + $0x100] sm:$0xff]
    %3660 = vrot.lane.b32.xlu0 %v3643, 96
    %v3661 = vpop.permute.xlu0 %3660
    %3662 = vrot.lane.b32.xlu0 %v3644, 96
    %v3663 = vpop.permute.xlu0 %3662
    %3664 = vrot.lane.b32.xlu0 %v3645, 96
    %v3665 = vpop.permute.xlu0 %3664
    %3666 = vrot.lane.b32.xlu0 %v3646, 96
    %v3667 = vpop.permute.xlu0 %3666
    %3668 = vrot.lane.b32.xlu0 %v3647, 96
    %v3669 = vpop.permute.xlu0 %3668
    %3670 = vrot.lane.b32.xlu0 %v3648, 96
    %v3671 = vpop.permute.xlu0 %3670
    %3672 = vrot.lane.b32.xlu0 %v3649, 96
    %v3673 = vpop.permute.xlu0 %3672
    %3674 = vrot.lane.b32.xlu0 %v3650, 96
    %v3675 = vpop.permute.xlu0 %3674
    %v3685 = vsel %vm20, %v3651, 0
    %3687 = vmatprep.subr.mxu0 0.0
    %3688 = vmatpush1.msra.mxu0 %v3661
    %3689 = vmatprep.subr.mxu0 0.0
    %3690 = vmatpush1.msra.mxu0 %v3663
    %3691 = vmatprep.subr.mxu0 0.0
    %3692 = vmatpush1.msra.mxu0 %v3665
    %3693 = vmatprep.subr.mxu0 0.0
    %3694 = vmatpush1.msra.mxu0 %v3667
    %3695 = vmatprep.subr.mxu0 0.0
    %3696 = vmatpush1.msra.mxu0 %v3669
    %3697 = vmatprep.subr.mxu0 0.0
    %3698 = vmatpush1.msra.mxu0 %v3671
    %3699 = vmatprep.subr.mxu0 0.0
    %3700 = vmatpush1.msra.mxu0 %v3673
    %3701 = vmatprep.subr.mxu0 0.0
    %3702 = vmatpush1.msra.mxu0 %v3675
    %3703 = vmatprep.subr.mxu0 0.0
    %3704 = vmatpush1.msra.mxu0 0.0
    %3705 = vmatprep.subr.mxu0 0.0
    %3706 = vmatpush1.msra.mxu0 0.0
    %3707 = vmatprep.subr.mxu0 0.0
    %3708 = vmatpush1.msra.mxu0 0.0
    %3709 = vmatprep.subr.mxu0 0.0
    %3710 = vmatpush1.msra.mxu0 0.0
    %3711 = vmatprep.subr.mxu0 0.0
    %3712 = vmatpush1.msra.mxu0 0.0
    %3713 = vmatprep.subr.mxu0 0.0
    %3714 = vmatpush1.msra.mxu0 0.0
    %3715 = vmatprep.subr.mxu0 0.0
    %3716 = vmatpush1.msra.mxu0 0.0
    %3717 = vmatprep.subr.mxu0 0.0
    %3718 = vmatpush1.msra.mxu0 0.0
    %3719 = vmatprep.subr.mxu0 0.0
    %3720 = vmatpush1.msra.mxu0 0.0
    %3721 = vmatprep.subr.mxu0 0.0
    %3722 = vmatpush1.msra.mxu0 0.0
    %3723 = vmatprep.subr.mxu0 0.0
    %3724 = vmatpush1.msra.mxu0 0.0
    %3725 = vmatprep.subr.mxu0 0.0
    %3726 = vmatpush1.msra.mxu0 0.0
    %3727 = vmatprep.subr.mxu0 0.0
    %3728 = vmatpush1.msra.mxu0 0.0
    %3729 = vmatprep.subr.mxu0 0.0
    %3730 = vmatpush1.msra.mxu0 0.0
    %3731 = vmatprep.subr.mxu0 0.0
    %3732 = vmatpush1.msra.mxu0 0.0
    %3733 = vmatprep.subr.mxu0 0.0
    %3734 = vmatpush1.msra.mxu0 0.0
    %3735 = vmatprep.subr.mxu0 0.0
    %3736 = vmatpush1.msra.mxu0 0.0
    %3737 = vmatprep.subr.mxu0 0.0
    %3738 = vmatpush1.msra.mxu0 0.0
    %3739 = vmatprep.subr.mxu0 0.0
    %3740 = vmatpush1.msra.mxu0 0.0
    %3741 = vmatprep.subr.mxu0 0.0
    %3742 = vmatpush1.msra.mxu0 0.0
    %3743 = vmatprep.subr.mxu0 0.0
    %3744 = vmatpush1.msra.mxu0 0.0
    %3745 = vmatprep.subr.mxu0 0.0
    %3746 = vmatpush1.msra.mxu0 0.0
    %3747 = vmatprep.subr.mxu0 0.0
    %3748 = vmatpush1.msra.mxu0 0.0
    %3749 = vmatprep.subr.mxu0 0.0
    %3750 = vmatpush1.msra.mxu0 0.0
    %3751 = vmatprep.mubr.f32.mxu0 0.0
    %3752 = vmatmul.mubr.f32.gmra.mrb[0].mxu0 %v3685
    %v3753 = vpop.f32.mrb[0].mxu0
    %v3754 = vadd.f32 0.0, %v3753
    %v3755 = vpop.f32.mrb[0].mxu0
    %3756 = vdwg.mxu0
    %3757 = vmatprep.subr.mxu0 0.0
    %3758 = vmatpush1.msra.mxu0 %v12
    %3759 = vmatprep.subr.mxu0 0.0
    %3760 = vmatpush1.msra.mxu0 %v13
    %3761 = vmatprep.subr.mxu0 0.0
    %3762 = vmatpush1.msra.mxu0 %v14
    %3763 = vmatprep.subr.mxu0 0.0
    %3764 = vmatpush1.msra.mxu0 %v15
    %3765 = vmatprep.subr.mxu0 0.0
    %3766 = vmatpush1.msra.mxu0 %v16
    %3767 = vmatprep.subr.mxu0 0.0
    %3768 = vmatpush1.msra.mxu0 %v17
    %3769 = vmatprep.subr.mxu0 0.0
    %3770 = vmatpush1.msra.mxu0 %v18
    %3771 = vmatprep.subr.mxu0 0.0
    %3772 = vmatpush1.msra.mxu0 %v19
    %3773 = vmatprep.subr.mxu0 0.0
    %3774 = vmatpush1.msra.mxu0 0.0
    %3775 = vmatprep.subr.mxu0 0.0
    %3776 = vmatpush1.msra.mxu0 0.0
    %3777 = vmatprep.subr.mxu0 0.0
    %3778 = vmatpush1.msra.mxu0 0.0
    %3779 = vmatprep.subr.mxu0 0.0
    %3780 = vmatpush1.msra.mxu0 0.0
    %3781 = vmatprep.subr.mxu0 0.0
    %3782 = vmatpush1.msra.mxu0 0.0
    %3783 = vmatprep.subr.mxu0 0.0
    %3784 = vmatpush1.msra.mxu0 0.0
    %3785 = vmatprep.subr.mxu0 0.0
    %3786 = vmatpush1.msra.mxu0 0.0
    %3787 = vmatprep.subr.mxu0 0.0
    %3788 = vmatpush1.msra.mxu0 0.0
    %3789 = vmatprep.subr.mxu0 0.0
    %3790 = vmatpush1.msra.mxu0 0.0
    %3791 = vmatprep.subr.mxu0 0.0
    %3792 = vmatpush1.msra.mxu0 0.0
    %3793 = vmatprep.subr.mxu0 0.0
    %3794 = vmatpush1.msra.mxu0 0.0
    %3795 = vmatprep.subr.mxu0 0.0
    %3796 = vmatpush1.msra.mxu0 0.0
    %3797 = vmatprep.subr.mxu0 0.0
    %3798 = vmatpush1.msra.mxu0 0.0
    %3799 = vmatprep.subr.mxu0 0.0
    %3800 = vmatpush1.msra.mxu0 0.0
    %3801 = vmatprep.subr.mxu0 0.0
    %3802 = vmatpush1.msra.mxu0 0.0
    %3803 = vmatprep.subr.mxu0 0.0
    %3804 = vmatpush1.msra.mxu0 0.0
    %3805 = vmatprep.subr.mxu0 0.0
    %3806 = vmatpush1.msra.mxu0 0.0
    %3807 = vmatprep.subr.mxu0 0.0
    %3808 = vmatpush1.msra.mxu0 0.0
    %3809 = vmatprep.subr.mxu0 0.0
    %3810 = vmatpush1.msra.mxu0 0.0
    %3811 = vmatprep.subr.mxu0 0.0
    %3812 = vmatpush1.msra.mxu0 0.0
    %3813 = vmatprep.subr.mxu0 0.0
    %3814 = vmatpush1.msra.mxu0 0.0
    %3815 = vmatprep.subr.mxu0 0.0
    %3816 = vmatpush1.msra.mxu0 0.0
    %3817 = vmatprep.subr.mxu0 0.0
    %3818 = vmatpush1.msra.mxu0 0.0
    %3819 = vmatprep.subr.mxu0 0.0
    %3820 = vmatpush1.msra.mxu0 0.0
    %3821 = vmatprep.mubr.f32.mxu0 0.0
    %3822 = vmatmul.mubr.f32.gmra.mrb[0].mxu0 %v3685
    %v3823 = vpop.f32.mrb[0].mxu0
    %v3824 = vadd.f32 0.0, %v3823
    %v3825 = vpop.f32.mrb[0].mxu0
    %3826 = vdwg.mxu0
    %3828 = vrot.lane.b32.xlu0 %v3824, 32
    %v3829 = vpop.permute.xlu0 %3828
    %v3831 = vsel %vm29, %v3754, %v3829
    %3832 = vrot.lane.b32.xlu0 %v3651, 64
    %v3833 = vpop.permute.xlu0 %3832
    %v3835 = vmul.f32 %v3831, %v3833
    %v3836 = vrot.slane %v3651, 4
    %3837 = vrot.lane.b32.xlu0 %v3836, 64
    %v3838 = vpop.permute.xlu0 %3837
    %v3840 = vadd.f32 %v3835, %v3838
    %v3842 = vrot.slane %v3840, 2
    %v3844 = vsub.f32 %v3840, %v3842
    %v3845 = vmul.f32 %v3844, %v3844
    %v3846 = vlaneseq
    %v3847 = vshrl.u32 %v3846, 7
    %v3848 = vsub.s32 6, %v3847
    %v3849 = vrot.slane %v3651, %v3848
    %v3851 = vsel %vm20, %v3845, 0
    %v3853 = vsel %vm20, %v3836, 0
    %3855 = vmatprep.subr.mxu0 0.0
    %3856 = vmatpush1.xpose.msra.mxu0 %v3853
    %3857 = vmatprep.subr.mxu0 0.0
    %3858 = vmatpush1.xpose.msra.mxu0 0.0
    %3859 = vmatprep.subr.mxu0 0.0
    %3860 = vmatpush1.xpose.msra.mxu0 0.0
    %3861 = vmatprep.subr.mxu0 0.0
    %3862 = vmatpush1.xpose.msra.mxu0 0.0
    %3863 = vmatprep.subr.mxu0 0.0
    %3864 = vmatpush1.xpose.msra.mxu0 0.0
    %3865 = vmatprep.subr.mxu0 0.0
    %3866 = vmatpush1.xpose.msra.mxu0 0.0
    %3867 = vmatprep.subr.mxu0 0.0
    %3868 = vmatpush1.xpose.msra.mxu0 0.0
    %3869 = vmatprep.subr.mxu0 0.0
    %3870 = vmatpush1.xpose.msra.mxu0 0.0
    %3871 = vmatprep.subr.mxu0 0.0
    %3872 = vmatpush1.xpose.msra.mxu0 0.0
    %3873 = vmatprep.subr.mxu0 0.0
    %3874 = vmatpush1.xpose.msra.mxu0 0.0
    %3875 = vmatprep.subr.mxu0 0.0
    %3876 = vmatpush1.xpose.msra.mxu0 0.0
    %3877 = vmatprep.subr.mxu0 0.0
    %3878 = vmatpush1.xpose.msra.mxu0 0.0
    %3879 = vmatprep.subr.mxu0 0.0
    %3880 = vmatpush1.xpose.msra.mxu0 0.0
    %3881 = vmatprep.subr.mxu0 0.0
    %3882 = vmatpush1.xpose.msra.mxu0 0.0
    %3883 = vmatprep.subr.mxu0 0.0
    %3884 = vmatpush1.xpose.msra.mxu0 0.0
    %3885 = vmatprep.subr.mxu0 0.0
    %3886 = vmatpush1.xpose.msra.mxu0 0.0
    %3887 = vmatprep.subr.mxu0 0.0
    %3888 = vmatpush1.xpose.msra.mxu0 0.0
    %3889 = vmatprep.subr.mxu0 0.0
    %3890 = vmatpush1.xpose.msra.mxu0 0.0
    %3891 = vmatprep.subr.mxu0 0.0
    %3892 = vmatpush1.xpose.msra.mxu0 0.0
    %3893 = vmatprep.subr.mxu0 0.0
    %3894 = vmatpush1.xpose.msra.mxu0 0.0
    %3895 = vmatprep.subr.mxu0 0.0
    %3896 = vmatpush1.xpose.msra.mxu0 0.0
    %3897 = vmatprep.subr.mxu0 0.0
    %3898 = vmatpush1.xpose.msra.mxu0 0.0
    %3899 = vmatprep.subr.mxu0 0.0
    %3900 = vmatpush1.xpose.msra.mxu0 0.0
    %3901 = vmatprep.subr.mxu0 0.0
    %3902 = vmatpush1.xpose.msra.mxu0 0.0
    %3903 = vmatprep.subr.mxu0 0.0
    %3904 = vmatpush1.xpose.msra.mxu0 0.0
    %3905 = vmatprep.subr.mxu0 0.0
    %3906 = vmatpush1.xpose.msra.mxu0 0.0
    %3907 = vmatprep.subr.mxu0 0.0
    %3908 = vmatpush1.xpose.msra.mxu0 0.0
    %3909 = vmatprep.subr.mxu0 0.0
    %3910 = vmatpush1.xpose.msra.mxu0 0.0
    %3911 = vmatprep.subr.mxu0 0.0
    %3912 = vmatpush1.xpose.msra.mxu0 0.0
    %3913 = vmatprep.subr.mxu0 0.0
    %3914 = vmatpush1.xpose.msra.mxu0 0.0
    %3915 = vmatprep.subr.mxu0 0.0
    %3916 = vmatpush1.xpose.msra.mxu0 0.0
    %3917 = vmatprep.subr.mxu0 0.0
    %3918 = vmatpush1.xpose.msra.mxu0 0.0
    %3919 = vmatprep.mubr.f32.mxu0 0.0
    %3920 = vmatmul.mubr.f32.gmra.mrb[0].mxu0 %v3851
    %v3921 = vpop.f32.mrb[0].mxu0
    %v3922 = vadd.f32 %v3849, %v3921
    %v3923 = vpop.f32.mrb[0].mxu0
    %3924 = vdwg.mxu0
    %vm3925 = vcmp.ge.f32.partialorder %v3922, 0.0
    %v3926 = vmul.f32 %v3922, 0.01
    %v3927 = vsel %vm3925, %v3922, %v3926
    %vm3928 = vcmask 9216
    %v3929 = vsel %vm3928, %v3927, -inf
    %3930 = vmax.xlane.f32.xlu0 %v3929
    %v3931 = vpop.xlane.xlu0 %3930
    %v3932 = vsub.f32 %v3927, %v3931
    %v3933 = vmul.f32 %v3932, 1.442695
    %v3934 = vpow.pop %v3933
    %v3935 = vsel %vm3928, %v3934, 0.0
    %3936 = vadd.xlane.f32.xlu0 %v3935
    %v3937 = vpop.xlane.xlu0 %3936
    %v3938 = vrcp.pop %v3937
    %v3939 = vmul.f32 %v3934, %v3938
    %3940 = vst.msk [vmem:[#allocation4] sm:$0x3] %vm3928, %v3939
    // Predicated region
    $region10: #{pairwise_ggnn_forward.1} parent=1 // pred_check
      _
    $region11: #{pairwise_ggnn_forward.1} parent=1 // pred_check_branch
      %3942 = sbr.rel (0) target = $region13
    $region12: #{pairwise_ggnn_forward.1} parent=1 // pred_region
      %s3944 = ssub.s32 32, 32
      %3945 = vsyncadd [#allocation5], %s3944
      %s3947 = sshll.u32 [#allocation4], 4
      %s3948 = int_to_ptr.vmem [resolvable:$true] %s3947
      %3950 = dma.vmem_to_hbm [thread:$0]  %s3948, 32, %s2, [#allocation5]
    $region13: #{pairwise_ggnn_forward.1} parent=1 // pred_fallthru
      _
    // Predicated region
    $region14: #{pairwise_ggnn_forward.1} parent=1 // pred_check
      _
    $region15: #{pairwise_ggnn_forward.1} parent=1 // pred_check_branch
      %3952 = sbr.rel (0) target = $region17
    $region16: #{pairwise_ggnn_forward.1} parent=1 // pred_region
      %3953 = dma.done [#allocation5], 32
    $region17: #{pairwise_ggnn_forward.1} parent=1 // pred_fallthru
      _
    %3954 = vsyncpa [#allocation5], 1

</llo_original>
